<compile_context>
chip_gen: v7x
topology: tpu7x:2x2x1
jax: 0.10.0
libtpu: 0.0.40
codegen_flags: <defaults>
</compile_context>

<pallas_src>
import functools

import jax
import jax.numpy as jnp
from jax.experimental import pallas as pl
from jax.experimental.pallas import tpu as pltpu

EPS = 1e-5
# Explicit VMEM budget: stays well inside v7x's 64 MiB physical VMEM (v5e/v6e have 128 MiB).
_VMEM_LIMIT = 48 * 1024 * 1024


def _layernorm(x, g, b):
    mu = jnp.mean(x, axis=-1, keepdims=True)
    var = jnp.mean(jnp.square(x - mu), axis=-1, keepdims=True)
    return (x - mu) * jax.lax.rsqrt(var + EPS) * g + b


def _bf16(x):
    return x.astype(jnp.bfloat16)


# ----------------------------- FFN kernels ------------------------------------


def _ffn_core(x, g, b, w1, b1, w2, b2):
    """LayerNorm -> Linear -> SiLU -> Linear -> 0.5*y + residual (rows of (tm, D))."""
    xn = _layernorm(x, g, b)
    h = jnp.dot(_bf16(xn), w1, preferred_element_type=jnp.float32) + b1
    h = h * jax.nn.sigmoid(h)                      # SiLU
    y = jnp.dot(_bf16(h), w2, preferred_element_type=jnp.float32) + b2
    return 0.5 * y + x


def ffn_kernel(x_ref, g_ref, b_ref, w1_ref, b1_ref, w2_ref, b2_ref, o_ref):
    o_ref[...] = _ffn_core(x_ref[...], g_ref[...], b_ref[...],
                           w1_ref[...], b1_ref[...], w2_ref[...], b2_ref[...])


def ffn_final_ln_kernel(x_ref, g_ref, b_ref, w1_ref, b1_ref, w2_ref, b2_ref,
                        fg_ref, fb_ref, o_ref):
    y = _ffn_core(x_ref[...], g_ref[...], b_ref[...],
                  w1_ref[...], b1_ref[...], w2_ref[...], b2_ref[...])
    o_ref[...] = _layernorm(y, fg_ref[...], fb_ref[...])


# -------------------- fused attention + conv-module kernel --------------------


def attn_conv_kernel(num_heads, kernel_size, D,
                     x_ref, mask_ref,
                     ag_ref, ab_ref, wqkv_ref, bqkv_ref, wo_ref, bo_ref,
                     cg_ref, cb_ref, w1_ref, b1_ref, wdw_ref, bdw_ref,
                     bns_ref, bnsh_ref, w3_ref, b3_ref,
                     o_ref, dwpad_ref):
    """Per batch element (packed along lanes as (T, bb*D)):
         LN -> MHA -> +residual -> LN -> 1x1 conv -> GLU -> depthwise conv
         -> BatchNorm(eval, folded) -> SiLU -> 1x1 conv -> +residual."""
    T = x_ref.shape[0]
    bb = x_ref.shape[1] // D
    hd = D // num_heads
    pad = (kernel_size - 1) // 2
    C = wdw_ref.shape[1]
    scale = 1.0 / (hd ** 0.5)

    X = x_ref[...]                                  # (T, bb*D) f32
    mask = mask_ref[...]                            # (bb, T) additive key bias
    ag, ab = ag_ref[...], ab_ref[...]
    wqkv, bqkv = wqkv_ref[...], bqkv_ref[...]       # wqkv bf16, bqkv f32
    wo, bo = wo_ref[...], bo_ref[...]               # wo bf16
    cg, cb = cg_ref[...], cb_ref[...]
    w1, b1 = w1_ref[...], b1_ref[...]               # w1 bf16
    wdw, bdw = wdw_ref[...], bdw_ref[...]
    bns, bnsh = bns_ref[...], bnsh_ref[...]
    w3, b3 = w3_ref[...], b3_ref[...]               # w3 bf16

    # Zero the depthwise-conv padding scratch once; only rows [pad, pad+T) are
    # overwritten below, so the borders stay zero ("SAME" padding without concat).
    dwpad_ref[...] = jnp.zeros(dwpad_ref.shape, jnp.float32)

    outs = []
    for j in range(bb):
        x = X[:, j * D:(j + 1) * D]                 # (T, D)

        # ---------------- multi-head self-attention (pre-LN, residual) --------
        xn = _layernorm(x, ag, ab)
        qkv = jnp.dot(_bf16(xn), wqkv, preferred_element_type=jnp.float32) + bqkv
        q = qkv[:, :D] * scale                      # scale q once (not every (T,T) score)
        k = qkv[:, D:2 * D]
        v = qkv[:, 2 * D:]
        bias = mask[j:j + 1, :]                     # (1, T)

        y = jnp.zeros((T, D), jnp.float32)
        for h in range(num_heads):
            sl = slice(h * hd, (h + 1) * hd)
            # q_h @ k_h^T without an explicit transpose (contract last dims on MXU).
            s = jax.lax.dot_general(
                _bf16(q[:, sl]), _bf16(k[:, sl]),
                dimension_numbers=(((1,), (1,)), ((), ())),
                preferred_element_type=jnp.float32)          # (T, T)
            s = s + bias
            s = s - jnp.max(s, axis=-1, keepdims=True)
            p = jnp.exp(s)
            p = p * pl.reciprocal(jnp.sum(p, axis=-1, keepdims=True), approx=True)
            ctx = jnp.dot(_bf16(p), _bf16(v[:, sl]),
                          preferred_element_type=jnp.float32)  # (T, hd)
            # Fold the output projection per head: accumulate into full-width (T, D).
            y = y + jnp.dot(_bf16(ctx), wo[sl, :],
                            preferred_element_type=jnp.float32)
        xa = x + y + bo                              # attention residual

        # ---------------- convolution module (pre-LN, residual) ---------------
        xn = _layernorm(xa, cg, cb)
        hgl = jnp.dot(_bf16(xn), w1, preferred_element_type=jnp.float32) + b1  # (T, 2C)
        gl = hgl[:, :C] * jax.nn.sigmoid(hgl[:, C:])                           # GLU
        dwpad_ref[pad:pad + T, :] = gl
        acc = jnp.broadcast_to(bdw, (T, C))
        for kk in range(kernel_size):                # depthwise conv: K-tap MAC along T
            acc = acc + dwpad_ref[kk:kk + T, :] * wdw[kk:kk + 1, :]
        # TODO(synk): training-mode BatchNorm (batch statistics) not implemented;
        # eval-mode running stats are folded into scale/shift.
        acc = acc * bns + bnsh
        acc = acc * jax.nn.sigmoid(acc)              # SiLU
        yc = jnp.dot(_bf16(acc), w3, preferred_element_type=jnp.float32) + b3
        outs.append(xa + yc)

    o_ref[...] = outs[0] if bb == 1 else jnp.concatenate(outs, axis=-1)


# ----------------------------- wrappers ---------------------------------------


def _const_spec(shape):
    nd = len(shape)
    return pl.BlockSpec(shape, lambda *_: (0,) * nd)


def ffn_block(x2d, params, final_ln=None):
    """Row-tiled fused LN+FFN(+final LN) over a flat (N, D) slab."""
    N, D = x2d.shape
    g, b, w1, b1, w2, b2 = params
    w1 = _bf16(w1)
    w2 = _bf16(w2)
    tm = N if N <= 512 else 512                     # 8-divisible or full; big rows tile
    row_spec = pl.BlockSpec((tm, D), lambda i: (i, 0))
    extra = [] if final_ln is None else list(final_ln)
    args = [g, b, w1, b1, w2, b2] + extra
    kern = ffn_kernel if final_ln is None else ffn_final_ln_kernel
    return pl.pallas_call(
        kern,
        out_shape=jax.ShapeDtypeStruct((N, D), jnp.float32),
        grid=(pl.cdiv(N, tm),),
        in_specs=[row_spec] + [_const_spec(a.shape) for a in args],
        out_specs=row_spec,
        compiler_params=pltpu.CompilerParams(
            dimension_semantics=("parallel",),
            vmem_limit_bytes=_VMEM_LIMIT),
    )(x2d, *args)


def attn_conv_block(x_tbd, mask_bias, attn_params, conv_params, *, num_heads,
                    kernel_size):
    """Fused self-attention + conv module, operating natively on (T, B, D)."""
    T, B, D = x_tbd.shape
    ag, ab, wqkv, bqkv, wo, bo = attn_params
    cg, cb, w1, b1, wdw, bdw, bns, bnsh, w3, b3 = conv_params
    wqkv, wo, w1, w3 = _bf16(wqkv), _bf16(wo), _bf16(w1), _bf16(w3)
    C = wdw.shape[1]
    pad = (kernel_size - 1) // 2

    # Batch tile: amortize per-step overhead; 8 batches/step when that tiles cleanly
    # (and keeps the lane-packed block 128-aligned), otherwise the whole batch.
    if B <= 8 or B % 8 != 0 or (8 * D) % 128 != 0:
        bb = B
    else:
        bb = 8
    grid = (B // bb,)

    x2 = x_tbd.reshape(T, B * D)                    # free view of (T, B, D)
    params = [ag, ab, wqkv, bqkv, wo, bo,
              cg, cb, w1, b1, wdw, bdw, bns, bnsh, w3, b3]
    kern = functools.partial(attn_conv_kernel, num_heads, kernel_size, D)
    out = pl.pallas_call(
        kern,
        out_shape=jax.ShapeDtypeStruct((T, B * D), jnp.float32),
        grid=grid,
        in_specs=[pl.BlockSpec((T, bb * D), lambda i: (0, i)),
                  pl.BlockSpec((bb, T), lambda i: (i, 0))]
                 + [_const_spec(p.shape) for p in params],
        out_specs=pl.BlockSpec((T, bb * D), lambda i: (0, i)),
        scratch_shapes=[pltpu.VMEM((T + 2 * pad, C), jnp.float32)],
        compiler_params=pltpu.CompilerParams(
            dimension_semantics=("parallel",),
            vmem_limit_bytes=_VMEM_LIMIT),
    )(x2, mask_bias, *params)
    return out.reshape(T, B, D)                     # free view back to (T, B, D)


def conformer_layer(x_tbd, key_padding_mask, P, *, num_heads, kernel_size):
    T, B, D = x_tbd.shape
    if key_padding_mask is None:
        mask_bias = jnp.zeros((B, T), jnp.float32)
    else:
        mask_bias = jnp.where(key_padding_mask, -1e9, 0.0).astype(jnp.float32)
        mask_bias = mask_bias.reshape(B, T)

    # ffn1: x = 0.5*ffn(x) + x      ((T,B,D) flattens to (T*B, D) for free)
    x = ffn_block(x_tbd.reshape(T * B, D), P["ffn1"]).reshape(T, B, D)
    # fused self-attention + convolution module (no layout transposes)
    x = attn_conv_block(x, mask_bias, P["attn"], P["conv"],
                        num_heads=num_heads, kernel_size=kernel_size)
    # ffn2 + final layer norm fused into one kernel
    xf = ffn_block(x.reshape(T * B, D), P["ffn2"], final_ln=P["final"])
    return xf.reshape(T, B, D)


# ----------------------------- params & reference ------------------------------


def init_params(key, D, H, C, K):
    keys = iter(jax.random.split(key, 40))

    def nrm(shape, scale=0.05):
        return (scale * jax.random.normal(next(keys), shape)).astype(jnp.float32)

    def ln_p():
        return (1.0 + nrm((1, D), 0.02), nrm((1, D), 0.02))

    ffn1 = (*ln_p(), nrm((D, H)), nrm((1, H)), nrm((H, D)), nrm((1, D)))
    attn = (*ln_p(), nrm((D, 3 * D)), nrm((1, 3 * D)), nrm((D, D)), nrm((1, D)))

    bn_gamma = 1.0 + nrm((1, C), 0.02)
    bn_beta = nrm((1, C), 0.02)
    bn_scale = bn_gamma / jnp.sqrt(1.0 + EPS)   # running_mean=0, running_var=1 (fresh init)
    bn_shift = bn_beta

    conv = (*ln_p(), nrm((D, 2 * C)), nrm((1, 2 * C)), nrm((K, C)), nrm((1, C)),
            bn_scale, bn_shift, nrm((C, D)), nrm((1, D)))
    ffn2 = (*ln_p(), nrm((D, H)), nrm((1, H)), nrm((H, D)), nrm((1, D)))
    final = ln_p()
    return dict(ffn1=ffn1, attn=attn, conv=conv, ffn2=ffn2, final=final)


def reference(x_tbd, key_padding_mask, P, num_heads, ksize):
    """Pure-JAX f32 reference of the same forward pass (eval mode, idx=full-width)."""
    T, B, D = x_tbd.shape

    def ffn_ref(x, p):
        g, b, w1, b1, w2, b2 = p
        xn = _layernorm(x, g, b)
        h = xn @ w1 + b1
        h = h * jax.nn.sigmoid(h)
        return 0.5 * (h @ w2 + b2) + x

    x = ffn_ref(x_tbd.reshape(T * B, D), P["ffn1"]).reshape(T, B, D)

    g, b, wqkv, bqkv, wo, bo = P["attn"]
    xb = x.transpose(1, 0, 2)
    xn = _layernorm(xb, g, b)
    qkv = xn @ wqkv + bqkv
    q, k, v = qkv[..., :D], qkv[..., D:2 * D], qkv[..., 2 * D:]
    hd = D // num_heads

    def split(t):
        return t.reshape(B, T, num_heads, hd).transpose(0, 2, 1, 3)

    s = jnp.einsum("bhqd,bhkd->bhqk", split(q), split(k)) / jnp.sqrt(hd)
    if key_padding_mask is not None:
        bias = jnp.where(key_padding_mask, -1e9, 0.0).astype(jnp.float32)
        s = s + bias[:, None, None, :]
    p = jax.nn.softmax(s, axis=-1)
    ctx = jnp.einsum("bhqk,bhkd->bhqd", p, split(v)).transpose(0, 2, 1, 3).reshape(B, T, D)
    xb = xb + (ctx @ wo + bo)

    g, b, w1, b1, wdw, bdw, bns, bnsh, w3, b3 = P["conv"]
    xn = _layernorm(xb, g, b)
    h = xn @ w1 + b1
    C = h.shape[-1] // 2
    gl = h[..., :C] * jax.nn.sigmoid(h[..., C:])
    pad = (ksize - 1) // 2
    gp = jnp.pad(gl, ((0, 0), (pad, pad), (0, 0)))
    acc = jnp.broadcast_to(bdw, (B, T, C))
    for kk in range(ksize):
        acc = acc + gp[:, kk:kk + T, :] * wdw[kk][None, None, :]
    acc = acc * bns + bnsh
    acc = acc * jax.nn.sigmoid(acc)
    xb = xb + (acc @ w3 + b3)

    x = xb.transpose(1, 0, 2)
    xf = ffn_ref(x.reshape(T * B, D), P["ffn2"])
    xf = _layernorm(xf, *P["final"])
    return xf.reshape(T, B, D)


# ----------------------------- main -------------------------------------------

if __name__ == "__main__":
    T, B, D = 8, 2, 32       # seq, batch, input_dim
    H = 64                   # ffn_dim
    NUM_HEADS = 4
    KSIZE = 7                # depthwise_conv_kernel_size (odd)

    key = jax.random.PRNGKey(0)
    kx, kp = jax.random.split(key)
    x = jax.random.normal(kx, (T, B, D), jnp.float32)
    P = init_params(kp, D, H, D, KSIZE)   # num_channels = input_dim

    fwd = jax.jit(functools.partial(conformer_layer,
                                    num_heads=NUM_HEADS, kernel_size=KSIZE))

    # no-mask path
    out = jax.block_until_ready(fwd(x, None, P))
    ref = reference(x, None, P, NUM_HEADS, KSIZE)
    assert out.shape == (T, B, D)
    err = float(jnp.max(jnp.abs(out - ref)))
    # bf16 matmul operands (f32 accumulation) => slightly relaxed vs pure-f32 reference
    assert jnp.allclose(out, ref, atol=2e-2, rtol=2e-2), err

    # key_padding_mask path (last 3 frames of batch 1 are padding)
    kpm = jnp.zeros((B, T), bool).at[1, T - 3:].set(True)
    out_m = jax.block_until_ready(fwd(x, kpm, P))
    ref_m = reference(x, kpm, P, NUM_HEADS, KSIZE)
    err_m = float(jnp.max(jnp.abs(out_m - ref_m)))
    assert jnp.allclose(out_m, ref_m, atol=2e-2, rtol=2e-2), err_m

    print("KERNEL_OK")
</pallas_src>

<mosaic_0001>
module attributes {stable_mosaic.version = 11 : i64} {
  func.func @ffn_kernel(%arg0: i32, %arg1: memref<16x32xf32, #tpu.memory_space<vmem>>, %arg2: memref<1x32xf32, #tpu.memory_space<vmem>>, %arg3: memref<1x32xf32, #tpu.memory_space<vmem>>, %arg4: memref<32x64xbf16, #tpu.memory_space<vmem>>, %arg5: memref<1x64xf32, #tpu.memory_space<vmem>>, %arg6: memref<64x32xbf16, #tpu.memory_space<vmem>>, %arg7: memref<1x32xf32, #tpu.memory_space<vmem>>, %arg8: memref<16x32xf32, #tpu.memory_space<vmem>>) attributes {dimension_semantics = [#tpu.dimension_semantics<parallel>], iteration_bounds = array<i64: 1>, scalar_prefetch = 0 : i64, scratch_operands = 0 : i64, tpu.core_type = #tpu.core_type<tc>, window_params = [{transform_indices = @transform_0, window_bounds = array<i64: 16, 32>}, {pipeline_mode = #tpu.pipeline_mode<synchronous>, transform_indices = @transform_1, window_bounds = array<i64: 1, 32>}, {pipeline_mode = #tpu.pipeline_mode<synchronous>, transform_indices = @transform_2, window_bounds = array<i64: 1, 32>}, {pipeline_mode = #tpu.pipeline_mode<synchronous>, transform_indices = @transform_3, window_bounds = array<i64: 32, 64>}, {pipeline_mode = #tpu.pipeline_mode<synchronous>, transform_indices = @transform_4, window_bounds = array<i64: 1, 64>}, {pipeline_mode = #tpu.pipeline_mode<synchronous>, transform_indices = @transform_5, window_bounds = array<i64: 64, 32>}, {pipeline_mode = #tpu.pipeline_mode<synchronous>, transform_indices = @transform_6, window_bounds = array<i64: 1, 32>}, {transform_indices = @transform_7, window_bounds = array<i64: 16, 32>}]} {
    %c0 = arith.constant 0 : index
    %c0_0 = arith.constant 0 : index
    %0 = vector.load %arg1[%c0, %c0_0] : memref<16x32xf32, #tpu.memory_space<vmem>>, vector<16x32xf32>
    %c0_1 = arith.constant 0 : index
    %c0_2 = arith.constant 0 : index
    %1 = vector.load %arg2[%c0_1, %c0_2] : memref<1x32xf32, #tpu.memory_space<vmem>>, vector<1x32xf32>
    %c0_3 = arith.constant 0 : index
    %c0_4 = arith.constant 0 : index
    %2 = vector.load %arg3[%c0_3, %c0_4] : memref<1x32xf32, #tpu.memory_space<vmem>>, vector<1x32xf32>
    %c0_5 = arith.constant 0 : index
    %c0_6 = arith.constant 0 : index
    %3 = vector.load %arg4[%c0_5, %c0_6] : memref<32x64xbf16, #tpu.memory_space<vmem>>, vector<32x64xbf16>
    %c0_7 = arith.constant 0 : index
    %c0_8 = arith.constant 0 : index
    %4 = vector.load %arg5[%c0_7, %c0_8] : memref<1x64xf32, #tpu.memory_space<vmem>>, vector<1x64xf32>
    %c0_9 = arith.constant 0 : index
    %c0_10 = arith.constant 0 : index
    %5 = vector.load %arg6[%c0_9, %c0_10] : memref<64x32xbf16, #tpu.memory_space<vmem>>, vector<64x32xbf16>
    %c0_11 = arith.constant 0 : index
    %c0_12 = arith.constant 0 : index
    %6 = vector.load %arg7[%c0_11, %c0_12] : memref<1x32xf32, #tpu.memory_space<vmem>>, vector<1x32xf32>
    %cst = arith.constant dense<0.000000e+00> : vector<16xf32>
    %7 = vector.multi_reduction <add>, %0, %cst [1] : vector<16x32xf32> to vector<16xf32>
    %8 = vector.shape_cast %7 : vector<16xf32> to vector<16x1xf32>
    %cst_13 = arith.constant 3.200000e+01 : f32
    %9 = vector.broadcast %cst_13 : f32 to vector<16x1xf32>
    %10 = arith.divf %8, %9 : vector<16x1xf32>
    %11 = vector.broadcast %10 : vector<16x1xf32> to vector<16x32xf32>
    %12 = arith.subf %0, %11 : vector<16x32xf32>
    %13 = arith.mulf %12, %12 : vector<16x32xf32>
    %cst_14 = arith.constant dense<0.000000e+00> : vector<16xf32>
    %14 = vector.multi_reduction <add>, %13, %cst_14 [1] : vector<16x32xf32> to vector<16xf32>
    %15 = vector.shape_cast %14 : vector<16xf32> to vector<16x1xf32>
    %cst_15 = arith.constant 3.200000e+01 : f32
    %16 = vector.broadcast %cst_15 : f32 to vector<16x1xf32>
    %17 = arith.divf %15, %16 : vector<16x1xf32>
    %18 = vector.broadcast %10 : vector<16x1xf32> to vector<16x32xf32>
    %19 = arith.subf %0, %18 : vector<16x32xf32>
    %cst_16 = arith.constant 9.99999974E-6 : f32
    %20 = vector.broadcast %cst_16 : f32 to vector<16x1xf32>
    %21 = arith.addf %17, %20 : vector<16x1xf32>
    %22 = math.rsqrt %21 : vector<16x1xf32>
    %23 = vector.broadcast %22 : vector<16x1xf32> to vector<16x32xf32>
    %24 = arith.mulf %19, %23 : vector<16x32xf32>
    %25 = vector.broadcast %1 : vector<1x32xf32> to vector<16x32xf32>
    %26 = arith.mulf %24, %25 : vector<16x32xf32>
    %27 = vector.broadcast %2 : vector<1x32xf32> to vector<16x32xf32>
    %28 = arith.addf %26, %27 : vector<16x32xf32>
    %29 = arith.truncf %28 : vector<16x32xf32> to vector<16x32xbf16>
    %cst_17 = arith.constant dense<0.000000e+00> : vector<16x64xf32>
    %30 = tpu.matmul %29, %3, %cst_17 {dimension_numbers = #tpu.dot_dimension_numbers<[1], [0], [0], [1], [0, 0, 1, 1], [], []>} : vector<16x32xbf16>, vector<32x64xbf16>, vector<16x64xf32> -> vector<16x64xf32>
    %31 = vector.broadcast %4 : vector<1x64xf32> to vector<16x64xf32>
    %32 = arith.addf %30, %31 : vector<16x64xf32>
    %33 = arith.negf %32 : vector<16x64xf32>
    %34 = math.exp %33 : vector<16x64xf32>
    %cst_18 = arith.constant 1.000000e+00 : f32
    %35 = vector.broadcast %cst_18 : f32 to vector<16x64xf32>
    %36 = arith.addf %35, %34 : vector<16x64xf32>
    %37 = arith.divf %35, %36 : vector<16x64xf32>
    %38 = arith.mulf %32, %37 : vector<16x64xf32>
    %39 = arith.truncf %38 : vector<16x64xf32> to vector<16x64xbf16>
    %cst_19 = arith.constant dense<0.000000e+00> : vector<16x32xf32>
    %40 = tpu.matmul %39, %5, %cst_19 {dimension_numbers = #tpu.dot_dimension_numbers<[1], [0], [0], [1], [0, 0, 1, 1], [], []>} : vector<16x64xbf16>, vector<64x32xbf16>, vector<16x32xf32> -> vector<16x32xf32>
    %41 = vector.broadcast %6 : vector<1x32xf32> to vector<16x32xf32>
    %42 = arith.addf %40, %41 : vector<16x32xf32>
    %cst_20 = arith.constant 5.000000e-01 : f32
    %43 = vector.broadcast %cst_20 : f32 to vector<16x32xf32>
    %44 = arith.mulf %43, %42 : vector<16x32xf32>
    %45 = arith.addf %44, %0 : vector<16x32xf32>
    %c0_21 = arith.constant 0 : index
    %c0_22 = arith.constant 0 : index
    %46 = vector.load %arg8[%c0_21, %c0_22] : memref<16x32xf32, #tpu.memory_space<vmem>>, vector<16x32xf32>
    tpu.vector_store %arg8[%c0_21, %c0_22], %45 {strides = array<i32>} : memref<16x32xf32, #tpu.memory_space<vmem>>, vector<16x32xf32>,
    return
  }
  func.func @transform_0(%arg0: i32) -> (i32, i32) {
    %c0_i32 = arith.constant 0 : i32
    %c0_i32_0 = arith.constant 0 : i32
    return %arg0, %c0_i32 : i32, i32
  }
  func.func @transform_1(%arg0: i32) -> (i32, i32) {
    %c0_i32 = arith.constant 0 : i32
    %c0_i32_0 = arith.constant 0 : i32
    %c0_i32_1 = arith.constant 0 : i32
    return %c0_i32, %c0_i32_0 : i32, i32
  }
  func.func @transform_2(%arg0: i32) -> (i32, i32) {
    %c0_i32 = arith.constant 0 : i32
    %c0_i32_0 = arith.constant 0 : i32
    %c0_i32_1 = arith.constant 0 : i32
    return %c0_i32, %c0_i32_0 : i32, i32
  }
  func.func @transform_3(%arg0: i32) -> (i32, i32) {
    %c0_i32 = arith.constant 0 : i32
    %c0_i32_0 = arith.constant 0 : i32
    %c0_i32_1 = arith.constant 0 : i32
    return %c0_i32, %c0_i32_0 : i32, i32
  }
  func.func @transform_4(%arg0: i32) -> (i32, i32) {
    %c0_i32 = arith.constant 0 : i32
    %c0_i32_0 = arith.constant 0 : i32
    %c0_i32_1 = arith.constant 0 : i32
    return %c0_i32, %c0_i32_0 : i32, i32
  }
  func.func @transform_5(%arg0: i32) -> (i32, i32) {
    %c0_i32 = arith.constant 0 : i32
    %c0_i32_0 = arith.constant 0 : i32
    %c0_i32_1 = arith.constant 0 : i32
    return %c0_i32, %c0_i32_0 : i32, i32
  }
  func.func @transform_6(%arg0: i32) -> (i32, i32) {
    %c0_i32 = arith.constant 0 : i32
    %c0_i32_0 = arith.constant 0 : i32
    %c0_i32_1 = arith.constant 0 : i32
    return %c0_i32, %c0_i32_0 : i32, i32
  }
  func.func @transform_7(%arg0: i32) -> (i32, i32) {
    %c0_i32 = arith.constant 0 : i32
    %c0_i32_0 = arith.constant 0 : i32
    return %arg0, %c0_i32 : i32, i32
  }
}

module attributes {stable_mosaic.version = 11 : i64} {
  func.func @ffn_final_ln_kernel(%arg0: i32, %arg1: memref<16x32xf32, #tpu.memory_space<vmem>>, %arg2: memref<1x32xf32, #tpu.memory_space<vmem>>, %arg3: memref<1x32xf32, #tpu.memory_space<vmem>>, %arg4: memref<32x64xbf16, #tpu.memory_space<vmem>>, %arg5: memref<1x64xf32, #tpu.memory_space<vmem>>, %arg6: memref<64x32xbf16, #tpu.memory_space<vmem>>, %arg7: memref<1x32xf32, #tpu.memory_space<vmem>>, %arg8: memref<1x32xf32, #tpu.memory_space<vmem>>, %arg9: memref<1x32xf32, #tpu.memory_space<vmem>>, %arg10: memref<16x32xf32, #tpu.memory_space<vmem>>) attributes {dimension_semantics = [#tpu.dimension_semantics<parallel>], iteration_bounds = array<i64: 1>, scalar_prefetch = 0 : i64, scratch_operands = 0 : i64, tpu.core_type = #tpu.core_type<tc>, window_params = [{transform_indices = @transform_0, window_bounds = array<i64: 16, 32>}, {pipeline_mode = #tpu.pipeline_mode<synchronous>, transform_indices = @transform_1, window_bounds = array<i64: 1, 32>}, {pipeline_mode = #tpu.pipeline_mode<synchronous>, transform_indices = @transform_2, window_bounds = array<i64: 1, 32>}, {pipeline_mode = #tpu.pipeline_mode<synchronous>, transform_indices = @transform_3, window_bounds = array<i64: 32, 64>}, {pipeline_mode = #tpu.pipeline_mode<synchronous>, transform_indices = @transform_4, window_bounds = array<i64: 1, 64>}, {pipeline_mode = #tpu.pipeline_mode<synchronous>, transform_indices = @transform_5, window_bounds = array<i64: 64, 32>}, {pipeline_mode = #tpu.pipeline_mode<synchronous>, transform_indices = @transform_6, window_bounds = array<i64: 1, 32>}, {pipeline_mode = #tpu.pipeline_mode<synchronous>, transform_indices = @transform_7, window_bounds = array<i64: 1, 32>}, {pipeline_mode = #tpu.pipeline_mode<synchronous>, transform_indices = @transform_8, window_bounds = array<i64: 1, 32>}, {transform_indices = @transform_9, window_bounds = array<i64: 16, 32>}]} {
    %c0 = arith.constant 0 : index
    %c0_0 = arith.constant 0 : index
    %0 = vector.load %arg1[%c0, %c0_0] : memref<16x32xf32, #tpu.memory_space<vmem>>, vector<16x32xf32>
    %c0_1 = arith.constant 0 : index
    %c0_2 = arith.constant 0 : index
    %1 = vector.load %arg2[%c0_1, %c0_2] : memref<1x32xf32, #tpu.memory_space<vmem>>, vector<1x32xf32>
    %c0_3 = arith.constant 0 : index
    %c0_4 = arith.constant 0 : index
    %2 = vector.load %arg3[%c0_3, %c0_4] : memref<1x32xf32, #tpu.memory_space<vmem>>, vector<1x32xf32>
    %c0_5 = arith.constant 0 : index
    %c0_6 = arith.constant 0 : index
    %3 = vector.load %arg4[%c0_5, %c0_6] : memref<32x64xbf16, #tpu.memory_space<vmem>>, vector<32x64xbf16>
    %c0_7 = arith.constant 0 : index
    %c0_8 = arith.constant 0 : index
    %4 = vector.load %arg5[%c0_7, %c0_8] : memref<1x64xf32, #tpu.memory_space<vmem>>, vector<1x64xf32>
    %c0_9 = arith.constant 0 : index
    %c0_10 = arith.constant 0 : index
    %5 = vector.load %arg6[%c0_9, %c0_10] : memref<64x32xbf16, #tpu.memory_space<vmem>>, vector<64x32xbf16>
    %c0_11 = arith.constant 0 : index
    %c0_12 = arith.constant 0 : index
    %6 = vector.load %arg7[%c0_11, %c0_12] : memref<1x32xf32, #tpu.memory_space<vmem>>, vector<1x32xf32>
    %cst = arith.constant dense<0.000000e+00> : vector<16xf32>
    %7 = vector.multi_reduction <add>, %0, %cst [1] : vector<16x32xf32> to vector<16xf32>
    %8 = vector.shape_cast %7 : vector<16xf32> to vector<16x1xf32>
    %cst_13 = arith.constant 3.200000e+01 : f32
    %9 = vector.broadcast %cst_13 : f32 to vector<16x1xf32>
    %10 = arith.divf %8, %9 : vector<16x1xf32>
    %11 = vector.broadcast %10 : vector<16x1xf32> to vector<16x32xf32>
    %12 = arith.subf %0, %11 : vector<16x32xf32>
    %13 = arith.mulf %12, %12 : vector<16x32xf32>
    %cst_14 = arith.constant dense<0.000000e+00> : vector<16xf32>
    %14 = vector.multi_reduction <add>, %13, %cst_14 [1] : vector<16x32xf32> to vector<16xf32>
    %15 = vector.shape_cast %14 : vector<16xf32> to vector<16x1xf32>
    %cst_15 = arith.constant 3.200000e+01 : f32
    %16 = vector.broadcast %cst_15 : f32 to vector<16x1xf32>
    %17 = arith.divf %15, %16 : vector<16x1xf32>
    %18 = vector.broadcast %10 : vector<16x1xf32> to vector<16x32xf32>
    %19 = arith.subf %0, %18 : vector<16x32xf32>
    %cst_16 = arith.constant 9.99999974E-6 : f32
    %20 = vector.broadcast %cst_16 : f32 to vector<16x1xf32>
    %21 = arith.addf %17, %20 : vector<16x1xf32>
    %22 = math.rsqrt %21 : vector<16x1xf32>
    %23 = vector.broadcast %22 : vector<16x1xf32> to vector<16x32xf32>
    %24 = arith.mulf %19, %23 : vector<16x32xf32>
    %25 = vector.broadcast %1 : vector<1x32xf32> to vector<16x32xf32>
    %26 = arith.mulf %24, %25 : vector<16x32xf32>
    %27 = vector.broadcast %2 : vector<1x32xf32> to vector<16x32xf32>
    %28 = arith.addf %26, %27 : vector<16x32xf32>
    %29 = arith.truncf %28 : vector<16x32xf32> to vector<16x32xbf16>
    %cst_17 = arith.constant dense<0.000000e+00> : vector<16x64xf32>
    %30 = tpu.matmul %29, %3, %cst_17 {dimension_numbers = #tpu.dot_dimension_numbers<[1], [0], [0], [1], [0, 0, 1, 1], [], []>} : vector<16x32xbf16>, vector<32x64xbf16>, vector<16x64xf32> -> vector<16x64xf32>
    %31 = vector.broadcast %4 : vector<1x64xf32> to vector<16x64xf32>
    %32 = arith.addf %30, %31 : vector<16x64xf32>
    %33 = arith.negf %32 : vector<16x64xf32>
    %34 = math.exp %33 : vector<16x64xf32>
    %cst_18 = arith.constant 1.000000e+00 : f32
    %35 = vector.broadcast %cst_18 : f32 to vector<16x64xf32>
    %36 = arith.addf %35, %34 : vector<16x64xf32>
    %37 = arith.divf %35, %36 : vector<16x64xf32>
    %38 = arith.mulf %32, %37 : vector<16x64xf32>
    %39 = arith.truncf %38 : vector<16x64xf32> to vector<16x64xbf16>
    %cst_19 = arith.constant dense<0.000000e+00> : vector<16x32xf32>
    %40 = tpu.matmul %39, %5, %cst_19 {dimension_numbers = #tpu.dot_dimension_numbers<[1], [0], [0], [1], [0, 0, 1, 1], [], []>} : vector<16x64xbf16>, vector<64x32xbf16>, vector<16x32xf32> -> vector<16x32xf32>
    %41 = vector.broadcast %6 : vector<1x32xf32> to vector<16x32xf32>
    %42 = arith.addf %40, %41 : vector<16x32xf32>
    %cst_20 = arith.constant 5.000000e-01 : f32
    %43 = vector.broadcast %cst_20 : f32 to vector<16x32xf32>
    %44 = arith.mulf %43, %42 : vector<16x32xf32>
    %45 = arith.addf %44, %0 : vector<16x32xf32>
    %c0_21 = arith.constant 0 : index
    %c0_22 = arith.constant 0 : index
    %46 = vector.load %arg8[%c0_21, %c0_22] : memref<1x32xf32, #tpu.memory_space<vmem>>, vector<1x32xf32>
    %c0_23 = arith.constant 0 : index
    %c0_24 = arith.constant 0 : index
    %47 = vector.load %arg9[%c0_23, %c0_24] : memref<1x32xf32, #tpu.memory_space<vmem>>, vector<1x32xf32>
    %cst_25 = arith.constant dense<0.000000e+00> : vector<16xf32>
    %48 = vector.multi_reduction <add>, %45, %cst_25 [1] : vector<16x32xf32> to vector<16xf32>
    %49 = vector.shape_cast %48 : vector<16xf32> to vector<16x1xf32>
    %cst_26 = arith.constant 3.200000e+01 : f32
    %50 = vector.broadcast %cst_26 : f32 to vector<16x1xf32>
    %51 = arith.divf %49, %50 : vector<16x1xf32>
    %52 = vector.broadcast %51 : vector<16x1xf32> to vector<16x32xf32>
    %53 = arith.subf %45, %52 : vector<16x32xf32>
    %54 = arith.mulf %53, %53 : vector<16x32xf32>
    %cst_27 = arith.constant dense<0.000000e+00> : vector<16xf32>
    %55 = vector.multi_reduction <add>, %54, %cst_27 [1] : vector<16x32xf32> to vector<16xf32>
    %56 = vector.shape_cast %55 : vector<16xf32> to vector<16x1xf32>
    %cst_28 = arith.constant 3.200000e+01 : f32
    %57 = vector.broadcast %cst_28 : f32 to vector<16x1xf32>
    %58 = arith.divf %56, %57 : vector<16x1xf32>
    %59 = vector.broadcast %51 : vector<16x1xf32> to vector<16x32xf32>
    %60 = arith.subf %45, %59 : vector<16x32xf32>
    %cst_29 = arith.constant 9.99999974E-6 : f32
    %61 = vector.broadcast %cst_29 : f32 to vector<16x1xf32>
    %62 = arith.addf %58, %61 : vector<16x1xf32>
    %63 = math.rsqrt %62 : vector<16x1xf32>
    %64 = vector.broadcast %63 : vector<16x1xf32> to vector<16x32xf32>
    %65 = arith.mulf %60, %64 : vector<16x32xf32>
    %66 = vector.broadcast %46 : vector<1x32xf32> to vector<16x32xf32>
    %67 = arith.mulf %65, %66 : vector<16x32xf32>
    %68 = vector.broadcast %47 : vector<1x32xf32> to vector<16x32xf32>
    %69 = arith.addf %67, %68 : vector<16x32xf32>
    %c0_30 = arith.constant 0 : index
    %c0_31 = arith.constant 0 : index
    %70 = vector.load %arg10[%c0_30, %c0_31] : memref<16x32xf32, #tpu.memory_space<vmem>>, vector<16x32xf32>
    tpu.vector_store %arg10[%c0_30, %c0_31], %69 {strides = array<i32>} : memref<16x32xf32, #tpu.memory_space<vmem>>, vector<16x32xf32>,
    return
  }
  func.func @transform_0(%arg0: i32) -> (i32, i32) {
    %c0_i32 = arith.constant 0 : i32
    %c0_i32_0 = arith.constant 0 : i32
    return %arg0, %c0_i32 : i32, i32
  }
  func.func @transform_1(%arg0: i32) -> (i32, i32) {
    %c0_i32 = arith.constant 0 : i32
    %c0_i32_0 = arith.constant 0 : i32
    %c0_i32_1 = arith.constant 0 : i32
    return %c0_i32, %c0_i32_0 : i32, i32
  }
  func.func @transform_2(%arg0: i32) -> (i32, i32) {
    %c0_i32 = arith.constant 0 : i32
    %c0_i32_0 = arith.constant 0 : i32
    %c0_i32_1 = arith.constant 0 : i32
    return %c0_i32, %c0_i32_0 : i32, i32
  }
  func.func @transform_3(%arg0: i32) -> (i32, i32) {
    %c0_i32 = arith.constant 0 : i32
    %c0_i32_0 = arith.constant 0 : i32
    %c0_i32_1 = arith.constant 0 : i32
    return %c0_i32, %c0_i32_0 : i32, i32
  }
  func.func @transform_4(%arg0: i32) -> (i32, i32) {
    %c0_i32 = arith.constant 0 : i32
    %c0_i32_0 = arith.constant 0 : i32
    %c0_i32_1 = arith.constant 0 : i32
    return %c0_i32, %c0_i32_0 : i32, i32
  }
  func.func @transform_5(%arg0: i32) -> (i32, i32) {
    %c0_i32 = arith.constant 0 : i32
    %c0_i32_0 = arith.constant 0 : i32
    %c0_i32_1 = arith.constant 0 : i32
    return %c0_i32, %c0_i32_0 : i32, i32
  }
  func.func @transform_6(%arg0: i32) -> (i32, i32) {
    %c0_i32 = arith.constant 0 : i32
    %c0_i32_0 = arith.constant 0 : i32
    %c0_i32_1 = arith.constant 0 : i32
    return %c0_i32, %c0_i32_0 : i32, i32
  }
  func.func @transform_7(%arg0: i32) -> (i32, i32) {
    %c0_i32 = arith.constant 0 : i32
    %c0_i32_0 = arith.constant 0 : i32
    %c0_i32_1 = arith.constant 0 : i32
    return %c0_i32, %c0_i32_0 : i32, i32
  }
  func.func @transform_8(%arg0: i32) -> (i32, i32) {
    %c0_i32 = arith.constant 0 : i32
    %c0_i32_0 = arith.constant 0 : i32
    %c0_i32_1 = arith.constant 0 : i32
    return %c0_i32, %c0_i32_0 : i32, i32
  }
  func.func @transform_9(%arg0: i32) -> (i32, i32) {
    %c0_i32 = arith.constant 0 : i32
    %c0_i32_0 = arith.constant 0 : i32
    return %arg0, %c0_i32 : i32, i32
  }
}

module attributes {stable_mosaic.version = 11 : i64} {
  func.func @attn_conv_kernel(%arg0: i32, %arg1: memref<8x64xf32, #tpu.memory_space<vmem>>, %arg2: memref<2x8xf32, #tpu.memory_space<vmem>>, %arg3: memref<1x32xf32, #tpu.memory_space<vmem>>, %arg4: memref<1x32xf32, #tpu.memory_space<vmem>>, %arg5: memref<32x96xbf16, #tpu.memory_space<vmem>>, %arg6: memref<1x96xf32, #tpu.memory_space<vmem>>, %arg7: memref<32x32xbf16, #tpu.memory_space<vmem>>, %arg8: memref<1x32xf32, #tpu.memory_space<vmem>>, %arg9: memref<1x32xf32, #tpu.memory_space<vmem>>, %arg10: memref<1x32xf32, #tpu.memory_space<vmem>>, %arg11: memref<32x64xbf16, #tpu.memory_space<vmem>>, %arg12: memref<1x64xf32, #tpu.memory_space<vmem>>, %arg13: memref<7x32xf32, #tpu.memory_space<vmem>>, %arg14: memref<1x32xf32, #tpu.memory_space<vmem>>, %arg15: memref<1x32xf32, #tpu.memory_space<vmem>>, %arg16: memref<1x32xf32, #tpu.memory_space<vmem>>, %arg17: memref<32x32xbf16, #tpu.memory_space<vmem>>, %arg18: memref<1x32xf32, #tpu.memory_space<vmem>>, %arg19: memref<8x64xf32, #tpu.memory_space<vmem>>, %arg20: memref<14x32xf32, #tpu.memory_space<vmem>>) attributes {dimension_semantics = [#tpu.dimension_semantics<parallel>], iteration_bounds = array<i64: 1>, scalar_prefetch = 0 : i64, scratch_operands = 1 : i64, tpu.core_type = #tpu.core_type<tc>, window_params = [{transform_indices = @transform_0, window_bounds = array<i64: 8, 64>}, {transform_indices = @transform_1, window_bounds = array<i64: 2, 8>}, {pipeline_mode = #tpu.pipeline_mode<synchronous>, transform_indices = @transform_2, window_bounds = array<i64: 1, 32>}, {pipeline_mode = #tpu.pipeline_mode<synchronous>, transform_indices = @transform_3, window_bounds = array<i64: 1, 32>}, {pipeline_mode = #tpu.pipeline_mode<synchronous>, transform_indices = @transform_4, window_bounds = array<i64: 32, 96>}, {pipeline_mode = #tpu.pipeline_mode<synchronous>, transform_indices = @transform_5, window_bounds = array<i64: 1, 96>}, {pipeline_mode = #tpu.pipeline_mode<synchronous>, transform_indices = @transform_6, window_bounds = array<i64: 32, 32>}, {pipeline_mode = #tpu.pipeline_mode<synchronous>, transform_indices = @transform_7, window_bounds = array<i64: 1, 32>}, {pipeline_mode = #tpu.pipeline_mode<synchronous>, transform_indices = @transform_8, window_bounds = array<i64: 1, 32>}, {pipeline_mode = #tpu.pipeline_mode<synchronous>, transform_indices = @transform_9, window_bounds = array<i64: 1, 32>}, {pipeline_mode = #tpu.pipeline_mode<synchronous>, transform_indices = @transform_10, window_bounds = array<i64: 32, 64>}, {pipeline_mode = #tpu.pipeline_mode<synchronous>, transform_indices = @transform_11, window_bounds = array<i64: 1, 64>}, {pipeline_mode = #tpu.pipeline_mode<synchronous>, transform_indices = @transform_12, window_bounds = array<i64: 7, 32>}, {pipeline_mode = #tpu.pipeline_mode<synchronous>, transform_indices = @transform_13, window_bounds = array<i64: 1, 32>}, {pipeline_mode = #tpu.pipeline_mode<synchronous>, transform_indices = @transform_14, window_bounds = array<i64: 1, 32>}, {pipeline_mode = #tpu.pipeline_mode<synchronous>, transform_indices = @transform_15, window_bounds = array<i64: 1, 32>}, {pipeline_mode = #tpu.pipeline_mode<synchronous>, transform_indices = @transform_16, window_bounds = array<i64: 32, 32>}, {pipeline_mode = #tpu.pipeline_mode<synchronous>, transform_indices = @transform_17, window_bounds = array<i64: 1, 32>}, {transform_indices = @transform_18, window_bounds = array<i64: 8, 64>}]} {
    %c0 = arith.constant 0 : index
    %c0_0 = arith.constant 0 : index
    %0 = vector.load %arg1[%c0, %c0_0] : memref<8x64xf32, #tpu.memory_space<vmem>>, vector<8x64xf32>
    %c0_1 = arith.constant 0 : index
    %c0_2 = arith.constant 0 : index
    %1 = vector.load %arg2[%c0_1, %c0_2] : memref<2x8xf32, #tpu.memory_space<vmem>>, vector<2x8xf32>
    %c0_3 = arith.constant 0 : index
    %c0_4 = arith.constant 0 : index
    %2 = vector.load %arg3[%c0_3, %c0_4] : memref<1x32xf32, #tpu.memory_space<vmem>>, vector<1x32xf32>
    %c0_5 = arith.constant 0 : index
    %c0_6 = arith.constant 0 : index
    %3 = vector.load %arg4[%c0_5, %c0_6] : memref<1x32xf32, #tpu.memory_space<vmem>>, vector<1x32xf32>
    %c0_7 = arith.constant 0 : index
    %c0_8 = arith.constant 0 : index
    %4 = vector.load %arg5[%c0_7, %c0_8] : memref<32x96xbf16, #tpu.memory_space<vmem>>, vector<32x96xbf16>
    %c0_9 = arith.constant 0 : index
    %c0_10 = arith.constant 0 : index
    %5 = vector.load %arg6[%c0_9, %c0_10] : memref<1x96xf32, #tpu.memory_space<vmem>>, vector<1x96xf32>
    %c0_11 = arith.constant 0 : index
    %c0_12 = arith.constant 0 : index
    %6 = vector.load %arg7[%c0_11, %c0_12] : memref<32x32xbf16, #tpu.memory_space<vmem>>, vector<32x32xbf16>
    %c0_13 = arith.constant 0 : index
    %c0_14 = arith.constant 0 : index
    %7 = vector.load %arg8[%c0_13, %c0_14] : memref<1x32xf32, #tpu.memory_space<vmem>>, vector<1x32xf32>
    %c0_15 = arith.constant 0 : index
    %c0_16 = arith.constant 0 : index
    %8 = vector.load %arg9[%c0_15, %c0_16] : memref<1x32xf32, #tpu.memory_space<vmem>>, vector<1x32xf32>
    %c0_17 = arith.constant 0 : index
    %c0_18 = arith.constant 0 : index
    %9 = vector.load %arg10[%c0_17, %c0_18] : memref<1x32xf32, #tpu.memory_space<vmem>>, vector<1x32xf32>
    %c0_19 = arith.constant 0 : index
    %c0_20 = arith.constant 0 : index
    %10 = vector.load %arg11[%c0_19, %c0_20] : memref<32x64xbf16, #tpu.memory_space<vmem>>, vector<32x64xbf16>
    %c0_21 = arith.constant 0 : index
    %c0_22 = arith.constant 0 : index
    %11 = vector.load %arg12[%c0_21, %c0_22] : memref<1x64xf32, #tpu.memory_space<vmem>>, vector<1x64xf32>
    %c0_23 = arith.constant 0 : index
    %c0_24 = arith.constant 0 : index
    %12 = vector.load %arg13[%c0_23, %c0_24] : memref<7x32xf32, #tpu.memory_space<vmem>>, vector<7x32xf32>
    %c0_25 = arith.constant 0 : index
    %c0_26 = arith.constant 0 : index
    %13 = vector.load %arg14[%c0_25, %c0_26] : memref<1x32xf32, #tpu.memory_space<vmem>>, vector<1x32xf32>
    %c0_27 = arith.constant 0 : index
    %c0_28 = arith.constant 0 : index
    %14 = vector.load %arg15[%c0_27, %c0_28] : memref<1x32xf32, #tpu.memory_space<vmem>>, vector<1x32xf32>
    %c0_29 = arith.constant 0 : index
    %c0_30 = arith.constant 0 : index
    %15 = vector.load %arg16[%c0_29, %c0_30] : memref<1x32xf32, #tpu.memory_space<vmem>>, vector<1x32xf32>
    %c0_31 = arith.constant 0 : index
    %c0_32 = arith.constant 0 : index
    %16 = vector.load %arg17[%c0_31, %c0_32] : memref<32x32xbf16, #tpu.memory_space<vmem>>, vector<32x32xbf16>
    %c0_33 = arith.constant 0 : index
    %c0_34 = arith.constant 0 : index
    %17 = vector.load %arg18[%c0_33, %c0_34] : memref<1x32xf32, #tpu.memory_space<vmem>>, vector<1x32xf32>
    %cst = arith.constant 0.000000e+00 : f32
    %18 = vector.broadcast %cst : f32 to vector<14x32xf32>
    %c0_35 = arith.constant 0 : index
    %c0_36 = arith.constant 0 : index
    %19 = vector.load %arg20[%c0_35, %c0_36] : memref<14x32xf32, #tpu.memory_space<vmem>>, vector<14x32xf32>
    tpu.vector_store %arg20[%c0_35, %c0_36], %18 {strides = array<i32>} : memref<14x32xf32, #tpu.memory_space<vmem>>, vector<14x32xf32>,
    %20 = vector.extract_strided_slice %0 {offsets = [0, 0], sizes = [8, 32], strides = [1, 1]} : vector<8x64xf32> to vector<8x32xf32>
    %cst_37 = arith.constant dense<0.000000e+00> : vector<8xf32>
    %21 = vector.multi_reduction <add>, %20, %cst_37 [1] : vector<8x32xf32> to vector<8xf32>
    %22 = vector.shape_cast %21 : vector<8xf32> to vector<8x1xf32>
    %cst_38 = arith.constant 3.200000e+01 : f32
    %23 = vector.broadcast %cst_38 : f32 to vector<8x1xf32>
    %24 = arith.divf %22, %23 : vector<8x1xf32>
    %25 = vector.broadcast %24 : vector<8x1xf32> to vector<8x32xf32>
    %26 = arith.subf %20, %25 : vector<8x32xf32>
    %27 = arith.mulf %26, %26 : vector<8x32xf32>
    %cst_39 = arith.constant dense<0.000000e+00> : vector<8xf32>
    %28 = vector.multi_reduction <add>, %27, %cst_39 [1] : vector<8x32xf32> to vector<8xf32>
    %29 = vector.shape_cast %28 : vector<8xf32> to vector<8x1xf32>
    %cst_40 = arith.constant 3.200000e+01 : f32
    %30 = vector.broadcast %cst_40 : f32 to vector<8x1xf32>
    %31 = arith.divf %29, %30 : vector<8x1xf32>
    %32 = vector.broadcast %24 : vector<8x1xf32> to vector<8x32xf32>
    %33 = arith.subf %20, %32 : vector<8x32xf32>
    %cst_41 = arith.constant 9.99999974E-6 : f32
    %34 = vector.broadcast %cst_41 : f32 to vector<8x1xf32>
    %35 = arith.addf %31, %34 : vector<8x1xf32>
    %36 = math.rsqrt %35 : vector<8x1xf32>
    %37 = vector.broadcast %36 : vector<8x1xf32> to vector<8x32xf32>
    %38 = arith.mulf %33, %37 : vector<8x32xf32>
    %39 = vector.broadcast %2 : vector<1x32xf32> to vector<8x32xf32>
    %40 = arith.mulf %38, %39 : vector<8x32xf32>
    %41 = vector.broadcast %3 : vector<1x32xf32> to vector<8x32xf32>
    %42 = arith.addf %40, %41 : vector<8x32xf32>
    %43 = arith.truncf %42 : vector<8x32xf32> to vector<8x32xbf16>
    %cst_42 = arith.constant dense<0.000000e+00> : vector<8x96xf32>
    %44 = tpu.matmul %43, %4, %cst_42 {dimension_numbers = #tpu.dot_dimension_numbers<[1], [0], [0], [1], [0, 0, 1, 1], [], []>} : vector<8x32xbf16>, vector<32x96xbf16>, vector<8x96xf32> -> vector<8x96xf32>
    %45 = vector.broadcast %5 : vector<1x96xf32> to vector<8x96xf32>
    %46 = arith.addf %44, %45 : vector<8x96xf32>
    %47 = vector.extract_strided_slice %46 {offsets = [0, 0], sizes = [8, 32], strides = [1, 1]} : vector<8x96xf32> to vector<8x32xf32>
    %cst_43 = arith.constant 0.353553385 : f32
    %48 = vector.broadcast %cst_43 : f32 to vector<8x32xf32>
    %49 = arith.mulf %47, %48 : vector<8x32xf32>
    %50 = vector.extract_strided_slice %46 {offsets = [0, 32], sizes = [8, 32], strides = [1, 1]} : vector<8x96xf32> to vector<8x32xf32>
    %51 = vector.extract_strided_slice %46 {offsets = [0, 64], sizes = [8, 32], strides = [1, 1]} : vector<8x96xf32> to vector<8x32xf32>
    %52 = vector.extract_strided_slice %1 {offsets = [0, 0], sizes = [1, 8], strides = [1, 1]} : vector<2x8xf32> to vector<1x8xf32>
    %cst_44 = arith.constant 0.000000e+00 : f32
    %53 = vector.broadcast %cst_44 : f32 to vector<8x32xf32>
    %54 = vector.extract_strided_slice %49 {offsets = [0, 0], sizes = [8, 8], strides = [1, 1]} : vector<8x32xf32> to vector<8x8xf32>
    %55 = arith.truncf %54 : vector<8x8xf32> to vector<8x8xbf16>
    %56 = vector.extract_strided_slice %50 {offsets = [0, 0], sizes = [8, 8], strides = [1, 1]} : vector<8x32xf32> to vector<8x8xf32>
    %57 = arith.truncf %56 : vector<8x8xf32> to vector<8x8xbf16>
    %cst_45 = arith.constant dense<0.000000e+00> : vector<8x8xf32>
    %58 = tpu.matmul %55, %57, %cst_45 {dimension_numbers = #tpu.dot_dimension_numbers<[1], [1], [0], [0], [0, 0, 1, 0], [], []>} : vector<8x8xbf16>, vector<8x8xbf16>, vector<8x8xf32> -> vector<8x8xf32>
    %59 = vector.broadcast %52 : vector<1x8xf32> to vector<8x8xf32>
    %60 = arith.addf %58, %59 : vector<8x8xf32>
    %cst_46 = arith.constant dense<0xFF800000> : vector<8xf32>
    %61 = vector.multi_reduction <maximumf>, %60, %cst_46 [1] : vector<8x8xf32> to vector<8xf32>
    %62 = vector.shape_cast %61 : vector<8xf32> to vector<8x1xf32>
    %63 = vector.broadcast %62 : vector<8x1xf32> to vector<8x8xf32>
    %64 = arith.subf %60, %63 : vector<8x8xf32>
    %65 = math.exp %64 : vector<8x8xf32>
    %cst_47 = arith.constant dense<0.000000e+00> : vector<8xf32>
    %66 = vector.multi_reduction <add>, %65, %cst_47 [1] : vector<8x8xf32> to vector<8xf32>
    %67 = vector.shape_cast %66 : vector<8xf32> to vector<8x1xf32>
    %68 = tpu.reciprocal %67 {approx = true} : vector<8x1xf32> -> vector<8x1xf32>
    %69 = vector.broadcast %68 : vector<8x1xf32> to vector<8x8xf32>
    %70 = arith.mulf %65, %69 : vector<8x8xf32>
    %71 = arith.truncf %70 : vector<8x8xf32> to vector<8x8xbf16>
    %72 = vector.extract_strided_slice %51 {offsets = [0, 0], sizes = [8, 8], strides = [1, 1]} : vector<8x32xf32> to vector<8x8xf32>
    %73 = arith.truncf %72 : vector<8x8xf32> to vector<8x8xbf16>
    %cst_48 = arith.constant dense<0.000000e+00> : vector<8x8xf32>
    %74 = tpu.matmul %71, %73, %cst_48 {dimension_numbers = #tpu.dot_dimension_numbers<[1], [0], [0], [1], [0, 0, 1, 1], [], []>} : vector<8x8xbf16>, vector<8x8xbf16>, vector<8x8xf32> -> vector<8x8xf32>
    %75 = arith.truncf %74 : vector<8x8xf32> to vector<8x8xbf16>
    %76 = vector.extract_strided_slice %6 {offsets = [0, 0], sizes = [8, 32], strides = [1, 1]} : vector<32x32xbf16> to vector<8x32xbf16>
    %cst_49 = arith.constant dense<0.000000e+00> : vector<8x32xf32>
    %77 = tpu.matmul %75, %76, %cst_49 {dimension_numbers = #tpu.dot_dimension_numbers<[1], [0], [0], [1], [0, 0, 1, 1], [], []>} : vector<8x8xbf16>, vector<8x32xbf16>, vector<8x32xf32> -> vector<8x32xf32>
    %78 = arith.addf %53, %77 : vector<8x32xf32>
    %79 = vector.extract_strided_slice %49 {offsets = [0, 8], sizes = [8, 8], strides = [1, 1]} : vector<8x32xf32> to vector<8x8xf32>
    %80 = arith.truncf %79 : vector<8x8xf32> to vector<8x8xbf16>
    %81 = vector.extract_strided_slice %50 {offsets = [0, 8], sizes = [8, 8], strides = [1, 1]} : vector<8x32xf32> to vector<8x8xf32>
    %82 = arith.truncf %81 : vector<8x8xf32> to vector<8x8xbf16>
    %cst_50 = arith.constant dense<0.000000e+00> : vector<8x8xf32>
    %83 = tpu.matmul %80, %82, %cst_50 {dimension_numbers = #tpu.dot_dimension_numbers<[1], [1], [0], [0], [0, 0, 1, 0], [], []>} : vector<8x8xbf16>, vector<8x8xbf16>, vector<8x8xf32> -> vector<8x8xf32>
    %84 = vector.broadcast %52 : vector<1x8xf32> to vector<8x8xf32>
    %85 = arith.addf %83, %84 : vector<8x8xf32>
    %cst_51 = arith.constant dense<0xFF800000> : vector<8xf32>
    %86 = vector.multi_reduction <maximumf>, %85, %cst_51 [1] : vector<8x8xf32> to vector<8xf32>
    %87 = vector.shape_cast %86 : vector<8xf32> to vector<8x1xf32>
    %88 = vector.broadcast %87 : vector<8x1xf32> to vector<8x8xf32>
    %89 = arith.subf %85, %88 : vector<8x8xf32>
    %90 = math.exp %89 : vector<8x8xf32>
    %cst_52 = arith.constant dense<0.000000e+00> : vector<8xf32>
    %91 = vector.multi_reduction <add>, %90, %cst_52 [1] : vector<8x8xf32> to vector<8xf32>
    %92 = vector.shape_cast %91 : vector<8xf32> to vector<8x1xf32>
    %93 = tpu.reciprocal %92 {approx = true} : vector<8x1xf32> -> vector<8x1xf32>
    %94 = vector.broadcast %93 : vector<8x1xf32> to vector<8x8xf32>
    %95 = arith.mulf %90, %94 : vector<8x8xf32>
    %96 = arith.truncf %95 : vector<8x8xf32> to vector<8x8xbf16>
    %97 = vector.extract_strided_slice %51 {offsets = [0, 8], sizes = [8, 8], strides = [1, 1]} : vector<8x32xf32> to vector<8x8xf32>
    %98 = arith.truncf %97 : vector<8x8xf32> to vector<8x8xbf16>
    %cst_53 = arith.constant dense<0.000000e+00> : vector<8x8xf32>
    %99 = tpu.matmul %96, %98, %cst_53 {dimension_numbers = #tpu.dot_dimension_numbers<[1], [0], [0], [1], [0, 0, 1, 1], [], []>} : vector<8x8xbf16>, vector<8x8xbf16>, vector<8x8xf32> -> vector<8x8xf32>
    %100 = arith.truncf %99 : vector<8x8xf32> to vector<8x8xbf16>
    %101 = vector.extract_strided_slice %6 {offsets = [8, 0], sizes = [8, 32], strides = [1, 1]} : vector<32x32xbf16> to vector<8x32xbf16>
    %cst_54 = arith.constant dense<0.000000e+00> : vector<8x32xf32>
    %102 = tpu.matmul %100, %101, %cst_54 {dimension_numbers = #tpu.dot_dimension_numbers<[1], [0], [0], [1], [0, 0, 1, 1], [], []>} : vector<8x8xbf16>, vector<8x32xbf16>, vector<8x32xf32> -> vector<8x32xf32>
    %103 = arith.addf %78, %102 : vector<8x32xf32>
    %104 = vector.extract_strided_slice %49 {offsets = [0, 16], sizes = [8, 8], strides = [1, 1]} : vector<8x32xf32> to vector<8x8xf32>
    %105 = arith.truncf %104 : vector<8x8xf32> to vector<8x8xbf16>
    %106 = vector.extract_strided_slice %50 {offsets = [0, 16], sizes = [8, 8], strides = [1, 1]} : vector<8x32xf32> to vector<8x8xf32>
    %107 = arith.truncf %106 : vector<8x8xf32> to vector<8x8xbf16>
    %cst_55 = arith.constant dense<0.000000e+00> : vector<8x8xf32>
    %108 = tpu.matmul %105, %107, %cst_55 {dimension_numbers = #tpu.dot_dimension_numbers<[1], [1], [0], [0], [0, 0, 1, 0], [], []>} : vector<8x8xbf16>, vector<8x8xbf16>, vector<8x8xf32> -> vector<8x8xf32>
    %109 = vector.broadcast %52 : vector<1x8xf32> to vector<8x8xf32>
    %110 = arith.addf %108, %109 : vector<8x8xf32>
    %cst_56 = arith.constant dense<0xFF800000> : vector<8xf32>
    %111 = vector.multi_reduction <maximumf>, %110, %cst_56 [1] : vector<8x8xf32> to vector<8xf32>
    %112 = vector.shape_cast %111 : vector<8xf32> to vector<8x1xf32>
    %113 = vector.broadcast %112 : vector<8x1xf32> to vector<8x8xf32>
    %114 = arith.subf %110, %113 : vector<8x8xf32>
    %115 = math.exp %114 : vector<8x8xf32>
    %cst_57 = arith.constant dense<0.000000e+00> : vector<8xf32>
    %116 = vector.multi_reduction <add>, %115, %cst_57 [1] : vector<8x8xf32> to vector<8xf32>
    %117 = vector.shape_cast %116 : vector<8xf32> to vector<8x1xf32>
    %118 = tpu.reciprocal %117 {approx = true} : vector<8x1xf32> -> vector<8x1xf32>
    %119 = vector.broadcast %118 : vector<8x1xf32> to vector<8x8xf32>
    %120 = arith.mulf %115, %119 : vector<8x8xf32>
    %121 = arith.truncf %120 : vector<8x8xf32> to vector<8x8xbf16>
    %122 = vector.extract_strided_slice %51 {offsets = [0, 16], sizes = [8, 8], strides = [1, 1]} : vector<8x32xf32> to vector<8x8xf32>
    %123 = arith.truncf %122 : vector<8x8xf32> to vector<8x8xbf16>
    %cst_58 = arith.constant dense<0.000000e+00> : vector<8x8xf32>
    %124 = tpu.matmul %121, %123, %cst_58 {dimension_numbers = #tpu.dot_dimension_numbers<[1], [0], [0], [1], [0, 0, 1, 1], [], []>} : vector<8x8xbf16>, vector<8x8xbf16>, vector<8x8xf32> -> vector<8x8xf32>
    %125 = arith.truncf %124 : vector<8x8xf32> to vector<8x8xbf16>
    %126 = vector.extract_strided_slice %6 {offsets = [16, 0], sizes = [8, 32], strides = [1, 1]} : vector<32x32xbf16> to vector<8x32xbf16>
    %cst_59 = arith.constant dense<0.000000e+00> : vector<8x32xf32>
    %127 = tpu.matmul %125, %126, %cst_59 {dimension_numbers = #tpu.dot_dimension_numbers<[1], [0], [0], [1], [0, 0, 1, 1], [], []>} : vector<8x8xbf16>, vector<8x32xbf16>, vector<8x32xf32> -> vector<8x32xf32>
    %128 = arith.addf %103, %127 : vector<8x32xf32>
    %129 = vector.extract_strided_slice %49 {offsets = [0, 24], sizes = [8, 8], strides = [1, 1]} : vector<8x32xf32> to vector<8x8xf32>
    %130 = arith.truncf %129 : vector<8x8xf32> to vector<8x8xbf16>
    %131 = vector.extract_strided_slice %50 {offsets = [0, 24], sizes = [8, 8], strides = [1, 1]} : vector<8x32xf32> to vector<8x8xf32>
    %132 = arith.truncf %131 : vector<8x8xf32> to vector<8x8xbf16>
    %cst_60 = arith.constant dense<0.000000e+00> : vector<8x8xf32>
    %133 = tpu.matmul %130, %132, %cst_60 {dimension_numbers = #tpu.dot_dimension_numbers<[1], [1], [0], [0], [0, 0, 1, 0], [], []>} : vector<8x8xbf16>, vector<8x8xbf16>, vector<8x8xf32> -> vector<8x8xf32>
    %134 = vector.broadcast %52 : vector<1x8xf32> to vector<8x8xf32>
    %135 = arith.addf %133, %134 : vector<8x8xf32>
    %cst_61 = arith.constant dense<0xFF800000> : vector<8xf32>
    %136 = vector.multi_reduction <maximumf>, %135, %cst_61 [1] : vector<8x8xf32> to vector<8xf32>
    %137 = vector.shape_cast %136 : vector<8xf32> to vector<8x1xf32>
    %138 = vector.broadcast %137 : vector<8x1xf32> to vector<8x8xf32>
    %139 = arith.subf %135, %138 : vector<8x8xf32>
    %140 = math.exp %139 : vector<8x8xf32>
    %cst_62 = arith.constant dense<0.000000e+00> : vector<8xf32>
    %141 = vector.multi_reduction <add>, %140, %cst_62 [1] : vector<8x8xf32> to vector<8xf32>
    %142 = vector.shape_cast %141 : vector<8xf32> to vector<8x1xf32>
    %143 = tpu.reciprocal %142 {approx = true} : vector<8x1xf32> -> vector<8x1xf32>
    %144 = vector.broadcast %143 : vector<8x1xf32> to vector<8x8xf32>
    %145 = arith.mulf %140, %144 : vector<8x8xf32>
    %146 = arith.truncf %145 : vector<8x8xf32> to vector<8x8xbf16>
    %147 = vector.extract_strided_slice %51 {offsets = [0, 24], sizes = [8, 8], strides = [1, 1]} : vector<8x32xf32> to vector<8x8xf32>
    %148 = arith.truncf %147 : vector<8x8xf32> to vector<8x8xbf16>
    %cst_63 = arith.constant dense<0.000000e+00> : vector<8x8xf32>
    %149 = tpu.matmul %146, %148, %cst_63 {dimension_numbers = #tpu.dot_dimension_numbers<[1], [0], [0], [1], [0, 0, 1, 1], [], []>} : vector<8x8xbf16>, vector<8x8xbf16>, vector<8x8xf32> -> vector<8x8xf32>
    %150 = arith.truncf %149 : vector<8x8xf32> to vector<8x8xbf16>
    %151 = vector.extract_strided_slice %6 {offsets = [24, 0], sizes = [8, 32], strides = [1, 1]} : vector<32x32xbf16> to vector<8x32xbf16>
    %cst_64 = arith.constant dense<0.000000e+00> : vector<8x32xf32>
    %152 = tpu.matmul %150, %151, %cst_64 {dimension_numbers = #tpu.dot_dimension_numbers<[1], [0], [0], [1], [0, 0, 1, 1], [], []>} : vector<8x8xbf16>, vector<8x32xbf16>, vector<8x32xf32> -> vector<8x32xf32>
    %153 = arith.addf %128, %152 : vector<8x32xf32>
    %154 = arith.addf %20, %153 : vector<8x32xf32>
    %155 = vector.broadcast %7 : vector<1x32xf32> to vector<8x32xf32>
    %156 = arith.addf %154, %155 : vector<8x32xf32>
    %cst_65 = arith.constant dense<0.000000e+00> : vector<8xf32>
    %157 = vector.multi_reduction <add>, %156, %cst_65 [1] : vector<8x32xf32> to vector<8xf32>
    %158 = vector.shape_cast %157 : vector<8xf32> to vector<8x1xf32>
    %cst_66 = arith.constant 3.200000e+01 : f32
    %159 = vector.broadcast %cst_66 : f32 to vector<8x1xf32>
    %160 = arith.divf %158, %159 : vector<8x1xf32>
    %161 = vector.broadcast %160 : vector<8x1xf32> to vector<8x32xf32>
    %162 = arith.subf %156, %161 : vector<8x32xf32>
    %163 = arith.mulf %162, %162 : vector<8x32xf32>
    %cst_67 = arith.constant dense<0.000000e+00> : vector<8xf32>
    %164 = vector.multi_reduction <add>, %163, %cst_67 [1] : vector<8x32xf32> to vector<8xf32>
    %165 = vector.shape_cast %164 : vector<8xf32> to vector<8x1xf32>
    %cst_68 = arith.constant 3.200000e+01 : f32
    %166 = vector.broadcast %cst_68 : f32 to vector<8x1xf32>
    %167 = arith.divf %165, %166 : vector<8x1xf32>
    %168 = vector.broadcast %160 : vector<8x1xf32> to vector<8x32xf32>
    %169 = arith.subf %156, %168 : vector<8x32xf32>
    %cst_69 = arith.constant 9.99999974E-6 : f32
    %170 = vector.broadcast %cst_69 : f32 to vector<8x1xf32>
    %171 = arith.addf %167, %170 : vector<8x1xf32>
    %172 = math.rsqrt %171 : vector<8x1xf32>
    %173 = vector.broadcast %172 : vector<8x1xf32> to vector<8x32xf32>
    %174 = arith.mulf %169, %173 : vector<8x32xf32>
    %175 = vector.broadcast %8 : vector<1x32xf32> to vector<8x32xf32>
    %176 = arith.mulf %174, %175 : vector<8x32xf32>
    %177 = vector.broadcast %9 : vector<1x32xf32> to vector<8x32xf32>
    %178 = arith.addf %176, %177 : vector<8x32xf32>
    %179 = arith.truncf %178 : vector<8x32xf32> to vector<8x32xbf16>
    %cst_70 = arith.constant dense<0.000000e+00> : vector<8x64xf32>
    %180 = tpu.matmul %179, %10, %cst_70 {dimension_numbers = #tpu.dot_dimension_numbers<[1], [0], [0], [1], [0, 0, 1, 1], [], []>} : vector<8x32xbf16>, vector<32x64xbf16>, vector<8x64xf32> -> vector<8x64xf32>
    %181 = vector.broadcast %11 : vector<1x64xf32> to vector<8x64xf32>
    %182 = arith.addf %180, %181 : vector<8x64xf32>
    %183 = vector.extract_strided_slice %182 {offsets = [0, 0], sizes = [8, 32], strides = [1, 1]} : vector<8x64xf32> to vector<8x32xf32>
    %184 = vector.extract_strided_slice %182 {offsets = [0, 32], sizes = [8, 32], strides = [1, 1]} : vector<8x64xf32> to vector<8x32xf32>
    %185 = arith.negf %184 : vector<8x32xf32>
    %186 = math.exp %185 : vector<8x32xf32>
    %cst_71 = arith.constant 1.000000e+00 : f32
    %187 = vector.broadcast %cst_71 : f32 to vector<8x32xf32>
    %188 = arith.addf %187, %186 : vector<8x32xf32>
    %189 = arith.divf %187, %188 : vector<8x32xf32>
    %190 = arith.mulf %183, %189 : vector<8x32xf32>
    %c3 = arith.constant 3 : index
    %c0_72 = arith.constant 0 : index
    %191 = vector.load %arg20[%c3, %c0_72] : memref<14x32xf32, #tpu.memory_space<vmem>>, vector<8x32xf32>
    tpu.vector_store %arg20[%c3, %c0_72], %190 {strides = array<i32>} : memref<14x32xf32, #tpu.memory_space<vmem>>, vector<8x32xf32>,
    %192 = vector.shape_cast %13 : vector<1x32xf32> to vector<1x32xf32>
    %193 = vector.broadcast %192 : vector<1x32xf32> to vector<8x32xf32>
    %c0_73 = arith.constant 0 : index
    %c0_74 = arith.constant 0 : index
    %194 = vector.load %arg20[%c0_73, %c0_74] : memref<14x32xf32, #tpu.memory_space<vmem>>, vector<8x32xf32>
    %195 = vector.extract_strided_slice %12 {offsets = [0, 0], sizes = [1, 32], strides = [1, 1]} : vector<7x32xf32> to vector<1x32xf32>
    %196 = vector.broadcast %195 : vector<1x32xf32> to vector<8x32xf32>
    %197 = arith.mulf %194, %196 : vector<8x32xf32>
    %198 = arith.addf %193, %197 : vector<8x32xf32>
    %c1 = arith.constant 1 : index
    %c0_75 = arith.constant 0 : index
    %199 = vector.load %arg20[%c1, %c0_75] : memref<14x32xf32, #tpu.memory_space<vmem>>, vector<8x32xf32>
    %200 = vector.extract_strided_slice %12 {offsets = [1, 0], sizes = [1, 32], strides = [1, 1]} : vector<7x32xf32> to vector<1x32xf32>
    %201 = vector.broadcast %200 : vector<1x32xf32> to vector<8x32xf32>
    %202 = arith.mulf %199, %201 : vector<8x32xf32>
    %203 = arith.addf %198, %202 : vector<8x32xf32>
    %c2 = arith.constant 2 : index
    %c0_76 = arith.constant 0 : index
    %204 = vector.load %arg20[%c2, %c0_76] : memref<14x32xf32, #tpu.memory_space<vmem>>, vector<8x32xf32>
    %205 = vector.extract_strided_slice %12 {offsets = [2, 0], sizes = [1, 32], strides = [1, 1]} : vector<7x32xf32> to vector<1x32xf32>
    %206 = vector.broadcast %205 : vector<1x32xf32> to vector<8x32xf32>
    %207 = arith.mulf %204, %206 : vector<8x32xf32>
    %208 = arith.addf %203, %207 : vector<8x32xf32>
    %c3_77 = arith.constant 3 : index
    %c0_78 = arith.constant 0 : index
    %209 = vector.load %arg20[%c3_77, %c0_78] : memref<14x32xf32, #tpu.memory_space<vmem>>, vector<8x32xf32>
    %210 = vector.extract_strided_slice %12 {offsets = [3, 0], sizes = [1, 32], strides = [1, 1]} : vector<7x32xf32> to vector<1x32xf32>
    %211 = vector.broadcast %210 : vector<1x32xf32> to vector<8x32xf32>
    %212 = arith.mulf %209, %211 : vector<8x32xf32>
    %213 = arith.addf %208, %212 : vector<8x32xf32>
    %c4 = arith.constant 4 : index
    %c0_79 = arith.constant 0 : index
    %214 = vector.load %arg20[%c4, %c0_79] : memref<14x32xf32, #tpu.memory_space<vmem>>, vector<8x32xf32>
    %215 = vector.extract_strided_slice %12 {offsets = [4, 0], sizes = [1, 32], strides = [1, 1]} : vector<7x32xf32> to vector<1x32xf32>
    %216 = vector.broadcast %215 : vector<1x32xf32> to vector<8x32xf32>
    %217 = arith.mulf %214, %216 : vector<8x32xf32>
    %218 = arith.addf %213, %217 : vector<8x32xf32>
    %c5 = arith.constant 5 : index
    %c0_80 = arith.constant 0 : index
    %219 = vector.load %arg20[%c5, %c0_80] : memref<14x32xf32, #tpu.memory_space<vmem>>, vector<8x32xf32>
    %220 = vector.extract_strided_slice %12 {offsets = [5, 0], sizes = [1, 32], strides = [1, 1]} : vector<7x32xf32> to vector<1x32xf32>
    %221 = vector.broadcast %220 : vector<1x32xf32> to vector<8x32xf32>
    %222 = arith.mulf %219, %221 : vector<8x32xf32>
    %223 = arith.addf %218, %222 : vector<8x32xf32>
    %c6 = arith.constant 6 : index
    %c0_81 = arith.constant 0 : index
    %224 = vector.load %arg20[%c6, %c0_81] : memref<14x32xf32, #tpu.memory_space<vmem>>, vector<8x32xf32>
    %225 = vector.extract_strided_slice %12 {offsets = [6, 0], sizes = [1, 32], strides = [1, 1]} : vector<7x32xf32> to vector<1x32xf32>
    %226 = vector.broadcast %225 : vector<1x32xf32> to vector<8x32xf32>
    %227 = arith.mulf %224, %226 : vector<8x32xf32>
    %228 = arith.addf %223, %227 : vector<8x32xf32>
    %229 = vector.broadcast %14 : vector<1x32xf32> to vector<8x32xf32>
    %230 = arith.mulf %228, %229 : vector<8x32xf32>
    %231 = vector.broadcast %15 : vector<1x32xf32> to vector<8x32xf32>
    %232 = arith.addf %230, %231 : vector<8x32xf32>
    %233 = arith.negf %232 : vector<8x32xf32>
    %234 = math.exp %233 : vector<8x32xf32>
    %cst_82 = arith.constant 1.000000e+00 : f32
    %235 = vector.broadcast %cst_82 : f32 to vector<8x32xf32>
    %236 = arith.addf %235, %234 : vector<8x32xf32>
    %237 = arith.divf %235, %236 : vector<8x32xf32>
    %238 = arith.mulf %232, %237 : vector<8x32xf32>
    %239 = arith.truncf %238 : vector<8x32xf32> to vector<8x32xbf16>
    %cst_83 = arith.constant dense<0.000000e+00> : vector<8x32xf32>
    %240 = tpu.matmul %239, %16, %cst_83 {dimension_numbers = #tpu.dot_dimension_numbers<[1], [0], [0], [1], [0, 0, 1, 1], [], []>} : vector<8x32xbf16>, vector<32x32xbf16>, vector<8x32xf32> -> vector<8x32xf32>
    %241 = vector.broadcast %17 : vector<1x32xf32> to vector<8x32xf32>
    %242 = arith.addf %240, %241 : vector<8x32xf32>
    %243 = arith.addf %156, %242 : vector<8x32xf32>
    %244 = vector.extract_strided_slice %0 {offsets = [0, 32], sizes = [8, 32], strides = [1, 1]} : vector<8x64xf32> to vector<8x32xf32>
    %cst_84 = arith.constant dense<0.000000e+00> : vector<8xf32>
    %245 = vector.multi_reduction <add>, %244, %cst_84 [1] : vector<8x32xf32> to vector<8xf32>
    %246 = vector.shape_cast %245 : vector<8xf32> to vector<8x1xf32>
    %cst_85 = arith.constant 3.200000e+01 : f32
    %247 = vector.broadcast %cst_85 : f32 to vector<8x1xf32>
    %248 = arith.divf %246, %247 : vector<8x1xf32>
    %249 = vector.broadcast %248 : vector<8x1xf32> to vector<8x32xf32>
    %250 = arith.subf %244, %249 : vector<8x32xf32>
    %251 = arith.mulf %250, %250 : vector<8x32xf32>
    %cst_86 = arith.constant dense<0.000000e+00> : vector<8xf32>
    %252 = vector.multi_reduction <add>, %251, %cst_86 [1] : vector<8x32xf32> to vector<8xf32>
    %253 = vector.shape_cast %252 : vector<8xf32> to vector<8x1xf32>
    %cst_87 = arith.constant 3.200000e+01 : f32
    %254 = vector.broadcast %cst_87 : f32 to vector<8x1xf32>
    %255 = arith.divf %253, %254 : vector<8x1xf32>
    %256 = vector.broadcast %248 : vector<8x1xf32> to vector<8x32xf32>
    %257 = arith.subf %244, %256 : vector<8x32xf32>
    %cst_88 = arith.constant 9.99999974E-6 : f32
    %258 = vector.broadcast %cst_88 : f32 to vector<8x1xf32>
    %259 = arith.addf %255, %258 : vector<8x1xf32>
    %260 = math.rsqrt %259 : vector<8x1xf32>
    %261 = vector.broadcast %260 : vector<8x1xf32> to vector<8x32xf32>
    %262 = arith.mulf %257, %261 : vector<8x32xf32>
    %263 = vector.broadcast %2 : vector<1x32xf32> to vector<8x32xf32>
    %264 = arith.mulf %262, %263 : vector<8x32xf32>
    %265 = vector.broadcast %3 : vector<1x32xf32> to vector<8x32xf32>
    %266 = arith.addf %264, %265 : vector<8x32xf32>
    %267 = arith.truncf %266 : vector<8x32xf32> to vector<8x32xbf16>
    %cst_89 = arith.constant dense<0.000000e+00> : vector<8x96xf32>
    %268 = tpu.matmul %267, %4, %cst_89 {dimension_numbers = #tpu.dot_dimension_numbers<[1], [0], [0], [1], [0, 0, 1, 1], [], []>} : vector<8x32xbf16>, vector<32x96xbf16>, vector<8x96xf32> -> vector<8x96xf32>
    %269 = vector.broadcast %5 : vector<1x96xf32> to vector<8x96xf32>
    %270 = arith.addf %268, %269 : vector<8x96xf32>
    %271 = vector.extract_strided_slice %270 {offsets = [0, 0], sizes = [8, 32], strides = [1, 1]} : vector<8x96xf32> to vector<8x32xf32>
    %cst_90 = arith.constant 0.353553385 : f32
    %272 = vector.broadcast %cst_90 : f32 to vector<8x32xf32>
    %273 = arith.mulf %271, %272 : vector<8x32xf32>
    %274 = vector.extract_strided_slice %270 {offsets = [0, 32], sizes = [8, 32], strides = [1, 1]} : vector<8x96xf32> to vector<8x32xf32>
    %275 = vector.extract_strided_slice %270 {offsets = [0, 64], sizes = [8, 32], strides = [1, 1]} : vector<8x96xf32> to vector<8x32xf32>
    %276 = vector.extract_strided_slice %1 {offsets = [1, 0], sizes = [1, 8], strides = [1, 1]} : vector<2x8xf32> to vector<1x8xf32>
    %cst_91 = arith.constant 0.000000e+00 : f32
    %277 = vector.broadcast %cst_91 : f32 to vector<8x32xf32>
    %278 = vector.extract_strided_slice %273 {offsets = [0, 0], sizes = [8, 8], strides = [1, 1]} : vector<8x32xf32> to vector<8x8xf32>
    %279 = arith.truncf %278 : vector<8x8xf32> to vector<8x8xbf16>
    %280 = vector.extract_strided_slice %274 {offsets = [0, 0], sizes = [8, 8], strides = [1, 1]} : vector<8x32xf32> to vector<8x8xf32>
    %281 = arith.truncf %280 : vector<8x8xf32> to vector<8x8xbf16>
    %cst_92 = arith.constant dense<0.000000e+00> : vector<8x8xf32>
    %282 = tpu.matmul %279, %281, %cst_92 {dimension_numbers = #tpu.dot_dimension_numbers<[1], [1], [0], [0], [0, 0, 1, 0], [], []>} : vector<8x8xbf16>, vector<8x8xbf16>, vector<8x8xf32> -> vector<8x8xf32>
    %283 = vector.broadcast %276 : vector<1x8xf32> to vector<8x8xf32>
    %284 = arith.addf %282, %283 : vector<8x8xf32>
    %cst_93 = arith.constant dense<0xFF800000> : vector<8xf32>
    %285 = vector.multi_reduction <maximumf>, %284, %cst_93 [1] : vector<8x8xf32> to vector<8xf32>
    %286 = vector.shape_cast %285 : vector<8xf32> to vector<8x1xf32>
    %287 = vector.broadcast %286 : vector<8x1xf32> to vector<8x8xf32>
    %288 = arith.subf %284, %287 : vector<8x8xf32>
    %289 = math.exp %288 : vector<8x8xf32>
    %cst_94 = arith.constant dense<0.000000e+00> : vector<8xf32>
    %290 = vector.multi_reduction <add>, %289, %cst_94 [1] : vector<8x8xf32> to vector<8xf32>
    %291 = vector.shape_cast %290 : vector<8xf32> to vector<8x1xf32>
    %292 = tpu.reciprocal %291 {approx = true} : vector<8x1xf32> -> vector<8x1xf32>
    %293 = vector.broadcast %292 : vector<8x1xf32> to vector<8x8xf32>
    %294 = arith.mulf %289, %293 : vector<8x8xf32>
    %295 = arith.truncf %294 : vector<8x8xf32> to vector<8x8xbf16>
    %296 = vector.extract_strided_slice %275 {offsets = [0, 0], sizes = [8, 8], strides = [1, 1]} : vector<8x32xf32> to vector<8x8xf32>
    %297 = arith.truncf %296 : vector<8x8xf32> to vector<8x8xbf16>
    %cst_95 = arith.constant dense<0.000000e+00> : vector<8x8xf32>
    %298 = tpu.matmul %295, %297, %cst_95 {dimension_numbers = #tpu.dot_dimension_numbers<[1], [0], [0], [1], [0, 0, 1, 1], [], []>} : vector<8x8xbf16>, vector<8x8xbf16>, vector<8x8xf32> -> vector<8x8xf32>
    %299 = arith.truncf %298 : vector<8x8xf32> to vector<8x8xbf16>
    %300 = vector.extract_strided_slice %6 {offsets = [0, 0], sizes = [8, 32], strides = [1, 1]} : vector<32x32xbf16> to vector<8x32xbf16>
    %cst_96 = arith.constant dense<0.000000e+00> : vector<8x32xf32>
    %301 = tpu.matmul %299, %300, %cst_96 {dimension_numbers = #tpu.dot_dimension_numbers<[1], [0], [0], [1], [0, 0, 1, 1], [], []>} : vector<8x8xbf16>, vector<8x32xbf16>, vector<8x32xf32> -> vector<8x32xf32>
    %302 = arith.addf %277, %301 : vector<8x32xf32>
    %303 = vector.extract_strided_slice %273 {offsets = [0, 8], sizes = [8, 8], strides = [1, 1]} : vector<8x32xf32> to vector<8x8xf32>
    %304 = arith.truncf %303 : vector<8x8xf32> to vector<8x8xbf16>
    %305 = vector.extract_strided_slice %274 {offsets = [0, 8], sizes = [8, 8], strides = [1, 1]} : vector<8x32xf32> to vector<8x8xf32>
    %306 = arith.truncf %305 : vector<8x8xf32> to vector<8x8xbf16>
    %cst_97 = arith.constant dense<0.000000e+00> : vector<8x8xf32>
    %307 = tpu.matmul %304, %306, %cst_97 {dimension_numbers = #tpu.dot_dimension_numbers<[1], [1], [0], [0], [0, 0, 1, 0], [], []>} : vector<8x8xbf16>, vector<8x8xbf16>, vector<8x8xf32> -> vector<8x8xf32>
    %308 = vector.broadcast %276 : vector<1x8xf32> to vector<8x8xf32>
    %309 = arith.addf %307, %308 : vector<8x8xf32>
    %cst_98 = arith.constant dense<0xFF800000> : vector<8xf32>
    %310 = vector.multi_reduction <maximumf>, %309, %cst_98 [1] : vector<8x8xf32> to vector<8xf32>
    %311 = vector.shape_cast %310 : vector<8xf32> to vector<8x1xf32>
    %312 = vector.broadcast %311 : vector<8x1xf32> to vector<8x8xf32>
    %313 = arith.subf %309, %312 : vector<8x8xf32>
    %314 = math.exp %313 : vector<8x8xf32>
    %cst_99 = arith.constant dense<0.000000e+00> : vector<8xf32>
    %315 = vector.multi_reduction <add>, %314, %cst_99 [1] : vector<8x8xf32> to vector<8xf32>
    %316 = vector.shape_cast %315 : vector<8xf32> to vector<8x1xf32>
    %317 = tpu.reciprocal %316 {approx = true} : vector<8x1xf32> -> vector<8x1xf32>
    %318 = vector.broadcast %317 : vector<8x1xf32> to vector<8x8xf32>
    %319 = arith.mulf %314, %318 : vector<8x8xf32>
    %320 = arith.truncf %319 : vector<8x8xf32> to vector<8x8xbf16>
    %321 = vector.extract_strided_slice %275 {offsets = [0, 8], sizes = [8, 8], strides = [1, 1]} : vector<8x32xf32> to vector<8x8xf32>
    %322 = arith.truncf %321 : vector<8x8xf32> to vector<8x8xbf16>
    %cst_100 = arith.constant dense<0.000000e+00> : vector<8x8xf32>
    %323 = tpu.matmul %320, %322, %cst_100 {dimension_numbers = #tpu.dot_dimension_numbers<[1], [0], [0], [1], [0, 0, 1, 1], [], []>} : vector<8x8xbf16>, vector<8x8xbf16>, vector<8x8xf32> -> vector<8x8xf32>
    %324 = arith.truncf %323 : vector<8x8xf32> to vector<8x8xbf16>
    %325 = vector.extract_strided_slice %6 {offsets = [8, 0], sizes = [8, 32], strides = [1, 1]} : vector<32x32xbf16> to vector<8x32xbf16>
    %cst_101 = arith.constant dense<0.000000e+00> : vector<8x32xf32>
    %326 = tpu.matmul %324, %325, %cst_101 {dimension_numbers = #tpu.dot_dimension_numbers<[1], [0], [0], [1], [0, 0, 1, 1], [], []>} : vector<8x8xbf16>, vector<8x32xbf16>, vector<8x32xf32> -> vector<8x32xf32>
    %327 = arith.addf %302, %326 : vector<8x32xf32>
    %328 = vector.extract_strided_slice %273 {offsets = [0, 16], sizes = [8, 8], strides = [1, 1]} : vector<8x32xf32> to vector<8x8xf32>
    %329 = arith.truncf %328 : vector<8x8xf32> to vector<8x8xbf16>
    %330 = vector.extract_strided_slice %274 {offsets = [0, 16], sizes = [8, 8], strides = [1, 1]} : vector<8x32xf32> to vector<8x8xf32>
    %331 = arith.truncf %330 : vector<8x8xf32> to vector<8x8xbf16>
    %cst_102 = arith.constant dense<0.000000e+00> : vector<8x8xf32>
    %332 = tpu.matmul %329, %331, %cst_102 {dimension_numbers = #tpu.dot_dimension_numbers<[1], [1], [0], [0], [0, 0, 1, 0], [], []>} : vector<8x8xbf16>, vector<8x8xbf16>, vector<8x8xf32> -> vector<8x8xf32>
    %333 = vector.broadcast %276 : vector<1x8xf32> to vector<8x8xf32>
    %334 = arith.addf %332, %333 : vector<8x8xf32>
    %cst_103 = arith.constant dense<0xFF800000> : vector<8xf32>
    %335 = vector.multi_reduction <maximumf>, %334, %cst_103 [1] : vector<8x8xf32> to vector<8xf32>
    %336 = vector.shape_cast %335 : vector<8xf32> to vector<8x1xf32>
    %337 = vector.broadcast %336 : vector<8x1xf32> to vector<8x8xf32>
    %338 = arith.subf %334, %337 : vector<8x8xf32>
    %339 = math.exp %338 : vector<8x8xf32>
    %cst_104 = arith.constant dense<0.000000e+00> : vector<8xf32>
    %340 = vector.multi_reduction <add>, %339, %cst_104 [1] : vector<8x8xf32> to vector<8xf32>
    %341 = vector.shape_cast %340 : vector<8xf32> to vector<8x1xf32>
    %342 = tpu.reciprocal %341 {approx = true} : vector<8x1xf32> -> vector<8x1xf32>
    %343 = vector.broadcast %342 : vector<8x1xf32> to vector<8x8xf32>
    %344 = arith.mulf %339, %343 : vector<8x8xf32>
    %345 = arith.truncf %344 : vector<8x8xf32> to vector<8x8xbf16>
    %346 = vector.extract_strided_slice %275 {offsets = [0, 16], sizes = [8, 8], strides = [1, 1]} : vector<8x32xf32> to vector<8x8xf32>
    %347 = arith.truncf %346 : vector<8x8xf32> to vector<8x8xbf16>
    %cst_105 = arith.constant dense<0.000000e+00> : vector<8x8xf32>
    %348 = tpu.matmul %345, %347, %cst_105 {dimension_numbers = #tpu.dot_dimension_numbers<[1], [0], [0], [1], [0, 0, 1, 1], [], []>} : vector<8x8xbf16>, vector<8x8xbf16>, vector<8x8xf32> -> vector<8x8xf32>
    %349 = arith.truncf %348 : vector<8x8xf32> to vector<8x8xbf16>
    %350 = vector.extract_strided_slice %6 {offsets = [16, 0], sizes = [8, 32], strides = [1, 1]} : vector<32x32xbf16> to vector<8x32xbf16>
    %cst_106 = arith.constant dense<0.000000e+00> : vector<8x32xf32>
    %351 = tpu.matmul %349, %350, %cst_106 {dimension_numbers = #tpu.dot_dimension_numbers<[1], [0], [0], [1], [0, 0, 1, 1], [], []>} : vector<8x8xbf16>, vector<8x32xbf16>, vector<8x32xf32> -> vector<8x32xf32>
    %352 = arith.addf %327, %351 : vector<8x32xf32>
    %353 = vector.extract_strided_slice %273 {offsets = [0, 24], sizes = [8, 8], strides = [1, 1]} : vector<8x32xf32> to vector<8x8xf32>
    %354 = arith.truncf %353 : vector<8x8xf32> to vector<8x8xbf16>
    %355 = vector.extract_strided_slice %274 {offsets = [0, 24], sizes = [8, 8], strides = [1, 1]} : vector<8x32xf32> to vector<8x8xf32>
    %356 = arith.truncf %355 : vector<8x8xf32> to vector<8x8xbf16>
    %cst_107 = arith.constant dense<0.000000e+00> : vector<8x8xf32>
    %357 = tpu.matmul %354, %356, %cst_107 {dimension_numbers = #tpu.dot_dimension_numbers<[1], [1], [0], [0], [0, 0, 1, 0], [], []>} : vector<8x8xbf16>, vector<8x8xbf16>, vector<8x8xf32> -> vector<8x8xf32>
    %358 = vector.broadcast %276 : vector<1x8xf32> to vector<8x8xf32>
    %359 = arith.addf %357, %358 : vector<8x8xf32>
    %cst_108 = arith.constant dense<0xFF800000> : vector<8xf32>
    %360 = vector.multi_reduction <maximumf>, %359, %cst_108 [1] : vector<8x8xf32> to vector<8xf32>
    %361 = vector.shape_cast %360 : vector<8xf32> to vector<8x1xf32>
    %362 = vector.broadcast %361 : vector<8x1xf32> to vector<8x8xf32>
    %363 = arith.subf %359, %362 : vector<8x8xf32>
    %364 = math.exp %363 : vector<8x8xf32>
    %cst_109 = arith.constant dense<0.000000e+00> : vector<8xf32>
    %365 = vector.multi_reduction <add>, %364, %cst_109 [1] : vector<8x8xf32> to vector<8xf32>
    %366 = vector.shape_cast %365 : vector<8xf32> to vector<8x1xf32>
    %367 = tpu.reciprocal %366 {approx = true} : vector<8x1xf32> -> vector<8x1xf32>
    %368 = vector.broadcast %367 : vector<8x1xf32> to vector<8x8xf32>
    %369 = arith.mulf %364, %368 : vector<8x8xf32>
    %370 = arith.truncf %369 : vector<8x8xf32> to vector<8x8xbf16>
    %371 = vector.extract_strided_slice %275 {offsets = [0, 24], sizes = [8, 8], strides = [1, 1]} : vector<8x32xf32> to vector<8x8xf32>
    %372 = arith.truncf %371 : vector<8x8xf32> to vector<8x8xbf16>
    %cst_110 = arith.constant dense<0.000000e+00> : vector<8x8xf32>
    %373 = tpu.matmul %370, %372, %cst_110 {dimension_numbers = #tpu.dot_dimension_numbers<[1], [0], [0], [1], [0, 0, 1, 1], [], []>} : vector<8x8xbf16>, vector<8x8xbf16>, vector<8x8xf32> -> vector<8x8xf32>
    %374 = arith.truncf %373 : vector<8x8xf32> to vector<8x8xbf16>
    %375 = vector.extract_strided_slice %6 {offsets = [24, 0], sizes = [8, 32], strides = [1, 1]} : vector<32x32xbf16> to vector<8x32xbf16>
    %cst_111 = arith.constant dense<0.000000e+00> : vector<8x32xf32>
    %376 = tpu.matmul %374, %375, %cst_111 {dimension_numbers = #tpu.dot_dimension_numbers<[1], [0], [0], [1], [0, 0, 1, 1], [], []>} : vector<8x8xbf16>, vector<8x32xbf16>, vector<8x32xf32> -> vector<8x32xf32>
    %377 = arith.addf %352, %376 : vector<8x32xf32>
    %378 = arith.addf %244, %377 : vector<8x32xf32>
    %379 = vector.broadcast %7 : vector<1x32xf32> to vector<8x32xf32>
    %380 = arith.addf %378, %379 : vector<8x32xf32>
    %cst_112 = arith.constant dense<0.000000e+00> : vector<8xf32>
    %381 = vector.multi_reduction <add>, %380, %cst_112 [1] : vector<8x32xf32> to vector<8xf32>
    %382 = vector.shape_cast %381 : vector<8xf32> to vector<8x1xf32>
    %cst_113 = arith.constant 3.200000e+01 : f32
    %383 = vector.broadcast %cst_113 : f32 to vector<8x1xf32>
    %384 = arith.divf %382, %383 : vector<8x1xf32>
    %385 = vector.broadcast %384 : vector<8x1xf32> to vector<8x32xf32>
    %386 = arith.subf %380, %385 : vector<8x32xf32>
    %387 = arith.mulf %386, %386 : vector<8x32xf32>
    %cst_114 = arith.constant dense<0.000000e+00> : vector<8xf32>
    %388 = vector.multi_reduction <add>, %387, %cst_114 [1] : vector<8x32xf32> to vector<8xf32>
    %389 = vector.shape_cast %388 : vector<8xf32> to vector<8x1xf32>
    %cst_115 = arith.constant 3.200000e+01 : f32
    %390 = vector.broadcast %cst_115 : f32 to vector<8x1xf32>
    %391 = arith.divf %389, %390 : vector<8x1xf32>
    %392 = vector.broadcast %384 : vector<8x1xf32> to vector<8x32xf32>
    %393 = arith.subf %380, %392 : vector<8x32xf32>
    %cst_116 = arith.constant 9.99999974E-6 : f32
    %394 = vector.broadcast %cst_116 : f32 to vector<8x1xf32>
    %395 = arith.addf %391, %394 : vector<8x1xf32>
    %396 = math.rsqrt %395 : vector<8x1xf32>
    %397 = vector.broadcast %396 : vector<8x1xf32> to vector<8x32xf32>
    %398 = arith.mulf %393, %397 : vector<8x32xf32>
    %399 = vector.broadcast %8 : vector<1x32xf32> to vector<8x32xf32>
    %400 = arith.mulf %398, %399 : vector<8x32xf32>
    %401 = vector.broadcast %9 : vector<1x32xf32> to vector<8x32xf32>
    %402 = arith.addf %400, %401 : vector<8x32xf32>
    %403 = arith.truncf %402 : vector<8x32xf32> to vector<8x32xbf16>
    %cst_117 = arith.constant dense<0.000000e+00> : vector<8x64xf32>
    %404 = tpu.matmul %403, %10, %cst_117 {dimension_numbers = #tpu.dot_dimension_numbers<[1], [0], [0], [1], [0, 0, 1, 1], [], []>} : vector<8x32xbf16>, vector<32x64xbf16>, vector<8x64xf32> -> vector<8x64xf32>
    %405 = vector.broadcast %11 : vector<1x64xf32> to vector<8x64xf32>
    %406 = arith.addf %404, %405 : vector<8x64xf32>
    %407 = vector.extract_strided_slice %406 {offsets = [0, 0], sizes = [8, 32], strides = [1, 1]} : vector<8x64xf32> to vector<8x32xf32>
    %408 = vector.extract_strided_slice %406 {offsets = [0, 32], sizes = [8, 32], strides = [1, 1]} : vector<8x64xf32> to vector<8x32xf32>
    %409 = arith.negf %408 : vector<8x32xf32>
    %410 = math.exp %409 : vector<8x32xf32>
    %cst_118 = arith.constant 1.000000e+00 : f32
    %411 = vector.broadcast %cst_118 : f32 to vector<8x32xf32>
    %412 = arith.addf %411, %410 : vector<8x32xf32>
    %413 = arith.divf %411, %412 : vector<8x32xf32>
    %414 = arith.mulf %407, %413 : vector<8x32xf32>
    %c3_119 = arith.constant 3 : index
    %c0_120 = arith.constant 0 : index
    %415 = vector.load %arg20[%c3_119, %c0_120] : memref<14x32xf32, #tpu.memory_space<vmem>>, vector<8x32xf32>
    tpu.vector_store %arg20[%c3_119, %c0_120], %414 {strides = array<i32>} : memref<14x32xf32, #tpu.memory_space<vmem>>, vector<8x32xf32>,
    %416 = vector.shape_cast %13 : vector<1x32xf32> to vector<1x32xf32>
    %417 = vector.broadcast %416 : vector<1x32xf32> to vector<8x32xf32>
    %c0_121 = arith.constant 0 : index
    %c0_122 = arith.constant 0 : index
    %418 = vector.load %arg20[%c0_121, %c0_122] : memref<14x32xf32, #tpu.memory_space<vmem>>, vector<8x32xf32>
    %419 = vector.extract_strided_slice %12 {offsets = [0, 0], sizes = [1, 32], strides = [1, 1]} : vector<7x32xf32> to vector<1x32xf32>
    %420 = vector.broadcast %419 : vector<1x32xf32> to vector<8x32xf32>
    %421 = arith.mulf %418, %420 : vector<8x32xf32>
    %422 = arith.addf %417, %421 : vector<8x32xf32>
    %c1_123 = arith.constant 1 : index
    %c0_124 = arith.constant 0 : index
    %423 = vector.load %arg20[%c1_123, %c0_124] : memref<14x32xf32, #tpu.memory_space<vmem>>, vector<8x32xf32>
    %424 = vector.extract_strided_slice %12 {offsets = [1, 0], sizes = [1, 32], strides = [1, 1]} : vector<7x32xf32> to vector<1x32xf32>
    %425 = vector.broadcast %424 : vector<1x32xf32> to vector<8x32xf32>
    %426 = arith.mulf %423, %425 : vector<8x32xf32>
    %427 = arith.addf %422, %426 : vector<8x32xf32>
    %c2_125 = arith.constant 2 : index
    %c0_126 = arith.constant 0 : index
    %428 = vector.load %arg20[%c2_125, %c0_126] : memref<14x32xf32, #tpu.memory_space<vmem>>, vector<8x32xf32>
    %429 = vector.extract_strided_slice %12 {offsets = [2, 0], sizes = [1, 32], strides = [1, 1]} : vector<7x32xf32> to vector<1x32xf32>
    %430 = vector.broadcast %429 : vector<1x32xf32> to vector<8x32xf32>
    %431 = arith.mulf %428, %430 : vector<8x32xf32>
    %432 = arith.addf %427, %431 : vector<8x32xf32>
    %c3_127 = arith.constant 3 : index
    %c0_128 = arith.constant 0 : index
    %433 = vector.load %arg20[%c3_127, %c0_128] : memref<14x32xf32, #tpu.memory_space<vmem>>, vector<8x32xf32>
    %434 = vector.extract_strided_slice %12 {offsets = [3, 0], sizes = [1, 32], strides = [1, 1]} : vector<7x32xf32> to vector<1x32xf32>
    %435 = vector.broadcast %434 : vector<1x32xf32> to vector<8x32xf32>
    %436 = arith.mulf %433, %435 : vector<8x32xf32>
    %437 = arith.addf %432, %436 : vector<8x32xf32>
    %c4_129 = arith.constant 4 : index
    %c0_130 = arith.constant 0 : index
    %438 = vector.load %arg20[%c4_129, %c0_130] : memref<14x32xf32, #tpu.memory_space<vmem>>, vector<8x32xf32>
    %439 = vector.extract_strided_slice %12 {offsets = [4, 0], sizes = [1, 32], strides = [1, 1]} : vector<7x32xf32> to vector<1x32xf32>
    %440 = vector.broadcast %439 : vector<1x32xf32> to vector<8x32xf32>
    %441 = arith.mulf %438, %440 : vector<8x32xf32>
    %442 = arith.addf %437, %441 : vector<8x32xf32>
    %c5_131 = arith.constant 5 : index
    %c0_132 = arith.constant 0 : index
    %443 = vector.load %arg20[%c5_131, %c0_132] : memref<14x32xf32, #tpu.memory_space<vmem>>, vector<8x32xf32>
    %444 = vector.extract_strided_slice %12 {offsets = [5, 0], sizes = [1, 32], strides = [1, 1]} : vector<7x32xf32> to vector<1x32xf32>
    %445 = vector.broadcast %444 : vector<1x32xf32> to vector<8x32xf32>
    %446 = arith.mulf %443, %445 : vector<8x32xf32>
    %447 = arith.addf %442, %446 : vector<8x32xf32>
    %c6_133 = arith.constant 6 : index
    %c0_134 = arith.constant 0 : index
    %448 = vector.load %arg20[%c6_133, %c0_134] : memref<14x32xf32, #tpu.memory_space<vmem>>, vector<8x32xf32>
    %449 = vector.extract_strided_slice %12 {offsets = [6, 0], sizes = [1, 32], strides = [1, 1]} : vector<7x32xf32> to vector<1x32xf32>
    %450 = vector.broadcast %449 : vector<1x32xf32> to vector<8x32xf32>
    %451 = arith.mulf %448, %450 : vector<8x32xf32>
    %452 = arith.addf %447, %451 : vector<8x32xf32>
    %453 = vector.broadcast %14 : vector<1x32xf32> to vector<8x32xf32>
    %454 = arith.mulf %452, %453 : vector<8x32xf32>
    %455 = vector.broadcast %15 : vector<1x32xf32> to vector<8x32xf32>
    %456 = arith.addf %454, %455 : vector<8x32xf32>
    %457 = arith.negf %456 : vector<8x32xf32>
    %458 = math.exp %457 : vector<8x32xf32>
    %cst_135 = arith.constant 1.000000e+00 : f32
    %459 = vector.broadcast %cst_135 : f32 to vector<8x32xf32>
    %460 = arith.addf %459, %458 : vector<8x32xf32>
    %461 = arith.divf %459, %460 : vector<8x32xf32>
    %462 = arith.mulf %456, %461 : vector<8x32xf32>
    %463 = arith.truncf %462 : vector<8x32xf32> to vector<8x32xbf16>
    %cst_136 = arith.constant dense<0.000000e+00> : vector<8x32xf32>
    %464 = tpu.matmul %463, %16, %cst_136 {dimension_numbers = #tpu.dot_dimension_numbers<[1], [0], [0], [1], [0, 0, 1, 1], [], []>} : vector<8x32xbf16>, vector<32x32xbf16>, vector<8x32xf32> -> vector<8x32xf32>
    %465 = vector.broadcast %17 : vector<1x32xf32> to vector<8x32xf32>
    %466 = arith.addf %464, %465 : vector<8x32xf32>
    %467 = arith.addf %380, %466 : vector<8x32xf32>
    %468 = tpu.concatenate %243, %467 in 1 : vector<8x32xf32>, vector<8x32xf32> -> vector<8x64xf32>
    %c0_137 = arith.constant 0 : index
    %c0_138 = arith.constant 0 : index
    %469 = vector.load %arg19[%c0_137, %c0_138] : memref<8x64xf32, #tpu.memory_space<vmem>>, vector<8x64xf32>
    tpu.vector_store %arg19[%c0_137, %c0_138], %468 {strides = array<i32>} : memref<8x64xf32, #tpu.memory_space<vmem>>, vector<8x64xf32>,
    return
  }
  func.func @transform_0(%arg0: i32) -> (i32, i32) {
    %c0_i32 = arith.constant 0 : i32
    %c0_i32_0 = arith.constant 0 : i32
    return %c0_i32, %arg0 : i32, i32
  }
  func.func @transform_1(%arg0: i32) -> (i32, i32) {
    %c0_i32 = arith.constant 0 : i32
    %c0_i32_0 = arith.constant 0 : i32
    return %arg0, %c0_i32 : i32, i32
  }
  func.func @transform_2(%arg0: i32) -> (i32, i32) {
    %c0_i32 = arith.constant 0 : i32
    %c0_i32_0 = arith.constant 0 : i32
    %c0_i32_1 = arith.constant 0 : i32
    return %c0_i32, %c0_i32_0 : i32, i32
  }
  func.func @transform_3(%arg0: i32) -> (i32, i32) {
    %c0_i32 = arith.constant 0 : i32
    %c0_i32_0 = arith.constant 0 : i32
    %c0_i32_1 = arith.constant 0 : i32
    return %c0_i32, %c0_i32_0 : i32, i32
  }
  func.func @transform_4(%arg0: i32) -> (i32, i32) {
    %c0_i32 = arith.constant 0 : i32
    %c0_i32_0 = arith.constant 0 : i32
    %c0_i32_1 = arith.constant 0 : i32
    return %c0_i32, %c0_i32_0 : i32, i32
  }
  func.func @transform_5(%arg0: i32) -> (i32, i32) {
    %c0_i32 = arith.constant 0 : i32
    %c0_i32_0 = arith.constant 0 : i32
    %c0_i32_1 = arith.constant 0 : i32
    return %c0_i32, %c0_i32_0 : i32, i32
  }
  func.func @transform_6(%arg0: i32) -> (i32, i32) {
    %c0_i32 = arith.constant 0 : i32
    %c0_i32_0 = arith.constant 0 : i32
    %c0_i32_1 = arith.constant 0 : i32
    return %c0_i32, %c0_i32_0 : i32, i32
  }
  func.func @transform_7(%arg0: i32) -> (i32, i32) {
    %c0_i32 = arith.constant 0 : i32
    %c0_i32_0 = arith.constant 0 : i32
    %c0_i32_1 = arith.constant 0 : i32
    return %c0_i32, %c0_i32_0 : i32, i32
  }
  func.func @transform_8(%arg0: i32) -> (i32, i32) {
    %c0_i32 = arith.constant 0 : i32
    %c0_i32_0 = arith.constant 0 : i32
    %c0_i32_1 = arith.constant 0 : i32
    return %c0_i32, %c0_i32_0 : i32, i32
  }
  func.func @transform_9(%arg0: i32) -> (i32, i32) {
    %c0_i32 = arith.constant 0 : i32
    %c0_i32_0 = arith.constant 0 : i32
    %c0_i32_1 = arith.constant 0 : i32
    return %c0_i32, %c0_i32_0 : i32, i32
  }
  func.func @transform_10(%arg0: i32) -> (i32, i32) {
    %c0_i32 = arith.constant 0 : i32
    %c0_i32_0 = arith.constant 0 : i32
    %c0_i32_1 = arith.constant 0 : i32
    return %c0_i32, %c0_i32_0 : i32, i32
  }
  func.func @transform_11(%arg0: i32) -> (i32, i32) {
    %c0_i32 = arith.constant 0 : i32
    %c0_i32_0 = arith.constant 0 : i32
    %c0_i32_1 = arith.constant 0 : i32
    return %c0_i32, %c0_i32_0 : i32, i32
  }
  func.func @transform_12(%arg0: i32) -> (i32, i32) {
    %c0_i32 = arith.constant 0 : i32
    %c0_i32_0 = arith.constant 0 : i32
    %c0_i32_1 = arith.constant 0 : i32
    return %c0_i32, %c0_i32_0 : i32, i32
  }
  func.func @transform_13(%arg0: i32) -> (i32, i32) {
    %c0_i32 = arith.constant 0 : i32
    %c0_i32_0 = arith.constant 0 : i32
    %c0_i32_1 = arith.constant 0 : i32
    return %c0_i32, %c0_i32_0 : i32, i32
  }
  func.func @transform_14(%arg0: i32) -> (i32, i32) {
    %c0_i32 = arith.constant 0 : i32
    %c0_i32_0 = arith.constant 0 : i32
    %c0_i32_1 = arith.constant 0 : i32
    return %c0_i32, %c0_i32_0 : i32, i32
  }
  func.func @transform_15(%arg0: i32) -> (i32, i32) {
    %c0_i32 = arith.constant 0 : i32
    %c0_i32_0 = arith.constant 0 : i32
    %c0_i32_1 = arith.constant 0 : i32
    return %c0_i32, %c0_i32_0 : i32, i32
  }
  func.func @transform_16(%arg0: i32) -> (i32, i32) {
    %c0_i32 = arith.constant 0 : i32
    %c0_i32_0 = arith.constant 0 : i32
    %c0_i32_1 = arith.constant 0 : i32
    return %c0_i32, %c0_i32_0 : i32, i32
  }
  func.func @transform_17(%arg0: i32) -> (i32, i32) {
    %c0_i32 = arith.constant 0 : i32
    %c0_i32_0 = arith.constant 0 : i32
    %c0_i32_1 = arith.constant 0 : i32
    return %c0_i32, %c0_i32_0 : i32, i32
  }
  func.func @transform_18(%arg0: i32) -> (i32, i32) {
    %c0_i32 = arith.constant 0 : i32
    %c0_i32_0 = arith.constant 0 : i32
    return %c0_i32, %arg0 : i32, i32
  }
}

</mosaic_0001>

<llo_original>
// kernel: conformer_layer.5
$region0: #{conformer_layer.5}
  #allocation0 [shape = 'u32[]', space=smem, size = 0x4, offset = 0x4, fixed_abs, tag = 'smem constant byte address 0x4 - core index']
  #allocation1 [shape = 'u32[144,128]{1,0:T(1,128)}', space=vmem, size = 0x12000, scoped, tag = 'internal scratch']
  %s0 = inlined_call_operand.vmem [shape: f32[16,32], index: 0, kind: input, shape index: {}]
  %s1 = inlined_call_operand.vmem [shape: f32[1,32], index: 1, kind: input, shape index: {}]
  %s2 = inlined_call_operand.vmem [shape: f32[1,32], index: 2, kind: input, shape index: {}]
  %s3 = inlined_call_operand.vmem [shape: bf16[32,64], index: 3, kind: input, shape index: {}]
  %s4 = inlined_call_operand.vmem [shape: f32[1,64], index: 4, kind: input, shape index: {}]
  %s5 = inlined_call_operand.vmem [shape: bf16[64,32], index: 5, kind: input, shape index: {}]
  %s6 = inlined_call_operand.vmem [shape: f32[1,32], index: 6, kind: input, shape index: {}]
  %s7 = inlined_call_operand.vmem [shape: f32[1,32], index: 7, kind: input, shape index: {}]
  %s8 = inlined_call_operand.vmem [shape: f32[1,32], index: 8, kind: input, shape index: {}]
  %s9 = inlined_call_operand.hbm [shape: f32[16,32], index: 9, kind: output, shape index: {}]
  %s10 = sld [smem:[#allocation0]]
  $region46: #{conformer_layer.5} parent=0
    _
  %s12 = ssub.s32 1, %s10
  %s13 = scalar_select 0, %s12, %s10
  $region1: #{conformer_layer.5} parent=0
    #allocation2 [shape = 'u8[8192]{0}', space=vmem, size = 0x2000, scoped, tag = 'output window, operand 0, single buffered']
    #allocation3 [shape = 's32[1]{0}', space=sflag, size = 0x4, scoped, tag = 'scoped memory for conformer_layer.5']
    %14 = vsyncpa [#allocation3], 0
    // Predicated region
    $region2: #{conformer_layer.5} parent=1 // pred_check
      _
    $region3: #{conformer_layer.5} parent=1 // pred_check_branch
      %16 = sbr.rel (0) target = $region5
    $region4: #{conformer_layer.5} parent=1 // pred_region
      _
    $region5: #{conformer_layer.5} parent=1 // pred_fallthru
      _
    // Predicated region
    $region6: #{conformer_layer.5} parent=1 // pred_check
      _
    $region7: #{conformer_layer.5} parent=1 // pred_check_branch
      %18 = sbr.rel (0) target = $region9
    $region8: #{conformer_layer.5} parent=1 // pred_region
      _
    $region9: #{conformer_layer.5} parent=1 // pred_fallthru
      _
    // Predicated region
    $region10: #{conformer_layer.5} parent=1 // pred_check
      _
    $region11: #{conformer_layer.5} parent=1 // pred_check_branch
      %20 = sbr.rel (0) target = $region13
    $region12: #{conformer_layer.5} parent=1 // pred_region
      _
    $region13: #{conformer_layer.5} parent=1 // pred_fallthru
      _
    // Predicated region
    $region14: #{conformer_layer.5} parent=1 // pred_check
      _
    $region15: #{conformer_layer.5} parent=1 // pred_check_branch
      %22 = sbr.rel (0) target = $region17
    $region16: #{conformer_layer.5} parent=1 // pred_region
      _
    $region17: #{conformer_layer.5} parent=1 // pred_fallthru
      _
    // Predicated region
    $region18: #{conformer_layer.5} parent=1 // pred_check
      _
    $region19: #{conformer_layer.5} parent=1 // pred_check_branch
      %24 = sbr.rel (0) target = $region21
    $region20: #{conformer_layer.5} parent=1 // pred_region
      _
    $region21: #{conformer_layer.5} parent=1 // pred_fallthru
      _
    // Predicated region
    $region22: #{conformer_layer.5} parent=1 // pred_check
      _
    $region23: #{conformer_layer.5} parent=1 // pred_check_branch
      %26 = sbr.rel (0) target = $region25
    $region24: #{conformer_layer.5} parent=1 // pred_region
      _
    $region25: #{conformer_layer.5} parent=1 // pred_fallthru
      _
    // Predicated region
    $region26: #{conformer_layer.5} parent=1 // pred_check
      _
    $region27: #{conformer_layer.5} parent=1 // pred_check_branch
      %28 = sbr.rel (0) target = $region29
    $region28: #{conformer_layer.5} parent=1 // pred_region
      _
    $region29: #{conformer_layer.5} parent=1 // pred_fallthru
      _
    // Predicated region
    $region30: #{conformer_layer.5} parent=1 // pred_check
      _
    $region31: #{conformer_layer.5} parent=1 // pred_check_branch
      %30 = sbr.rel (0) target = $region33
    $region32: #{conformer_layer.5} parent=1 // pred_region
      _
    $region33: #{conformer_layer.5} parent=1 // pred_fallthru
      _
    // Predicated region
    $region34: #{conformer_layer.5} parent=1 // pred_check
      _
    $region35: #{conformer_layer.5} parent=1 // pred_check_branch
      %32 = sbr.rel (0) target = $region37
    $region36: #{conformer_layer.5} parent=1 // pred_region
      _
    $region37: #{conformer_layer.5} parent=1 // pred_fallthru
      _
    %v34 = vld [vmem:[%s0] sm:$0xff]
    %v35 = vld [vmem:[%s0 + $0x8] sm:$0xff]
    %v36 = vld [vmem:[%s1] sm:$0x1]
    %v37 = vld [vmem:[%s2] sm:$0x1]
    %v38 = vld [vmem:[%s3] sm:$0xf]
    %v39 = vld [vmem:[%s3 + $0x4] sm:$0xf]
    %v40 = vld [vmem:[%s3 + $0x8] sm:$0xf]
    %v41 = vld [vmem:[%s3 + $0xc] sm:$0xf]
    %v42 = vld [vmem:[%s4] sm:$0x1]
    %v43 = vld [vmem:[%s5] sm:$0xf]
    %v44 = vld [vmem:[%s5 + $0x4] sm:$0xf]
    %v45 = vld [vmem:[%s5 + $0x8] sm:$0xf]
    %v46 = vld [vmem:[%s5 + $0xc] sm:$0xf]
    %v47 = vld [vmem:[%s5 + $0x10] sm:$0xf]
    %v48 = vld [vmem:[%s5 + $0x14] sm:$0xf]
    %v49 = vld [vmem:[%s5 + $0x18] sm:$0xf]
    %v50 = vld [vmem:[%s5 + $0x1c] sm:$0xf]
    %v51 = vld [vmem:[%s6] sm:$0x1]
    %vm52 = vcmask 261120
    %v53 = vsel %vm52, %v34, 0.0
    %54 = vadd.xlane.f32.xlu0 %v53
    %v55 = vpop.xlane.xlu0 %54
    %v56 = vsel %vm52, %v35, 0.0
    %57 = vadd.xlane.f32.xlu0 %v56
    %v58 = vpop.xlane.xlu0 %57
    %v59 = vrcp.pop 32.0
    %v60 = vmul.f32 %v55, %v59
    %v61 = vmul.f32 %v58, %v59
    %v62 = vsub.f32 %v34, %v60
    %v63 = vsub.f32 %v35, %v61
    %v64 = vmul.f32 %v62, %v62
    %v65 = vmul.f32 %v63, %v63
    %v66 = vsel %vm52, %v64, 0.0
    %67 = vadd.xlane.f32.xlu0 %v66
    %v68 = vpop.xlane.xlu0 %67
    %v69 = vsel %vm52, %v65, 0.0
    %70 = vadd.xlane.f32.xlu0 %v69
    %v71 = vpop.xlane.xlu0 %70
    %v72 = vmul.f32 %v68, %v59
    %v73 = vmul.f32 %v71, %v59
    %v74 = vadd.f32 %v72, 1e-05
    %v75 = vadd.f32 %v73, 1e-05
    %v76 = vrsqrt.pop %v74
    %v77 = vrsqrt.pop %v75
    %v78 = vmul.f32 %v62, %v76
    %v79 = vmul.f32 %v63, %v77
    %v81 = vlaneseq
    %v82 = vshrl.u32 %v81, 7
    %v83 = vsub.s32 0, %v82
    %v84 = vrot.slane %v36, %v83
    %v86 = vmul.f32 %v78, %v84
    %v87 = vmul.f32 %v79, %v84
    %v89 = vlaneseq
    %v90 = vshrl.u32 %v89, 7
    %v91 = vsub.s32 0, %v90
    %v92 = vrot.slane %v37, %v91
    %v94 = vadd.f32 %v86, %v92
    %v95 = vadd.f32 %v87, %v92
    %v96 = vpack.c.bf16 %v95, %v94
    %v98 = vlaneseq
    %v99 = vshrl.u32 %v98, 7
    %v100 = vsub.s32 0, %v99
    %v101 = vrot.slane %v42, %v100
    %v107 = vunpack.c.l.b16 %v38
    %v108 = vunpack.c.l.b16 %v39
    %v109 = vunpack.c.l.b16 %v40
    %v110 = vunpack.c.l.b16 %v41
    %v111 = vpack.c.b16 %v108, %v107
    %v112 = vpack.c.b16 %v110, %v109
    %v116 = vsel %vm52, %v96, 0
    %118 = vmatprep.subr.bf16.mxu0 0
    %119 = vmatpush1.bf16.msra.mxu0 %v111
    %120 = vmatprep.subr.bf16.mxu0 0
    %121 = vmatpush1.bf16.msra.mxu0 %v112
    %122 = vmatprep.subr.bf16.mxu0 0
    %123 = vmatpush1.bf16.msra.mxu0 0
    %124 = vmatprep.subr.bf16.mxu0 0
    %125 = vmatpush1.bf16.msra.mxu0 0
    %126 = vmatprep.subr.bf16.mxu0 0
    %127 = vmatpush1.bf16.msra.mxu0 0
    %128 = vmatprep.subr.bf16.mxu0 0
    %129 = vmatpush1.bf16.msra.mxu0 0
    %130 = vmatprep.subr.bf16.mxu0 0
    %131 = vmatpush1.bf16.msra.mxu0 0
    %132 = vmatprep.subr.bf16.mxu0 0
    %133 = vmatpush1.bf16.msra.mxu0 0
    %134 = vmatprep.subr.bf16.mxu0 0
    %135 = vmatpush1.bf16.msra.mxu0 0
    %136 = vmatprep.subr.bf16.mxu0 0
    %137 = vmatpush1.bf16.msra.mxu0 0
    %138 = vmatprep.subr.bf16.mxu0 0
    %139 = vmatpush1.bf16.msra.mxu0 0
    %140 = vmatprep.subr.bf16.mxu0 0
    %141 = vmatpush1.bf16.msra.mxu0 0
    %142 = vmatprep.subr.bf16.mxu0 0
    %143 = vmatpush1.bf16.msra.mxu0 0
    %144 = vmatprep.subr.bf16.mxu0 0
    %145 = vmatpush1.bf16.msra.mxu0 0
    %146 = vmatprep.subr.bf16.mxu0 0
    %147 = vmatpush1.bf16.msra.mxu0 0
    %148 = vmatprep.subr.bf16.mxu0 0
    %149 = vmatpush1.bf16.msra.mxu0 0
    %150 = vmatprep.mubr.bf16.mxu0 0
    %151 = vmatmul.mubr.bf16.gmra.mrb[0].mxu0 %v116
    %v152 = vpop.f32.mrb[0].mxu0
    %v153 = vadd.f32 %v101, %v152
    %v154 = vpop.f32.mrb[0].mxu0
    %v155 = vpop.f32.mrb[0].mxu0
    %v156 = vadd.f32 %v101, %v155
    %v157 = vpop.f32.mrb[0].mxu0
    %158 = vdwg.mxu0
    %v159 = vxor.u32 %v153, 2147483648
    %v160 = vxor.u32 %v156, 2147483648
    %v161 = vmul.f32 %v159, 1.442695
    %v162 = vpow.pop %v161
    %v163 = vmul.f32 %v160, 1.442695
    %v164 = vpow.pop %v163
    %v165 = vadd.f32 %v162, 1.0
    %v166 = vadd.f32 %v164, 1.0
    %v167 = vrcp.pop %v165
    %v168 = vmul.f32 1.0, %v167
    %v169 = vrcp.pop %v166
    %v170 = vmul.f32 1.0, %v169
    %v171 = vmul.f32 %v153, %v168
    %v172 = vmul.f32 %v156, %v170
    %v173 = vpack.c.bf16 %v172, %v171
    %v175 = vlaneseq
    %v176 = vshrl.u32 %v175, 7
    %v177 = vsub.s32 0, %v176
    %v178 = vrot.slane %v51, %v177
    %v188 = vunpack.c.l.b16 %v43
    %v189 = vunpack.c.l.b16 %v44
    %v190 = vunpack.c.l.b16 %v45
    %v191 = vunpack.c.l.b16 %v46
    %v192 = vunpack.c.l.b16 %v47
    %v193 = vunpack.c.l.b16 %v48
    %v194 = vunpack.c.l.b16 %v49
    %v195 = vunpack.c.l.b16 %v50
    %v196 = vpack.c.b16 %v189, %v188
    %v197 = vpack.c.b16 %v191, %v190
    %v198 = vpack.c.b16 %v193, %v192
    %v199 = vpack.c.b16 %v195, %v194
    %vm204 = vcmask 523264
    %v206 = vsel %vm204, %v173, 0
    %208 = vmatprep.subr.bf16.mxu0 0
    %209 = vmatpush1.bf16.msra.mxu0 %v196
    %210 = vmatprep.subr.bf16.mxu0 0
    %211 = vmatpush1.bf16.msra.mxu0 %v197
    %212 = vmatprep.subr.bf16.mxu0 0
    %213 = vmatpush1.bf16.msra.mxu0 %v198
    %214 = vmatprep.subr.bf16.mxu0 0
    %215 = vmatpush1.bf16.msra.mxu0 %v199
    %216 = vmatprep.subr.bf16.mxu0 0
    %217 = vmatpush1.bf16.msra.mxu0 0
    %218 = vmatprep.subr.bf16.mxu0 0
    %219 = vmatpush1.bf16.msra.mxu0 0
    %220 = vmatprep.subr.bf16.mxu0 0
    %221 = vmatpush1.bf16.msra.mxu0 0
    %222 = vmatprep.subr.bf16.mxu0 0
    %223 = vmatpush1.bf16.msra.mxu0 0
    %224 = vmatprep.subr.bf16.mxu0 0
    %225 = vmatpush1.bf16.msra.mxu0 0
    %226 = vmatprep.subr.bf16.mxu0 0
    %227 = vmatpush1.bf16.msra.mxu0 0
    %228 = vmatprep.subr.bf16.mxu0 0
    %229 = vmatpush1.bf16.msra.mxu0 0
    %230 = vmatprep.subr.bf16.mxu0 0
    %231 = vmatpush1.bf16.msra.mxu0 0
    %232 = vmatprep.subr.bf16.mxu0 0
    %233 = vmatpush1.bf16.msra.mxu0 0
    %234 = vmatprep.subr.bf16.mxu0 0
    %235 = vmatpush1.bf16.msra.mxu0 0
    %236 = vmatprep.subr.bf16.mxu0 0
    %237 = vmatpush1.bf16.msra.mxu0 0
    %238 = vmatprep.subr.bf16.mxu0 0
    %239 = vmatpush1.bf16.msra.mxu0 0
    %240 = vmatprep.mubr.bf16.mxu0 0
    %241 = vmatmul.mubr.bf16.gmra.mrb[0].mxu0 %v206
    %v242 = vpop.f32.mrb[0].mxu0
    %v243 = vadd.f32 %v178, %v242
    %v244 = vpop.f32.mrb[0].mxu0
    %v245 = vpop.f32.mrb[0].mxu0
    %v246 = vadd.f32 %v178, %v245
    %v247 = vpop.f32.mrb[0].mxu0
    %248 = vdwg.mxu0
    %v249 = vmul.f32 %v243, 0.5
    %v250 = vmul.f32 %v246, 0.5
    %v251 = vadd.f32 %v249, %v34
    %v252 = vadd.f32 %v250, %v35
    %v253 = vld [vmem:[%s7] sm:$0x1]
    %v254 = vld [vmem:[%s8] sm:$0x1]
    %v255 = vsel %vm52, %v251, 0.0
    %256 = vadd.xlane.f32.xlu0 %v255
    %v257 = vpop.xlane.xlu0 %256
    %v258 = vsel %vm52, %v252, 0.0
    %259 = vadd.xlane.f32.xlu0 %v258
    %v260 = vpop.xlane.xlu0 %259
    %v261 = vmul.f32 %v257, %v59
    %v262 = vmul.f32 %v260, %v59
    %v263 = vsub.f32 %v251, %v261
    %v264 = vsub.f32 %v252, %v262
    %v265 = vmul.f32 %v263, %v263
    %v266 = vmul.f32 %v264, %v264
    %v267 = vsel %vm52, %v265, 0.0
    %268 = vadd.xlane.f32.xlu0 %v267
    %v269 = vpop.xlane.xlu0 %268
    %v270 = vsel %vm52, %v266, 0.0
    %271 = vadd.xlane.f32.xlu0 %v270
    %v272 = vpop.xlane.xlu0 %271
    %v273 = vmul.f32 %v269, %v59
    %v274 = vmul.f32 %v272, %v59
    %v275 = vadd.f32 %v273, 1e-05
    %v276 = vadd.f32 %v274, 1e-05
    %v277 = vrsqrt.pop %v275
    %v278 = vrsqrt.pop %v276
    %v279 = vmul.f32 %v263, %v277
    %v280 = vmul.f32 %v264, %v278
    %v282 = vlaneseq
    %v283 = vshrl.u32 %v282, 7
    %v284 = vsub.s32 0, %v283
    %v285 = vrot.slane %v253, %v284
    %v287 = vmul.f32 %v279, %v285
    %v288 = vmul.f32 %v280, %v285
    %v290 = vlaneseq
    %v291 = vshrl.u32 %v290, 7
    %v292 = vsub.s32 0, %v291
    %v293 = vrot.slane %v254, %v292
    %v295 = vadd.f32 %v287, %v293
    %v296 = vadd.f32 %v288, %v293
    %297 = vst.msk [vmem:[#allocation2] sm:$0xff] %vm52, %v295
    %298 = vst.msk [vmem:[#allocation2 + $0x8] sm:$0xff] %vm52, %v296
    // Predicated region
    $region38: #{conformer_layer.5} parent=1 // pred_check
      _
    $region39: #{conformer_layer.5} parent=1 // pred_check_branch
      %300 = sbr.rel (0) target = $region41
    $region40: #{conformer_layer.5} parent=1 // pred_region
      %s302 = ssub.s32 256, 256
      %303 = vsyncadd [#allocation3], %s302
      %s304 = sshll.u32 [#allocation2], 4
      %s305 = int_to_ptr.vmem [resolvable:$true] %s304
      %310 = dma.vmem_to_hbm [thread:$0]  %s305, 256, %s9, [#allocation3], 128, 128, 8
    $region41: #{conformer_layer.5} parent=1 // pred_fallthru
      _
    // Predicated region
    $region42: #{conformer_layer.5} parent=1 // pred_check
      _
    $region43: #{conformer_layer.5} parent=1 // pred_check_branch
      %312 = sbr.rel (0) target = $region45
    $region44: #{conformer_layer.5} parent=1 // pred_region
      %313 = dma.done [#allocation3], 256
    $region45: #{conformer_layer.5} parent=1 // pred_fallthru
      _
    %314 = vsyncpa [#allocation3], 1

// kernel: conformer_layer.3
$region0: #{conformer_layer.3}
  #allocation0 [shape = 'u32[]', space=smem, size = 0x4, offset = 0x4, fixed_abs, tag = 'smem constant byte address 0x4 - core index']
  #allocation1 [shape = 'u32[144,128]{1,0:T(1,128)}', space=vmem, size = 0x12000, scoped, tag = 'internal scratch']
  %s0 = inlined_call_operand.vmem [shape: f32[16,32], index: 0, kind: input, shape index: {}]
  %s1 = inlined_call_operand.vmem [shape: f32[1,32], index: 1, kind: input, shape index: {}]
  %s2 = inlined_call_operand.vmem [shape: f32[1,32], index: 2, kind: input, shape index: {}]
  %s3 = inlined_call_operand.vmem [shape: bf16[32,64], index: 3, kind: input, shape index: {}]
  %s4 = inlined_call_operand.vmem [shape: f32[1,64], index: 4, kind: input, shape index: {}]
  %s5 = inlined_call_operand.vmem [shape: bf16[64,32], index: 5, kind: input, shape index: {}]
  %s6 = inlined_call_operand.vmem [shape: f32[1,32], index: 6, kind: input, shape index: {}]
  %s7 = inlined_call_operand.vmem [shape: f32[16,32], index: 7, kind: output, shape index: {}]
  %s8 = sld [smem:[#allocation0]]
  $region38: #{conformer_layer.3} parent=0
    _
  %s10 = ssub.s32 1, %s8
  %s11 = scalar_select 0, %s10, %s8
  // Predicated region
  $region2: #{conformer_layer.3} parent=0 // pred_check
    _
  $region3: #{conformer_layer.3} parent=0 // pred_check_branch
    %13 = sbr.rel (0) target = $region5
  $region4: #{conformer_layer.3} parent=0 // pred_region
    _
  $region5: #{conformer_layer.3} parent=0 // pred_fallthru
    _
  // Predicated region
  $region6: #{conformer_layer.3} parent=0 // pred_check
    _
  $region7: #{conformer_layer.3} parent=0 // pred_check_branch
    %15 = sbr.rel (0) target = $region9
  $region8: #{conformer_layer.3} parent=0 // pred_region
    _
  $region9: #{conformer_layer.3} parent=0 // pred_fallthru
    _
  // Predicated region
  $region10: #{conformer_layer.3} parent=0 // pred_check
    _
  $region11: #{conformer_layer.3} parent=0 // pred_check_branch
    %17 = sbr.rel (0) target = $region13
  $region12: #{conformer_layer.3} parent=0 // pred_region
    _
  $region13: #{conformer_layer.3} parent=0 // pred_fallthru
    _
  // Predicated region
  $region14: #{conformer_layer.3} parent=0 // pred_check
    _
  $region15: #{conformer_layer.3} parent=0 // pred_check_branch
    %19 = sbr.rel (0) target = $region17
  $region16: #{conformer_layer.3} parent=0 // pred_region
    _
  $region17: #{conformer_layer.3} parent=0 // pred_fallthru
    _
  // Predicated region
  $region18: #{conformer_layer.3} parent=0 // pred_check
    _
  $region19: #{conformer_layer.3} parent=0 // pred_check_branch
    %21 = sbr.rel (0) target = $region21
  $region20: #{conformer_layer.3} parent=0 // pred_region
    _
  $region21: #{conformer_layer.3} parent=0 // pred_fallthru
    _
  // Predicated region
  $region22: #{conformer_layer.3} parent=0 // pred_check
    _
  $region23: #{conformer_layer.3} parent=0 // pred_check_branch
    %23 = sbr.rel (0) target = $region25
  $region24: #{conformer_layer.3} parent=0 // pred_region
    _
  $region25: #{conformer_layer.3} parent=0 // pred_fallthru
    _
  // Predicated region
  $region26: #{conformer_layer.3} parent=0 // pred_check
    _
  $region27: #{conformer_layer.3} parent=0 // pred_check_branch
    %25 = sbr.rel (0) target = $region29
  $region28: #{conformer_layer.3} parent=0 // pred_region
    _
  $region29: #{conformer_layer.3} parent=0 // pred_fallthru
    _
  %v27 = vld [vmem:[%s0] sm:$0xff]
  %v28 = vld [vmem:[%s0 + $0x8] sm:$0xff]
  %v29 = vld [vmem:[%s1] sm:$0x1]
  %v30 = vld [vmem:[%s2] sm:$0x1]
  %v31 = vld [vmem:[%s3] sm:$0xf]
  %v32 = vld [vmem:[%s3 + $0x4] sm:$0xf]
  %v33 = vld [vmem:[%s3 + $0x8] sm:$0xf]
  %v34 = vld [vmem:[%s3 + $0xc] sm:$0xf]
  %v35 = vld [vmem:[%s4] sm:$0x1]
  %v36 = vld [vmem:[%s5] sm:$0xf]
  %v37 = vld [vmem:[%s5 + $0x4] sm:$0xf]
  %v38 = vld [vmem:[%s5 + $0x8] sm:$0xf]
  %v39 = vld [vmem:[%s5 + $0xc] sm:$0xf]
  %v40 = vld [vmem:[%s5 + $0x10] sm:$0xf]
  %v41 = vld [vmem:[%s5 + $0x14] sm:$0xf]
  %v42 = vld [vmem:[%s5 + $0x18] sm:$0xf]
  %v43 = vld [vmem:[%s5 + $0x1c] sm:$0xf]
  %v44 = vld [vmem:[%s6] sm:$0x1]
  %vm45 = vcmask 261120
  %v46 = vsel %vm45, %v27, 0.0
  %47 = vadd.xlane.f32.xlu0 %v46
  %v48 = vpop.xlane.xlu0 %47
  %v49 = vsel %vm45, %v28, 0.0
  %50 = vadd.xlane.f32.xlu0 %v49
  %v51 = vpop.xlane.xlu0 %50
  %v52 = vrcp.pop 32.0
  %v53 = vmul.f32 %v48, %v52
  %v54 = vmul.f32 %v51, %v52
  %v55 = vsub.f32 %v27, %v53
  %v56 = vsub.f32 %v28, %v54
  %v57 = vmul.f32 %v55, %v55
  %v58 = vmul.f32 %v56, %v56
  %v59 = vsel %vm45, %v57, 0.0
  %60 = vadd.xlane.f32.xlu0 %v59
  %v61 = vpop.xlane.xlu0 %60
  %v62 = vsel %vm45, %v58, 0.0
  %63 = vadd.xlane.f32.xlu0 %v62
  %v64 = vpop.xlane.xlu0 %63
  %v65 = vmul.f32 %v61, %v52
  %v66 = vmul.f32 %v64, %v52
  %v67 = vadd.f32 %v65, 1e-05
  %v68 = vadd.f32 %v66, 1e-05
  %v69 = vrsqrt.pop %v67
  %v70 = vrsqrt.pop %v68
  %v71 = vmul.f32 %v55, %v69
  %v72 = vmul.f32 %v56, %v70
  %v74 = vlaneseq
  %v75 = vshrl.u32 %v74, 7
  %v76 = vsub.s32 0, %v75
  %v77 = vrot.slane %v29, %v76
  %v79 = vmul.f32 %v71, %v77
  %v80 = vmul.f32 %v72, %v77
  %v82 = vlaneseq
  %v83 = vshrl.u32 %v82, 7
  %v84 = vsub.s32 0, %v83
  %v85 = vrot.slane %v30, %v84
  %v87 = vadd.f32 %v79, %v85
  %v88 = vadd.f32 %v80, %v85
  %v89 = vpack.c.bf16 %v88, %v87
  %v91 = vlaneseq
  %v92 = vshrl.u32 %v91, 7
  %v93 = vsub.s32 0, %v92
  %v94 = vrot.slane %v35, %v93
  %v100 = vunpack.c.l.b16 %v31
  %v101 = vunpack.c.l.b16 %v32
  %v102 = vunpack.c.l.b16 %v33
  %v103 = vunpack.c.l.b16 %v34
  %v104 = vpack.c.b16 %v101, %v100
  %v105 = vpack.c.b16 %v103, %v102
  %v109 = vsel %vm45, %v89, 0
  %111 = vmatprep.subr.bf16.mxu0 0
  %112 = vmatpush1.bf16.msra.mxu0 %v104
  %113 = vmatprep.subr.bf16.mxu0 0
  %114 = vmatpush1.bf16.msra.mxu0 %v105
  %115 = vmatprep.subr.bf16.mxu0 0
  %116 = vmatpush1.bf16.msra.mxu0 0
  %117 = vmatprep.subr.bf16.mxu0 0
  %118 = vmatpush1.bf16.msra.mxu0 0
  %119 = vmatprep.subr.bf16.mxu0 0
  %120 = vmatpush1.bf16.msra.mxu0 0
  %121 = vmatprep.subr.bf16.mxu0 0
  %122 = vmatpush1.bf16.msra.mxu0 0
  %123 = vmatprep.subr.bf16.mxu0 0
  %124 = vmatpush1.bf16.msra.mxu0 0
  %125 = vmatprep.subr.bf16.mxu0 0
  %126 = vmatpush1.bf16.msra.mxu0 0
  %127 = vmatprep.subr.bf16.mxu0 0
  %128 = vmatpush1.bf16.msra.mxu0 0
  %129 = vmatprep.subr.bf16.mxu0 0
  %130 = vmatpush1.bf16.msra.mxu0 0
  %131 = vmatprep.subr.bf16.mxu0 0
  %132 = vmatpush1.bf16.msra.mxu0 0
  %133 = vmatprep.subr.bf16.mxu0 0
  %134 = vmatpush1.bf16.msra.mxu0 0
  %135 = vmatprep.subr.bf16.mxu0 0
  %136 = vmatpush1.bf16.msra.mxu0 0
  %137 = vmatprep.subr.bf16.mxu0 0
  %138 = vmatpush1.bf16.msra.mxu0 0
  %139 = vmatprep.subr.bf16.mxu0 0
  %140 = vmatpush1.bf16.msra.mxu0 0
  %141 = vmatprep.subr.bf16.mxu0 0
  %142 = vmatpush1.bf16.msra.mxu0 0
  %143 = vmatprep.mubr.bf16.mxu0 0
  %144 = vmatmul.mubr.bf16.gmra.mrb[0].mxu0 %v109
  %v145 = vpop.f32.mrb[0].mxu0
  %v146 = vadd.f32 %v94, %v145
  %v147 = vpop.f32.mrb[0].mxu0
  %v148 = vpop.f32.mrb[0].mxu0
  %v149 = vadd.f32 %v94, %v148
  %v150 = vpop.f32.mrb[0].mxu0
  %151 = vdwg.mxu0
  %v152 = vxor.u32 %v146, 2147483648
  %v153 = vxor.u32 %v149, 2147483648
  %v154 = vmul.f32 %v152, 1.442695
  %v155 = vpow.pop %v154
  %v156 = vmul.f32 %v153, 1.442695
  %v157 = vpow.pop %v156
  %v158 = vadd.f32 %v155, 1.0
  %v159 = vadd.f32 %v157, 1.0
  %v160 = vrcp.pop %v158
  %v161 = vmul.f32 1.0, %v160
  %v162 = vrcp.pop %v159
  %v163 = vmul.f32 1.0, %v162
  %v164 = vmul.f32 %v146, %v161
  %v165 = vmul.f32 %v149, %v163
  %v166 = vpack.c.bf16 %v165, %v164
  %v168 = vlaneseq
  %v169 = vshrl.u32 %v168, 7
  %v170 = vsub.s32 0, %v169
  %v171 = vrot.slane %v44, %v170
  %v181 = vunpack.c.l.b16 %v36
  %v182 = vunpack.c.l.b16 %v37
  %v183 = vunpack.c.l.b16 %v38
  %v184 = vunpack.c.l.b16 %v39
  %v185 = vunpack.c.l.b16 %v40
  %v186 = vunpack.c.l.b16 %v41
  %v187 = vunpack.c.l.b16 %v42
  %v188 = vunpack.c.l.b16 %v43
  %v189 = vpack.c.b16 %v182, %v181
  %v190 = vpack.c.b16 %v184, %v183
  %v191 = vpack.c.b16 %v186, %v185
  %v192 = vpack.c.b16 %v188, %v187
  %vm197 = vcmask 523264
  %v199 = vsel %vm197, %v166, 0
  %201 = vmatprep.subr.bf16.mxu0 0
  %202 = vmatpush1.bf16.msra.mxu0 %v189
  %203 = vmatprep.subr.bf16.mxu0 0
  %204 = vmatpush1.bf16.msra.mxu0 %v190
  %205 = vmatprep.subr.bf16.mxu0 0
  %206 = vmatpush1.bf16.msra.mxu0 %v191
  %207 = vmatprep.subr.bf16.mxu0 0
  %208 = vmatpush1.bf16.msra.mxu0 %v192
  %209 = vmatprep.subr.bf16.mxu0 0
  %210 = vmatpush1.bf16.msra.mxu0 0
  %211 = vmatprep.subr.bf16.mxu0 0
  %212 = vmatpush1.bf16.msra.mxu0 0
  %213 = vmatprep.subr.bf16.mxu0 0
  %214 = vmatpush1.bf16.msra.mxu0 0
  %215 = vmatprep.subr.bf16.mxu0 0
  %216 = vmatpush1.bf16.msra.mxu0 0
  %217 = vmatprep.subr.bf16.mxu0 0
  %218 = vmatpush1.bf16.msra.mxu0 0
  %219 = vmatprep.subr.bf16.mxu0 0
  %220 = vmatpush1.bf16.msra.mxu0 0
  %221 = vmatprep.subr.bf16.mxu0 0
  %222 = vmatpush1.bf16.msra.mxu0 0
  %223 = vmatprep.subr.bf16.mxu0 0
  %224 = vmatpush1.bf16.msra.mxu0 0
  %225 = vmatprep.subr.bf16.mxu0 0
  %226 = vmatpush1.bf16.msra.mxu0 0
  %227 = vmatprep.subr.bf16.mxu0 0
  %228 = vmatpush1.bf16.msra.mxu0 0
  %229 = vmatprep.subr.bf16.mxu0 0
  %230 = vmatpush1.bf16.msra.mxu0 0
  %231 = vmatprep.subr.bf16.mxu0 0
  %232 = vmatpush1.bf16.msra.mxu0 0
  %233 = vmatprep.mubr.bf16.mxu0 0
  %234 = vmatmul.mubr.bf16.gmra.mrb[0].mxu0 %v199
  %v235 = vpop.f32.mrb[0].mxu0
  %v236 = vadd.f32 %v171, %v235
  %v237 = vpop.f32.mrb[0].mxu0
  %v238 = vpop.f32.mrb[0].mxu0
  %v239 = vadd.f32 %v171, %v238
  %v240 = vpop.f32.mrb[0].mxu0
  %241 = vdwg.mxu0
  %v242 = vmul.f32 %v236, 0.5
  %v243 = vmul.f32 %v239, 0.5
  %v244 = vadd.f32 %v242, %v27
  %v245 = vadd.f32 %v243, %v28
  %246 = vst.msk [vmem:[%s7] sm:$0xff] %vm45, %v244
  %247 = vst.msk [vmem:[%s7 + $0x8] sm:$0xff] %vm45, %v245
  // Predicated region
  $region30: #{conformer_layer.3} parent=0 // pred_check
    _
  $region31: #{conformer_layer.3} parent=0 // pred_check_branch
    %249 = sbr.rel (0) target = $region33
  $region32: #{conformer_layer.3} parent=0 // pred_region
    _
  $region33: #{conformer_layer.3} parent=0 // pred_fallthru
    _
  // Predicated region
  $region34: #{conformer_layer.3} parent=0 // pred_check
    _
  $region35: #{conformer_layer.3} parent=0 // pred_check_branch
    %251 = sbr.rel (0) target = $region37
  $region36: #{conformer_layer.3} parent=0 // pred_region
    _
  $region37: #{conformer_layer.3} parent=0 // pred_fallthru
    _

// kernel: conformer_layer.4
$region0: #{conformer_layer.4}
  #allocation0 [shape = 'u32[]', space=smem, size = 0x4, offset = 0x4, fixed_abs, tag = 'smem constant byte address 0x4 - core index']
  #allocation1 [shape = 'u32[144,128]{1,0:T(1,128)}', space=vmem, size = 0x12000, scoped, tag = 'internal scratch']
  #allocation2 [shape = 'f32[14,32]{1,0:T(8,128)}', space=vmem, size = 0x2000, scoped, tag = 'scratch operand']
  %s0 = inlined_call_operand.vmem [shape: f32[8,64], index: 0, kind: input, shape index: {}]
  %s1 = inlined_call_operand.vmem [shape: f32[2,8], index: 1, kind: input, shape index: {}]
  %s2 = inlined_call_operand.vmem [shape: f32[1,32], index: 2, kind: input, shape index: {}]
  %s3 = inlined_call_operand.vmem [shape: f32[1,32], index: 3, kind: input, shape index: {}]
  %s4 = inlined_call_operand.vmem [shape: bf16[32,96], index: 4, kind: input, shape index: {}]
  %s5 = inlined_call_operand.vmem [shape: f32[1,96], index: 5, kind: input, shape index: {}]
  %s6 = inlined_call_operand.vmem [shape: bf16[32,32], index: 6, kind: input, shape index: {}]
  %s7 = inlined_call_operand.vmem [shape: f32[1,32], index: 7, kind: input, shape index: {}]
  %s8 = inlined_call_operand.vmem [shape: f32[1,32], index: 8, kind: input, shape index: {}]
  %s9 = inlined_call_operand.vmem [shape: f32[1,32], index: 9, kind: input, shape index: {}]
  %s10 = inlined_call_operand.vmem [shape: bf16[32,64], index: 10, kind: input, shape index: {}]
  %s11 = inlined_call_operand.vmem [shape: f32[1,64], index: 11, kind: input, shape index: {}]
  %s12 = inlined_call_operand.vmem [shape: f32[7,32], index: 12, kind: input, shape index: {}]
  %s13 = inlined_call_operand.vmem [shape: f32[1,32], index: 13, kind: input, shape index: {}]
  %s14 = inlined_call_operand.vmem [shape: f32[1,32], index: 14, kind: input, shape index: {}]
  %s15 = inlined_call_operand.vmem [shape: f32[1,32], index: 15, kind: input, shape index: {}]
  %s16 = inlined_call_operand.vmem [shape: bf16[32,32], index: 16, kind: input, shape index: {}]
  %s17 = inlined_call_operand.vmem [shape: f32[1,32], index: 17, kind: input, shape index: {}]
  %s18 = inlined_call_operand.vmem [shape: f32[8,64], index: 18, kind: output, shape index: {}]
  %s19 = sld [smem:[#allocation0]]
  $region82: #{conformer_layer.4} parent=0
    _
  %s21 = ssub.s32 1, %s19
  %s22 = scalar_select 0, %s21, %s19
  // Predicated region
  $region2: #{conformer_layer.4} parent=0 // pred_check
    _
  $region3: #{conformer_layer.4} parent=0 // pred_check_branch
    %24 = sbr.rel (0) target = $region5
  $region4: #{conformer_layer.4} parent=0 // pred_region
    _
  $region5: #{conformer_layer.4} parent=0 // pred_fallthru
    _
  // Predicated region
  $region6: #{conformer_layer.4} parent=0 // pred_check
    _
  $region7: #{conformer_layer.4} parent=0 // pred_check_branch
    %26 = sbr.rel (0) target = $region9
  $region8: #{conformer_layer.4} parent=0 // pred_region
    _
  $region9: #{conformer_layer.4} parent=0 // pred_fallthru
    _
  // Predicated region
  $region10: #{conformer_layer.4} parent=0 // pred_check
    _
  $region11: #{conformer_layer.4} parent=0 // pred_check_branch
    %28 = sbr.rel (0) target = $region13
  $region12: #{conformer_layer.4} parent=0 // pred_region
    _
  $region13: #{conformer_layer.4} parent=0 // pred_fallthru
    _
  // Predicated region
  $region14: #{conformer_layer.4} parent=0 // pred_check
    _
  $region15: #{conformer_layer.4} parent=0 // pred_check_branch
    %30 = sbr.rel (0) target = $region17
  $region16: #{conformer_layer.4} parent=0 // pred_region
    _
  $region17: #{conformer_layer.4} parent=0 // pred_fallthru
    _
  // Predicated region
  $region18: #{conformer_layer.4} parent=0 // pred_check
    _
  $region19: #{conformer_layer.4} parent=0 // pred_check_branch
    %32 = sbr.rel (0) target = $region21
  $region20: #{conformer_layer.4} parent=0 // pred_region
    _
  $region21: #{conformer_layer.4} parent=0 // pred_fallthru
    _
  // Predicated region
  $region22: #{conformer_layer.4} parent=0 // pred_check
    _
  $region23: #{conformer_layer.4} parent=0 // pred_check_branch
    %34 = sbr.rel (0) target = $region25
  $region24: #{conformer_layer.4} parent=0 // pred_region
    _
  $region25: #{conformer_layer.4} parent=0 // pred_fallthru
    _
  // Predicated region
  $region26: #{conformer_layer.4} parent=0 // pred_check
    _
  $region27: #{conformer_layer.4} parent=0 // pred_check_branch
    %36 = sbr.rel (0) target = $region29
  $region28: #{conformer_layer.4} parent=0 // pred_region
    _
  $region29: #{conformer_layer.4} parent=0 // pred_fallthru
    _
  // Predicated region
  $region30: #{conformer_layer.4} parent=0 // pred_check
    _
  $region31: #{conformer_layer.4} parent=0 // pred_check_branch
    %38 = sbr.rel (0) target = $region33
  $region32: #{conformer_layer.4} parent=0 // pred_region
    _
  $region33: #{conformer_layer.4} parent=0 // pred_fallthru
    _
  // Predicated region
  $region34: #{conformer_layer.4} parent=0 // pred_check
    _
  $region35: #{conformer_layer.4} parent=0 // pred_check_branch
    %40 = sbr.rel (0) target = $region37
  $region36: #{conformer_layer.4} parent=0 // pred_region
    _
  $region37: #{conformer_layer.4} parent=0 // pred_fallthru
    _
  // Predicated region
  $region38: #{conformer_layer.4} parent=0 // pred_check
    _
  $region39: #{conformer_layer.4} parent=0 // pred_check_branch
    %42 = sbr.rel (0) target = $region41
  $region40: #{conformer_layer.4} parent=0 // pred_region
    _
  $region41: #{conformer_layer.4} parent=0 // pred_fallthru
    _
  // Predicated region
  $region42: #{conformer_layer.4} parent=0 // pred_check
    _
  $region43: #{conformer_layer.4} parent=0 // pred_check_branch
    %44 = sbr.rel (0) target = $region45
  $region44: #{conformer_layer.4} parent=0 // pred_region
    _
  $region45: #{conformer_layer.4} parent=0 // pred_fallthru
    _
  // Predicated region
  $region46: #{conformer_layer.4} parent=0 // pred_check
    _
  $region47: #{conformer_layer.4} parent=0 // pred_check_branch
    %46 = sbr.rel (0) target = $region49
  $region48: #{conformer_layer.4} parent=0 // pred_region
    _
  $region49: #{conformer_layer.4} parent=0 // pred_fallthru
    _
  // Predicated region
  $region50: #{conformer_layer.4} parent=0 // pred_check
    _
  $region51: #{conformer_layer.4} parent=0 // pred_check_branch
    %48 = sbr.rel (0) target = $region53
  $region52: #{conformer_layer.4} parent=0 // pred_region
    _
  $region53: #{conformer_layer.4} parent=0 // pred_fallthru
    _
  // Predicated region
  $region54: #{conformer_layer.4} parent=0 // pred_check
    _
  $region55: #{conformer_layer.4} parent=0 // pred_check_branch
    %50 = sbr.rel (0) target = $region57
  $region56: #{conformer_layer.4} parent=0 // pred_region
    _
  $region57: #{conformer_layer.4} parent=0 // pred_fallthru
    _
  // Predicated region
  $region58: #{conformer_layer.4} parent=0 // pred_check
    _
  $region59: #{conformer_layer.4} parent=0 // pred_check_branch
    %52 = sbr.rel (0) target = $region61
  $region60: #{conformer_layer.4} parent=0 // pred_region
    _
  $region61: #{conformer_layer.4} parent=0 // pred_fallthru
    _
  // Predicated region
  $region62: #{conformer_layer.4} parent=0 // pred_check
    _
  $region63: #{conformer_layer.4} parent=0 // pred_check_branch
    %54 = sbr.rel (0) target = $region65
  $region64: #{conformer_layer.4} parent=0 // pred_region
    _
  $region65: #{conformer_layer.4} parent=0 // pred_fallthru
    _
  // Predicated region
  $region66: #{conformer_layer.4} parent=0 // pred_check
    _
  $region67: #{conformer_layer.4} parent=0 // pred_check_branch
    %56 = sbr.rel (0) target = $region69
  $region68: #{conformer_layer.4} parent=0 // pred_region
    _
  $region69: #{conformer_layer.4} parent=0 // pred_fallthru
    _
  // Predicated region
  $region70: #{conformer_layer.4} parent=0 // pred_check
    _
  $region71: #{conformer_layer.4} parent=0 // pred_check_branch
    %58 = sbr.rel (0) target = $region73
  $region72: #{conformer_layer.4} parent=0 // pred_region
    _
  $region73: #{conformer_layer.4} parent=0 // pred_fallthru
    _
  %v60 = vld [vmem:[%s0] sm:$0xff]
  %v61 = vld [vmem:[%s1] sm:$0x3]
  %v62 = vld [vmem:[%s2] sm:$0x1]
  %v63 = vld [vmem:[%s3] sm:$0x1]
  %v64 = vld [vmem:[%s4] sm:$0xf]
  %v65 = vld [vmem:[%s4 + $0x4] sm:$0xf]
  %v66 = vld [vmem:[%s4 + $0x8] sm:$0xf]
  %v67 = vld [vmem:[%s4 + $0xc] sm:$0xf]
  %v68 = vld [vmem:[%s5] sm:$0x1]
  %v69 = vld [vmem:[%s6] sm:$0xf]
  %v70 = vld [vmem:[%s6 + $0x4] sm:$0xf]
  %v71 = vld [vmem:[%s6 + $0x8] sm:$0xf]
  %v72 = vld [vmem:[%s6 + $0xc] sm:$0xf]
  %v73 = vld [vmem:[%s7] sm:$0x1]
  %v74 = vld [vmem:[%s8] sm:$0x1]
  %v75 = vld [vmem:[%s9] sm:$0x1]
  %v76 = vld [vmem:[%s10] sm:$0xf]
  %v77 = vld [vmem:[%s10 + $0x4] sm:$0xf]
  %v78 = vld [vmem:[%s10 + $0x8] sm:$0xf]
  %v79 = vld [vmem:[%s10 + $0xc] sm:$0xf]
  %v80 = vld [vmem:[%s11] sm:$0x1]
  %v81 = vld [vmem:[%s12] sm:$0x7f]
  %v82 = vld [vmem:[%s13] sm:$0x1]
  %v83 = vld [vmem:[%s14] sm:$0x1]
  %v84 = vld [vmem:[%s15] sm:$0x1]
  %v85 = vld [vmem:[%s16] sm:$0xf]
  %v86 = vld [vmem:[%s16 + $0x4] sm:$0xf]
  %v87 = vld [vmem:[%s16 + $0x8] sm:$0xf]
  %v88 = vld [vmem:[%s16 + $0xc] sm:$0xf]
  %v89 = vld [vmem:[%s17] sm:$0x1]
  %vm90 = vcmask 261120
  %91 = vst.msk [vmem:[#allocation2] sm:$0xff] %vm90, 0.0
  %vm92 = vcmask 259072
  %93 = vst.msk [vmem:[#allocation2 + $0x8] sm:$0x3f] %vm92, 0.0
  %v94 = vsel %vm90, %v60, 0.0
  %95 = vadd.xlane.f32.xlu0 %v94
  %v96 = vpop.xlane.xlu0 %95
  %v97 = vrcp.pop 32.0
  %v98 = vmul.f32 %v96, %v97
  %v99 = vsub.f32 %v60, %v98
  %v100 = vmul.f32 %v99, %v99
  %v101 = vsel %vm90, %v100, 0.0
  %102 = vadd.xlane.f32.xlu0 %v101
  %v103 = vpop.xlane.xlu0 %102
  %v104 = vmul.f32 %v103, %v97
  %v105 = vadd.f32 %v104, 1e-05
  %v106 = vrsqrt.pop %v105
  %v107 = vmul.f32 %v99, %v106
  %v109 = vlaneseq
  %v110 = vshrl.u32 %v109, 7
  %v111 = vsub.s32 0, %v110
  %v112 = vrot.slane %v62, %v111
  %v114 = vmul.f32 %v107, %v112
  %v116 = vlaneseq
  %v117 = vshrl.u32 %v116, 7
  %v118 = vsub.s32 0, %v117
  %v119 = vrot.slane %v63, %v118
  %v121 = vadd.f32 %v114, %v119
  %v122 = vpack.c.bf16 %v121, %v121
  %v124 = vlaneseq
  %v125 = vshrl.u32 %v124, 7
  %v126 = vsub.s32 0, %v125
  %v127 = vrot.slane %v68, %v126
  %v133 = vunpack.c.l.b16 %v64
  %v134 = vunpack.c.l.b16 %v65
  %v135 = vunpack.c.l.b16 %v66
  %v136 = vunpack.c.l.b16 %v67
  %v137 = vpack.c.b16 %v134, %v133
  %v138 = vpack.c.b16 %v136, %v135
  %v142 = vsel %vm90, %v122, 0
  %144 = vmatprep.subr.bf16.mxu0 0
  %145 = vmatpush1.bf16.msra.mxu0 %v137
  %146 = vmatprep.subr.bf16.mxu0 0
  %147 = vmatpush1.bf16.msra.mxu0 %v138
  %148 = vmatprep.subr.bf16.mxu0 0
  %149 = vmatpush1.bf16.msra.mxu0 0
  %150 = vmatprep.subr.bf16.mxu0 0
  %151 = vmatpush1.bf16.msra.mxu0 0
  %152 = vmatprep.subr.bf16.mxu0 0
  %153 = vmatpush1.bf16.msra.mxu0 0
  %154 = vmatprep.subr.bf16.mxu0 0
  %155 = vmatpush1.bf16.msra.mxu0 0
  %156 = vmatprep.subr.bf16.mxu0 0
  %157 = vmatpush1.bf16.msra.mxu0 0
  %158 = vmatprep.subr.bf16.mxu0 0
  %159 = vmatpush1.bf16.msra.mxu0 0
  %160 = vmatprep.subr.bf16.mxu0 0
  %161 = vmatpush1.bf16.msra.mxu0 0
  %162 = vmatprep.subr.bf16.mxu0 0
  %163 = vmatpush1.bf16.msra.mxu0 0
  %164 = vmatprep.subr.bf16.mxu0 0
  %165 = vmatpush1.bf16.msra.mxu0 0
  %166 = vmatprep.subr.bf16.mxu0 0
  %167 = vmatpush1.bf16.msra.mxu0 0
  %168 = vmatprep.subr.bf16.mxu0 0
  %169 = vmatpush1.bf16.msra.mxu0 0
  %170 = vmatprep.subr.bf16.mxu0 0
  %171 = vmatpush1.bf16.msra.mxu0 0
  %172 = vmatprep.subr.bf16.mxu0 0
  %173 = vmatpush1.bf16.msra.mxu0 0
  %174 = vmatprep.subr.bf16.mxu0 0
  %175 = vmatpush1.bf16.msra.mxu0 0
  %176 = vmatprep.mubr.bf16.mxu0 0
  %177 = vmatmul.mubr.bf16.gmra.mrb[0].mxu0 %v142
  %v178 = vpop.f32.mrb[0].mxu0
  %v179 = vadd.f32 %v127, %v178
  %v180 = vpop.f32.mrb[0].mxu0
  %v181 = vpop.f32.mrb[0].mxu0
  %v182 = vpop.f32.mrb[0].mxu0
  %183 = vdwg.mxu0
  %v184 = vmul.f32 %v179, 0.35355338
  %v185 = vpack.c.bf16 %v184, %v184
  %v186 = vpack.c.bf16 %v179, %v179
  %v187 = vlaneseq
  %v188 = vshrl.u32 %v187, 7
  %v189 = vsub.s32 0, %v188
  %v190 = vrot.slane %v61, %v189
  %192 = vrot.lane.b32.xlu0 %v186, 96
  %v193 = vpop.permute.xlu0 %192
  %vm194 = vcmask 64512
  %v196 = vsel %vm194, %v185, 0
  %v199 = vsel %vm194, %v193, 0
  %201 = vmatprep.subr.bf16.mxu0 0
  %202 = vmatpush1.bf16.xpose.msra.mxu0 %v199
  %203 = vmatprep.subr.bf16.mxu0 0
  %204 = vmatpush1.bf16.xpose.msra.mxu0 0
  %205 = vmatprep.subr.bf16.mxu0 0
  %206 = vmatpush1.bf16.xpose.msra.mxu0 0
  %207 = vmatprep.subr.bf16.mxu0 0
  %208 = vmatpush1.bf16.xpose.msra.mxu0 0
  %209 = vmatprep.subr.bf16.mxu0 0
  %210 = vmatpush1.bf16.xpose.msra.mxu0 0
  %211 = vmatprep.subr.bf16.mxu0 0
  %212 = vmatpush1.bf16.xpose.msra.mxu0 0
  %213 = vmatprep.subr.bf16.mxu0 0
  %214 = vmatpush1.bf16.xpose.msra.mxu0 0
  %215 = vmatprep.subr.bf16.mxu0 0
  %216 = vmatpush1.bf16.xpose.msra.mxu0 0
  %217 = vmatprep.subr.bf16.mxu0 0
  %218 = vmatpush1.bf16.xpose.msra.mxu0 0
  %219 = vmatprep.subr.bf16.mxu0 0
  %220 = vmatpush1.bf16.xpose.msra.mxu0 0
  %221 = vmatprep.subr.bf16.mxu0 0
  %222 = vmatpush1.bf16.xpose.msra.mxu0 0
  %223 = vmatprep.subr.bf16.mxu0 0
  %224 = vmatpush1.bf16.xpose.msra.mxu0 0
  %225 = vmatprep.subr.bf16.mxu0 0
  %226 = vmatpush1.bf16.xpose.msra.mxu0 0
  %227 = vmatprep.subr.bf16.mxu0 0
  %228 = vmatpush1.bf16.xpose.msra.mxu0 0
  %229 = vmatprep.subr.bf16.mxu0 0
  %230 = vmatpush1.bf16.xpose.msra.mxu0 0
  %231 = vmatprep.subr.bf16.mxu0 0
  %232 = vmatpush1.bf16.xpose.msra.mxu0 0
  %233 = vmatprep.mubr.bf16.mxu0 0
  %234 = vmatmul.mubr.bf16.gmra.mrb[0].mxu0 %v196
  %v235 = vpop.f32.mrb[0].mxu0
  %v236 = vadd.f32 %v190, %v235
  %v237 = vpop.f32.mrb[0].mxu0
  %v238 = vpop.f32.mrb[0].mxu0
  %v239 = vpop.f32.mrb[0].mxu0
  %240 = vdwg.mxu0
  %v241 = vsel %vm194, %v236, -inf
  %242 = vmax.xlane.f32.xlu0 %v241
  %v243 = vpop.xlane.xlu0 %242
  %v244 = vsub.f32 %v236, %v243
  %v245 = vmul.f32 %v244, 1.442695
  %v246 = vpow.pop %v245
  %v247 = vsel %vm194, %v246, 0.0
  %248 = vadd.xlane.f32.xlu0 %v247
  %v249 = vpop.xlane.xlu0 %248
  %v250 = vrcp.pop %v249
  %v251 = vmul.f32 %v246, %v250
  %v252 = vpack.c.bf16 %v251, %v251
  %253 = vrot.lane.b32.xlu0 %v186, 64
  %v254 = vpop.permute.xlu0 %253
  %v256 = vsel %vm194, %v252, 0
  %vm258 = vcmask 1043456
  %v260 = vsel %vm258, %v254, 0
  %262 = vmatprep.subr.bf16.mxu0 0
  %263 = vmatpush1.bf16.msra.mxu0 %v260
  %264 = vmatprep.subr.bf16.mxu0 0
  %265 = vmatpush1.bf16.msra.mxu0 0
  %266 = vmatprep.subr.bf16.mxu0 0
  %267 = vmatpush1.bf16.msra.mxu0 0
  %268 = vmatprep.subr.bf16.mxu0 0
  %269 = vmatpush1.bf16.msra.mxu0 0
  %270 = vmatprep.subr.bf16.mxu0 0
  %271 = vmatpush1.bf16.msra.mxu0 0
  %272 = vmatprep.subr.bf16.mxu0 0
  %273 = vmatpush1.bf16.msra.mxu0 0
  %274 = vmatprep.subr.bf16.mxu0 0
  %275 = vmatpush1.bf16.msra.mxu0 0
  %276 = vmatprep.subr.bf16.mxu0 0
  %277 = vmatpush1.bf16.msra.mxu0 0
  %278 = vmatprep.subr.bf16.mxu0 0
  %279 = vmatpush1.bf16.msra.mxu0 0
  %280 = vmatprep.subr.bf16.mxu0 0
  %281 = vmatpush1.bf16.msra.mxu0 0
  %282 = vmatprep.subr.bf16.mxu0 0
  %283 = vmatpush1.bf16.msra.mxu0 0
  %284 = vmatprep.subr.bf16.mxu0 0
  %285 = vmatpush1.bf16.msra.mxu0 0
  %286 = vmatprep.subr.bf16.mxu0 0
  %287 = vmatpush1.bf16.msra.mxu0 0
  %288 = vmatprep.subr.bf16.mxu0 0
  %289 = vmatpush1.bf16.msra.mxu0 0
  %290 = vmatprep.subr.bf16.mxu0 0
  %291 = vmatpush1.bf16.msra.mxu0 0
  %292 = vmatprep.subr.bf16.mxu0 0
  %293 = vmatpush1.bf16.msra.mxu0 0
  %294 = vmatprep.mubr.bf16.mxu0 0
  %295 = vmatmul.mubr.bf16.gmra.mrb[0].mxu0 %v256
  %v296 = vpop.f32.mrb[0].mxu0
  %v297 = vadd.f32 0.0, %v296
  %v298 = vpop.f32.mrb[0].mxu0
  %v299 = vpop.f32.mrb[0].mxu0
  %v300 = vpop.f32.mrb[0].mxu0
  %301 = vdwg.mxu0
  %v302 = vpack.c.bf16 %v297, %v297
  %304 = vrot.lane.b32.xlu0 %v185, 120
  %v305 = vpop.permute.xlu0 %304
  %306 = vrot.lane.b32.xlu0 %v186, 88
  %v307 = vpop.permute.xlu0 %306
  %v309 = vsel %vm194, %v305, 0
  %v312 = vsel %vm194, %v307, 0
  %314 = vmatprep.subr.bf16.mxu0 0
  %315 = vmatpush1.bf16.xpose.msra.mxu0 %v312
  %316 = vmatprep.subr.bf16.mxu0 0
  %317 = vmatpush1.bf16.xpose.msra.mxu0 0
  %318 = vmatprep.subr.bf16.mxu0 0
  %319 = vmatpush1.bf16.xpose.msra.mxu0 0
  %320 = vmatprep.subr.bf16.mxu0 0
  %321 = vmatpush1.bf16.xpose.msra.mxu0 0
  %322 = vmatprep.subr.bf16.mxu0 0
  %323 = vmatpush1.bf16.xpose.msra.mxu0 0
  %324 = vmatprep.subr.bf16.mxu0 0
  %325 = vmatpush1.bf16.xpose.msra.mxu0 0
  %326 = vmatprep.subr.bf16.mxu0 0
  %327 = vmatpush1.bf16.xpose.msra.mxu0 0
  %328 = vmatprep.subr.bf16.mxu0 0
  %329 = vmatpush1.bf16.xpose.msra.mxu0 0
  %330 = vmatprep.subr.bf16.mxu0 0
  %331 = vmatpush1.bf16.xpose.msra.mxu0 0
  %332 = vmatprep.subr.bf16.mxu0 0
  %333 = vmatpush1.bf16.xpose.msra.mxu0 0
  %334 = vmatprep.subr.bf16.mxu0 0
  %335 = vmatpush1.bf16.xpose.msra.mxu0 0
  %336 = vmatprep.subr.bf16.mxu0 0
  %337 = vmatpush1.bf16.xpose.msra.mxu0 0
  %338 = vmatprep.subr.bf16.mxu0 0
  %339 = vmatpush1.bf16.xpose.msra.mxu0 0
  %340 = vmatprep.subr.bf16.mxu0 0
  %341 = vmatpush1.bf16.xpose.msra.mxu0 0
  %342 = vmatprep.subr.bf16.mxu0 0
  %343 = vmatpush1.bf16.xpose.msra.mxu0 0
  %344 = vmatprep.subr.bf16.mxu0 0
  %345 = vmatpush1.bf16.xpose.msra.mxu0 0
  %346 = vmatprep.mubr.bf16.mxu0 0
  %347 = vmatmul.mubr.bf16.gmra.mrb[0].mxu0 %v309
  %v348 = vpop.f32.mrb[0].mxu0
  %v349 = vadd.f32 %v190, %v348
  %v350 = vpop.f32.mrb[0].mxu0
  %v351 = vpop.f32.mrb[0].mxu0
  %v352 = vpop.f32.mrb[0].mxu0
  %353 = vdwg.mxu0
  %v354 = vsel %vm194, %v349, -inf
  %355 = vmax.xlane.f32.xlu0 %v354
  %v356 = vpop.xlane.xlu0 %355
  %v357 = vsub.f32 %v349, %v356
  %v358 = vmul.f32 %v357, 1.442695
  %v359 = vpow.pop %v358
  %v360 = vsel %vm194, %v359, 0.0
  %361 = vadd.xlane.f32.xlu0 %v360
  %v362 = vpop.xlane.xlu0 %361
  %v363 = vrcp.pop %v362
  %v364 = vmul.f32 %v359, %v363
  %v365 = vpack.c.bf16 %v364, %v364
  %366 = vrot.lane.b32.xlu0 %v186, 56
  %v367 = vpop.permute.xlu0 %366
  %v369 = vsel %vm194, %v365, 0
  %v372 = vsel %vm258, %v367, 0
  %374 = vmatprep.subr.bf16.mxu0 0
  %375 = vmatpush1.bf16.msra.mxu0 %v372
  %376 = vmatprep.subr.bf16.mxu0 0
  %377 = vmatpush1.bf16.msra.mxu0 0
  %378 = vmatprep.subr.bf16.mxu0 0
  %379 = vmatpush1.bf16.msra.mxu0 0
  %380 = vmatprep.subr.bf16.mxu0 0
  %381 = vmatpush1.bf16.msra.mxu0 0
  %382 = vmatprep.subr.bf16.mxu0 0
  %383 = vmatpush1.bf16.msra.mxu0 0
  %384 = vmatprep.subr.bf16.mxu0 0
  %385 = vmatpush1.bf16.msra.mxu0 0
  %386 = vmatprep.subr.bf16.mxu0 0
  %387 = vmatpush1.bf16.msra.mxu0 0
  %388 = vmatprep.subr.bf16.mxu0 0
  %389 = vmatpush1.bf16.msra.mxu0 0
  %390 = vmatprep.subr.bf16.mxu0 0
  %391 = vmatpush1.bf16.msra.mxu0 0
  %392 = vmatprep.subr.bf16.mxu0 0
  %393 = vmatpush1.bf16.msra.mxu0 0
  %394 = vmatprep.subr.bf16.mxu0 0
  %395 = vmatpush1.bf16.msra.mxu0 0
  %396 = vmatprep.subr.bf16.mxu0 0
  %397 = vmatpush1.bf16.msra.mxu0 0
  %398 = vmatprep.subr.bf16.mxu0 0
  %399 = vmatpush1.bf16.msra.mxu0 0
  %400 = vmatprep.subr.bf16.mxu0 0
  %401 = vmatpush1.bf16.msra.mxu0 0
  %402 = vmatprep.subr.bf16.mxu0 0
  %403 = vmatpush1.bf16.msra.mxu0 0
  %404 = vmatprep.subr.bf16.mxu0 0
  %405 = vmatpush1.bf16.msra.mxu0 0
  %406 = vmatprep.mubr.bf16.mxu0 0
  %407 = vmatmul.mubr.bf16.gmra.mrb[0].mxu0 %v369
  %v408 = vpop.f32.mrb[0].mxu0
  %v409 = vadd.f32 0.0, %v408
  %v410 = vpop.f32.mrb[0].mxu0
  %v411 = vpop.f32.mrb[0].mxu0
  %v412 = vpop.f32.mrb[0].mxu0
  %413 = vdwg.mxu0
  %v414 = vpack.c.bf16 %v409, %v409
  %v416 = vsel %vm194, %v414, 0
  %v419 = vsel %vm258, %v70, 0
  %421 = vmatprep.subr.bf16.mxu0 0
  %422 = vmatpush1.bf16.msra.mxu0 %v419
  %423 = vmatprep.subr.bf16.mxu0 0
  %424 = vmatpush1.bf16.msra.mxu0 0
  %425 = vmatprep.subr.bf16.mxu0 0
  %426 = vmatpush1.bf16.msra.mxu0 0
  %427 = vmatprep.subr.bf16.mxu0 0
  %428 = vmatpush1.bf16.msra.mxu0 0
  %429 = vmatprep.subr.bf16.mxu0 0
  %430 = vmatpush1.bf16.msra.mxu0 0
  %431 = vmatprep.subr.bf16.mxu0 0
  %432 = vmatpush1.bf16.msra.mxu0 0
  %433 = vmatprep.subr.bf16.mxu0 0
  %434 = vmatpush1.bf16.msra.mxu0 0
  %435 = vmatprep.subr.bf16.mxu0 0
  %436 = vmatpush1.bf16.msra.mxu0 0
  %437 = vmatprep.subr.bf16.mxu0 0
  %438 = vmatpush1.bf16.msra.mxu0 0
  %439 = vmatprep.subr.bf16.mxu0 0
  %440 = vmatpush1.bf16.msra.mxu0 0
  %441 = vmatprep.subr.bf16.mxu0 0
  %442 = vmatpush1.bf16.msra.mxu0 0
  %443 = vmatprep.subr.bf16.mxu0 0
  %444 = vmatpush1.bf16.msra.mxu0 0
  %445 = vmatprep.subr.bf16.mxu0 0
  %446 = vmatpush1.bf16.msra.mxu0 0
  %447 = vmatprep.subr.bf16.mxu0 0
  %448 = vmatpush1.bf16.msra.mxu0 0
  %449 = vmatprep.subr.bf16.mxu0 0
  %450 = vmatpush1.bf16.msra.mxu0 0
  %451 = vmatprep.subr.bf16.mxu0 0
  %452 = vmatpush1.bf16.msra.mxu0 0
  %453 = vmatprep.mubr.bf16.mxu0 0
  %454 = vmatmul.mubr.bf16.gmra.mrb[0].mxu0 %v416
  %v455 = vpop.f32.mrb[0].mxu0
  %v456 = vadd.f32 0.0, %v455
  %v457 = vpop.f32.mrb[0].mxu0
  %v458 = vpop.f32.mrb[0].mxu0
  %v459 = vpop.f32.mrb[0].mxu0
  %460 = vdwg.mxu0
  %v462 = vsel %vm194, %v302, 0
  %v465 = vsel %vm258, %v69, 0
  %467 = vmatprep.subr.bf16.mxu0 0
  %468 = vmatpush1.bf16.msra.mxu0 %v465
  %469 = vmatprep.subr.bf16.mxu0 0
  %470 = vmatpush1.bf16.msra.mxu0 0
  %471 = vmatprep.subr.bf16.mxu0 0
  %472 = vmatpush1.bf16.msra.mxu0 0
  %473 = vmatprep.subr.bf16.mxu0 0
  %474 = vmatpush1.bf16.msra.mxu0 0
  %475 = vmatprep.subr.bf16.mxu0 0
  %476 = vmatpush1.bf16.msra.mxu0 0
  %477 = vmatprep.subr.bf16.mxu0 0
  %478 = vmatpush1.bf16.msra.mxu0 0
  %479 = vmatprep.subr.bf16.mxu0 0
  %480 = vmatpush1.bf16.msra.mxu0 0
  %481 = vmatprep.subr.bf16.mxu0 0
  %482 = vmatpush1.bf16.msra.mxu0 0
  %483 = vmatprep.subr.bf16.mxu0 0
  %484 = vmatpush1.bf16.msra.mxu0 0
  %485 = vmatprep.subr.bf16.mxu0 0
  %486 = vmatpush1.bf16.msra.mxu0 0
  %487 = vmatprep.subr.bf16.mxu0 0
  %488 = vmatpush1.bf16.msra.mxu0 0
  %489 = vmatprep.subr.bf16.mxu0 0
  %490 = vmatpush1.bf16.msra.mxu0 0
  %491 = vmatprep.subr.bf16.mxu0 0
  %492 = vmatpush1.bf16.msra.mxu0 0
  %493 = vmatprep.subr.bf16.mxu0 0
  %494 = vmatpush1.bf16.msra.mxu0 0
  %495 = vmatprep.subr.bf16.mxu0 0
  %496 = vmatpush1.bf16.msra.mxu0 0
  %497 = vmatprep.subr.bf16.mxu0 0
  %498 = vmatpush1.bf16.msra.mxu0 0
  %499 = vmatprep.mubr.bf16.mxu0 0
  %500 = vmatmul.mubr.bf16.gmra.mrb[0].mxu0 %v462
  %v501 = vpop.f32.mrb[0].mxu0
  %v502 = vadd.f32 %v456, %v501
  %v503 = vpop.f32.mrb[0].mxu0
  %v504 = vpop.f32.mrb[0].mxu0
  %v505 = vpop.f32.mrb[0].mxu0
  %506 = vdwg.mxu0
  %507 = vrot.lane.b32.xlu0 %v185, 112
  %v508 = vpop.permute.xlu0 %507
  %509 = vrot.lane.b32.xlu0 %v186, 80
  %v510 = vpop.permute.xlu0 %509
  %v512 = vsel %vm194, %v508, 0
  %v515 = vsel %vm194, %v510, 0
  %517 = vmatprep.subr.bf16.mxu0 0
  %518 = vmatpush1.bf16.xpose.msra.mxu0 %v515
  %519 = vmatprep.subr.bf16.mxu0 0
  %520 = vmatpush1.bf16.xpose.msra.mxu0 0
  %521 = vmatprep.subr.bf16.mxu0 0
  %522 = vmatpush1.bf16.xpose.msra.mxu0 0
  %523 = vmatprep.subr.bf16.mxu0 0
  %524 = vmatpush1.bf16.xpose.msra.mxu0 0
  %525 = vmatprep.subr.bf16.mxu0 0
  %526 = vmatpush1.bf16.xpose.msra.mxu0 0
  %527 = vmatprep.subr.bf16.mxu0 0
  %528 = vmatpush1.bf16.xpose.msra.mxu0 0
  %529 = vmatprep.subr.bf16.mxu0 0
  %530 = vmatpush1.bf16.xpose.msra.mxu0 0
  %531 = vmatprep.subr.bf16.mxu0 0
  %532 = vmatpush1.bf16.xpose.msra.mxu0 0
  %533 = vmatprep.subr.bf16.mxu0 0
  %534 = vmatpush1.bf16.xpose.msra.mxu0 0
  %535 = vmatprep.subr.bf16.mxu0 0
  %536 = vmatpush1.bf16.xpose.msra.mxu0 0
  %537 = vmatprep.subr.bf16.mxu0 0
  %538 = vmatpush1.bf16.xpose.msra.mxu0 0
  %539 = vmatprep.subr.bf16.mxu0 0
  %540 = vmatpush1.bf16.xpose.msra.mxu0 0
  %541 = vmatprep.subr.bf16.mxu0 0
  %542 = vmatpush1.bf16.xpose.msra.mxu0 0
  %543 = vmatprep.subr.bf16.mxu0 0
  %544 = vmatpush1.bf16.xpose.msra.mxu0 0
  %545 = vmatprep.subr.bf16.mxu0 0
  %546 = vmatpush1.bf16.xpose.msra.mxu0 0
  %547 = vmatprep.subr.bf16.mxu0 0
  %548 = vmatpush1.bf16.xpose.msra.mxu0 0
  %549 = vmatprep.mubr.bf16.mxu0 0
  %550 = vmatmul.mubr.bf16.gmra.mrb[0].mxu0 %v512
  %v551 = vpop.f32.mrb[0].mxu0
  %v552 = vadd.f32 %v190, %v551
  %v553 = vpop.f32.mrb[0].mxu0
  %v554 = vpop.f32.mrb[0].mxu0
  %v555 = vpop.f32.mrb[0].mxu0
  %556 = vdwg.mxu0
  %v557 = vsel %vm194, %v552, -inf
  %558 = vmax.xlane.f32.xlu0 %v557
  %v559 = vpop.xlane.xlu0 %558
  %v560 = vsub.f32 %v552, %v559
  %v561 = vmul.f32 %v560, 1.442695
  %v562 = vpow.pop %v561
  %v563 = vsel %vm194, %v562, 0.0
  %564 = vadd.xlane.f32.xlu0 %v563
  %v565 = vpop.xlane.xlu0 %564
  %v566 = vrcp.pop %v565
  %v567 = vmul.f32 %v562, %v566
  %v568 = vpack.c.bf16 %v567, %v567
  %569 = vrot.lane.b32.xlu0 %v186, 48
  %v570 = vpop.permute.xlu0 %569
  %v572 = vsel %vm194, %v568, 0
  %v575 = vsel %vm258, %v570, 0
  %577 = vmatprep.subr.bf16.mxu0 0
  %578 = vmatpush1.bf16.msra.mxu0 %v575
  %579 = vmatprep.subr.bf16.mxu0 0
  %580 = vmatpush1.bf16.msra.mxu0 0
  %581 = vmatprep.subr.bf16.mxu0 0
  %582 = vmatpush1.bf16.msra.mxu0 0
  %583 = vmatprep.subr.bf16.mxu0 0
  %584 = vmatpush1.bf16.msra.mxu0 0
  %585 = vmatprep.subr.bf16.mxu0 0
  %586 = vmatpush1.bf16.msra.mxu0 0
  %587 = vmatprep.subr.bf16.mxu0 0
  %588 = vmatpush1.bf16.msra.mxu0 0
  %589 = vmatprep.subr.bf16.mxu0 0
  %590 = vmatpush1.bf16.msra.mxu0 0
  %591 = vmatprep.subr.bf16.mxu0 0
  %592 = vmatpush1.bf16.msra.mxu0 0
  %593 = vmatprep.subr.bf16.mxu0 0
  %594 = vmatpush1.bf16.msra.mxu0 0
  %595 = vmatprep.subr.bf16.mxu0 0
  %596 = vmatpush1.bf16.msra.mxu0 0
  %597 = vmatprep.subr.bf16.mxu0 0
  %598 = vmatpush1.bf16.msra.mxu0 0
  %599 = vmatprep.subr.bf16.mxu0 0
  %600 = vmatpush1.bf16.msra.mxu0 0
  %601 = vmatprep.subr.bf16.mxu0 0
  %602 = vmatpush1.bf16.msra.mxu0 0
  %603 = vmatprep.subr.bf16.mxu0 0
  %604 = vmatpush1.bf16.msra.mxu0 0
  %605 = vmatprep.subr.bf16.mxu0 0
  %606 = vmatpush1.bf16.msra.mxu0 0
  %607 = vmatprep.subr.bf16.mxu0 0
  %608 = vmatpush1.bf16.msra.mxu0 0
  %609 = vmatprep.mubr.bf16.mxu0 0
  %610 = vmatmul.mubr.bf16.gmra.mrb[0].mxu0 %v572
  %v611 = vpop.f32.mrb[0].mxu0
  %v612 = vadd.f32 0.0, %v611
  %v613 = vpop.f32.mrb[0].mxu0
  %v614 = vpop.f32.mrb[0].mxu0
  %v615 = vpop.f32.mrb[0].mxu0
  %616 = vdwg.mxu0
  %v617 = vpack.c.bf16 %v612, %v612
  %v619 = vsel %vm194, %v617, 0
  %v622 = vsel %vm258, %v71, 0
  %624 = vmatprep.subr.bf16.mxu0 0
  %625 = vmatpush1.bf16.msra.mxu0 %v622
  %626 = vmatprep.subr.bf16.mxu0 0
  %627 = vmatpush1.bf16.msra.mxu0 0
  %628 = vmatprep.subr.bf16.mxu0 0
  %629 = vmatpush1.bf16.msra.mxu0 0
  %630 = vmatprep.subr.bf16.mxu0 0
  %631 = vmatpush1.bf16.msra.mxu0 0
  %632 = vmatprep.subr.bf16.mxu0 0
  %633 = vmatpush1.bf16.msra.mxu0 0
  %634 = vmatprep.subr.bf16.mxu0 0
  %635 = vmatpush1.bf16.msra.mxu0 0
  %636 = vmatprep.subr.bf16.mxu0 0
  %637 = vmatpush1.bf16.msra.mxu0 0
  %638 = vmatprep.subr.bf16.mxu0 0
  %639 = vmatpush1.bf16.msra.mxu0 0
  %640 = vmatprep.subr.bf16.mxu0 0
  %641 = vmatpush1.bf16.msra.mxu0 0
  %642 = vmatprep.subr.bf16.mxu0 0
  %643 = vmatpush1.bf16.msra.mxu0 0
  %644 = vmatprep.subr.bf16.mxu0 0
  %645 = vmatpush1.bf16.msra.mxu0 0
  %646 = vmatprep.subr.bf16.mxu0 0
  %647 = vmatpush1.bf16.msra.mxu0 0
  %648 = vmatprep.subr.bf16.mxu0 0
  %649 = vmatpush1.bf16.msra.mxu0 0
  %650 = vmatprep.subr.bf16.mxu0 0
  %651 = vmatpush1.bf16.msra.mxu0 0
  %652 = vmatprep.subr.bf16.mxu0 0
  %653 = vmatpush1.bf16.msra.mxu0 0
  %654 = vmatprep.subr.bf16.mxu0 0
  %655 = vmatpush1.bf16.msra.mxu0 0
  %656 = vmatprep.mubr.bf16.mxu0 0
  %657 = vmatmul.mubr.bf16.gmra.mrb[0].mxu0 %v619
  %v658 = vpop.f32.mrb[0].mxu0
  %v659 = vadd.f32 0.0, %v658
  %v660 = vpop.f32.mrb[0].mxu0
  %v661 = vpop.f32.mrb[0].mxu0
  %v662 = vpop.f32.mrb[0].mxu0
  %663 = vdwg.mxu0
  %v664 = vadd.f32 %v502, %v659
  %665 = vrot.lane.b32.xlu0 %v185, 104
  %v666 = vpop.permute.xlu0 %665
  %667 = vrot.lane.b32.xlu0 %v186, 72
  %v668 = vpop.permute.xlu0 %667
  %v670 = vsel %vm194, %v666, 0
  %v673 = vsel %vm194, %v668, 0
  %675 = vmatprep.subr.bf16.mxu0 0
  %676 = vmatpush1.bf16.xpose.msra.mxu0 %v673
  %677 = vmatprep.subr.bf16.mxu0 0
  %678 = vmatpush1.bf16.xpose.msra.mxu0 0
  %679 = vmatprep.subr.bf16.mxu0 0
  %680 = vmatpush1.bf16.xpose.msra.mxu0 0
  %681 = vmatprep.subr.bf16.mxu0 0
  %682 = vmatpush1.bf16.xpose.msra.mxu0 0
  %683 = vmatprep.subr.bf16.mxu0 0
  %684 = vmatpush1.bf16.xpose.msra.mxu0 0
  %685 = vmatprep.subr.bf16.mxu0 0
  %686 = vmatpush1.bf16.xpose.msra.mxu0 0
  %687 = vmatprep.subr.bf16.mxu0 0
  %688 = vmatpush1.bf16.xpose.msra.mxu0 0
  %689 = vmatprep.subr.bf16.mxu0 0
  %690 = vmatpush1.bf16.xpose.msra.mxu0 0
  %691 = vmatprep.subr.bf16.mxu0 0
  %692 = vmatpush1.bf16.xpose.msra.mxu0 0
  %693 = vmatprep.subr.bf16.mxu0 0
  %694 = vmatpush1.bf16.xpose.msra.mxu0 0
  %695 = vmatprep.subr.bf16.mxu0 0
  %696 = vmatpush1.bf16.xpose.msra.mxu0 0
  %697 = vmatprep.subr.bf16.mxu0 0
  %698 = vmatpush1.bf16.xpose.msra.mxu0 0
  %699 = vmatprep.subr.bf16.mxu0 0
  %700 = vmatpush1.bf16.xpose.msra.mxu0 0
  %701 = vmatprep.subr.bf16.mxu0 0
  %702 = vmatpush1.bf16.xpose.msra.mxu0 0
  %703 = vmatprep.subr.bf16.mxu0 0
  %704 = vmatpush1.bf16.xpose.msra.mxu0 0
  %705 = vmatprep.subr.bf16.mxu0 0
  %706 = vmatpush1.bf16.xpose.msra.mxu0 0
  %707 = vmatprep.mubr.bf16.mxu0 0
  %708 = vmatmul.mubr.bf16.gmra.mrb[0].mxu0 %v670
  %v709 = vpop.f32.mrb[0].mxu0
  %v710 = vadd.f32 %v190, %v709
  %v711 = vpop.f32.mrb[0].mxu0
  %v712 = vpop.f32.mrb[0].mxu0
  %v713 = vpop.f32.mrb[0].mxu0
  %714 = vdwg.mxu0
  %v715 = vsel %vm194, %v710, -inf
  %716 = vmax.xlane.f32.xlu0 %v715
  %v717 = vpop.xlane.xlu0 %716
  %v718 = vsub.f32 %v710, %v717
  %v719 = vmul.f32 %v718, 1.442695
  %v720 = vpow.pop %v719
  %v721 = vsel %vm194, %v720, 0.0
  %722 = vadd.xlane.f32.xlu0 %v721
  %v723 = vpop.xlane.xlu0 %722
  %v724 = vrcp.pop %v723
  %v725 = vmul.f32 %v720, %v724
  %v726 = vpack.c.bf16 %v725, %v725
  %727 = vrot.lane.b32.xlu0 %v186, 40
  %v728 = vpop.permute.xlu0 %727
  %v730 = vsel %vm194, %v726, 0
  %v733 = vsel %vm258, %v728, 0
  %735 = vmatprep.subr.bf16.mxu0 0
  %736 = vmatpush1.bf16.msra.mxu0 %v733
  %737 = vmatprep.subr.bf16.mxu0 0
  %738 = vmatpush1.bf16.msra.mxu0 0
  %739 = vmatprep.subr.bf16.mxu0 0
  %740 = vmatpush1.bf16.msra.mxu0 0
  %741 = vmatprep.subr.bf16.mxu0 0
  %742 = vmatpush1.bf16.msra.mxu0 0
  %743 = vmatprep.subr.bf16.mxu0 0
  %744 = vmatpush1.bf16.msra.mxu0 0
  %745 = vmatprep.subr.bf16.mxu0 0
  %746 = vmatpush1.bf16.msra.mxu0 0
  %747 = vmatprep.subr.bf16.mxu0 0
  %748 = vmatpush1.bf16.msra.mxu0 0
  %749 = vmatprep.subr.bf16.mxu0 0
  %750 = vmatpush1.bf16.msra.mxu0 0
  %751 = vmatprep.subr.bf16.mxu0 0
  %752 = vmatpush1.bf16.msra.mxu0 0
  %753 = vmatprep.subr.bf16.mxu0 0
  %754 = vmatpush1.bf16.msra.mxu0 0
  %755 = vmatprep.subr.bf16.mxu0 0
  %756 = vmatpush1.bf16.msra.mxu0 0
  %757 = vmatprep.subr.bf16.mxu0 0
  %758 = vmatpush1.bf16.msra.mxu0 0
  %759 = vmatprep.subr.bf16.mxu0 0
  %760 = vmatpush1.bf16.msra.mxu0 0
  %761 = vmatprep.subr.bf16.mxu0 0
  %762 = vmatpush1.bf16.msra.mxu0 0
  %763 = vmatprep.subr.bf16.mxu0 0
  %764 = vmatpush1.bf16.msra.mxu0 0
  %765 = vmatprep.subr.bf16.mxu0 0
  %766 = vmatpush1.bf16.msra.mxu0 0
  %767 = vmatprep.mubr.bf16.mxu0 0
  %768 = vmatmul.mubr.bf16.gmra.mrb[0].mxu0 %v730
  %v769 = vpop.f32.mrb[0].mxu0
  %v770 = vadd.f32 0.0, %v769
  %v771 = vpop.f32.mrb[0].mxu0
  %v772 = vpop.f32.mrb[0].mxu0
  %v773 = vpop.f32.mrb[0].mxu0
  %774 = vdwg.mxu0
  %v775 = vpack.c.bf16 %v770, %v770
  %v777 = vsel %vm194, %v775, 0
  %v780 = vsel %vm258, %v72, 0
  %782 = vmatprep.subr.bf16.mxu0 0
  %783 = vmatpush1.bf16.msra.mxu0 %v780
  %784 = vmatprep.subr.bf16.mxu0 0
  %785 = vmatpush1.bf16.msra.mxu0 0
  %786 = vmatprep.subr.bf16.mxu0 0
  %787 = vmatpush1.bf16.msra.mxu0 0
  %788 = vmatprep.subr.bf16.mxu0 0
  %789 = vmatpush1.bf16.msra.mxu0 0
  %790 = vmatprep.subr.bf16.mxu0 0
  %791 = vmatpush1.bf16.msra.mxu0 0
  %792 = vmatprep.subr.bf16.mxu0 0
  %793 = vmatpush1.bf16.msra.mxu0 0
  %794 = vmatprep.subr.bf16.mxu0 0
  %795 = vmatpush1.bf16.msra.mxu0 0
  %796 = vmatprep.subr.bf16.mxu0 0
  %797 = vmatpush1.bf16.msra.mxu0 0
  %798 = vmatprep.subr.bf16.mxu0 0
  %799 = vmatpush1.bf16.msra.mxu0 0
  %800 = vmatprep.subr.bf16.mxu0 0
  %801 = vmatpush1.bf16.msra.mxu0 0
  %802 = vmatprep.subr.bf16.mxu0 0
  %803 = vmatpush1.bf16.msra.mxu0 0
  %804 = vmatprep.subr.bf16.mxu0 0
  %805 = vmatpush1.bf16.msra.mxu0 0
  %806 = vmatprep.subr.bf16.mxu0 0
  %807 = vmatpush1.bf16.msra.mxu0 0
  %808 = vmatprep.subr.bf16.mxu0 0
  %809 = vmatpush1.bf16.msra.mxu0 0
  %810 = vmatprep.subr.bf16.mxu0 0
  %811 = vmatpush1.bf16.msra.mxu0 0
  %812 = vmatprep.subr.bf16.mxu0 0
  %813 = vmatpush1.bf16.msra.mxu0 0
  %814 = vmatprep.mubr.bf16.mxu0 0
  %815 = vmatmul.mubr.bf16.gmra.mrb[0].mxu0 %v777
  %v816 = vpop.f32.mrb[0].mxu0
  %v817 = vadd.f32 0.0, %v816
  %v818 = vpop.f32.mrb[0].mxu0
  %v819 = vpop.f32.mrb[0].mxu0
  %v820 = vpop.f32.mrb[0].mxu0
  %821 = vdwg.mxu0
  %v822 = vadd.f32 %v664, %v817
  %v823 = vadd.f32 %v60, %v822
  %v825 = vlaneseq
  %v826 = vshrl.u32 %v825, 7
  %v827 = vsub.s32 0, %v826
  %v828 = vrot.slane %v73, %v827
  %v830 = vadd.f32 %v823, %v828
  %v831 = vsel %vm90, %v830, 0.0
  %832 = vadd.xlane.f32.xlu0 %v831
  %v833 = vpop.xlane.xlu0 %832
  %v834 = vmul.f32 %v833, %v97
  %v835 = vsub.f32 %v830, %v834
  %v836 = vmul.f32 %v835, %v835
  %v837 = vsel %vm90, %v836, 0.0
  %838 = vadd.xlane.f32.xlu0 %v837
  %v839 = vpop.xlane.xlu0 %838
  %v840 = vmul.f32 %v839, %v97
  %v841 = vadd.f32 %v840, 1e-05
  %v842 = vrsqrt.pop %v841
  %v843 = vmul.f32 %v835, %v842
  %v845 = vlaneseq
  %v846 = vshrl.u32 %v845, 7
  %v847 = vsub.s32 0, %v846
  %v848 = vrot.slane %v74, %v847
  %v850 = vmul.f32 %v843, %v848
  %v852 = vlaneseq
  %v853 = vshrl.u32 %v852, 7
  %v854 = vsub.s32 0, %v853
  %v855 = vrot.slane %v75, %v854
  %v857 = vadd.f32 %v850, %v855
  %v858 = vpack.c.bf16 %v857, %v857
  %v860 = vlaneseq
  %v861 = vshrl.u32 %v860, 7
  %v862 = vsub.s32 0, %v861
  %v863 = vrot.slane %v80, %v862
  %v869 = vunpack.c.l.b16 %v76
  %v870 = vunpack.c.l.b16 %v77
  %v871 = vunpack.c.l.b16 %v78
  %v872 = vunpack.c.l.b16 %v79
  %v873 = vpack.c.b16 %v870, %v869
  %v874 = vpack.c.b16 %v872, %v871
  %v878 = vsel %vm90, %v858, 0
  %880 = vmatprep.subr.bf16.mxu0 0
  %881 = vmatpush1.bf16.msra.mxu0 %v873
  %882 = vmatprep.subr.bf16.mxu0 0
  %883 = vmatpush1.bf16.msra.mxu0 %v874
  %884 = vmatprep.subr.bf16.mxu0 0
  %885 = vmatpush1.bf16.msra.mxu0 0
  %886 = vmatprep.subr.bf16.mxu0 0
  %887 = vmatpush1.bf16.msra.mxu0 0
  %888 = vmatprep.subr.bf16.mxu0 0
  %889 = vmatpush1.bf16.msra.mxu0 0
  %890 = vmatprep.subr.bf16.mxu0 0
  %891 = vmatpush1.bf16.msra.mxu0 0
  %892 = vmatprep.subr.bf16.mxu0 0
  %893 = vmatpush1.bf16.msra.mxu0 0
  %894 = vmatprep.subr.bf16.mxu0 0
  %895 = vmatpush1.bf16.msra.mxu0 0
  %896 = vmatprep.subr.bf16.mxu0 0
  %897 = vmatpush1.bf16.msra.mxu0 0
  %898 = vmatprep.subr.bf16.mxu0 0
  %899 = vmatpush1.bf16.msra.mxu0 0
  %900 = vmatprep.subr.bf16.mxu0 0
  %901 = vmatpush1.bf16.msra.mxu0 0
  %902 = vmatprep.subr.bf16.mxu0 0
  %903 = vmatpush1.bf16.msra.mxu0 0
  %904 = vmatprep.subr.bf16.mxu0 0
  %905 = vmatpush1.bf16.msra.mxu0 0
  %906 = vmatprep.subr.bf16.mxu0 0
  %907 = vmatpush1.bf16.msra.mxu0 0
  %908 = vmatprep.subr.bf16.mxu0 0
  %909 = vmatpush1.bf16.msra.mxu0 0
  %910 = vmatprep.subr.bf16.mxu0 0
  %911 = vmatpush1.bf16.msra.mxu0 0
  %912 = vmatprep.mubr.bf16.mxu0 0
  %913 = vmatmul.mubr.bf16.gmra.mrb[0].mxu0 %v878
  %v914 = vpop.f32.mrb[0].mxu0
  %v915 = vadd.f32 %v863, %v914
  %v916 = vpop.f32.mrb[0].mxu0
  %v917 = vpop.f32.mrb[0].mxu0
  %v918 = vpop.f32.mrb[0].mxu0
  %919 = vdwg.mxu0
  %v920 = vxor.u32 %v915, 2147483648
  %v921 = vmul.f32 %v920, 1.442695
  %v922 = vpow.pop %v921
  %v923 = vadd.f32 %v922, 1.0
  %v924 = vrcp.pop %v923
  %v925 = vmul.f32 1.0, %v924
  %927 = vrot.lane.b32.xlu0 %v925, 96
  %v928 = vpop.permute.xlu0 %927
  %v930 = vmul.f32 %v915, %v928
  %931 = vst.msk [vmem:[#allocation2 + $0x3] sm:$0xff] %vm90, %v930
  %v933 = vlaneseq
  %v934 = vshrl.u32 %v933, 7
  %v935 = vsub.s32 0, %v934
  %v936 = vrot.slane %v82, %v935
  %v938 = vld [vmem:[#allocation2] sm:$0xff]
  %v939 = vlaneseq
  %v940 = vshrl.u32 %v939, 7
  %v941 = vsub.s32 0, %v940
  %v942 = vrot.slane %v81, %v941
  %v943 = vmul.f32 %v938, %v942
  %v944 = vadd.f32 %v936, %v943
  %v945 = vld [vmem:[#allocation2 + $0x1] sm:$0xff]
  %v946 = vlaneseq
  %v947 = vshrl.u32 %v946, 7
  %v948 = vsub.s32 1, %v947
  %v949 = vrot.slane %v81, %v948
  %v950 = vmul.f32 %v945, %v949
  %v951 = vadd.f32 %v944, %v950
  %v952 = vld [vmem:[#allocation2 + $0x2] sm:$0xff]
  %v953 = vlaneseq
  %v954 = vshrl.u32 %v953, 7
  %v955 = vsub.s32 2, %v954
  %v956 = vrot.slane %v81, %v955
  %v957 = vmul.f32 %v952, %v956
  %v958 = vadd.f32 %v951, %v957
  %v959 = vld [vmem:[#allocation2 + $0x3] sm:$0xff]
  %v960 = vlaneseq
  %v961 = vshrl.u32 %v960, 7
  %v962 = vsub.s32 3, %v961
  %v963 = vrot.slane %v81, %v962
  %v964 = vmul.f32 %v959, %v963
  %v965 = vadd.f32 %v958, %v964
  %v966 = vld [vmem:[#allocation2 + $0x4] sm:$0xff]
  %v967 = vlaneseq
  %v968 = vshrl.u32 %v967, 7
  %v969 = vsub.s32 4, %v968
  %v970 = vrot.slane %v81, %v969
  %v971 = vmul.f32 %v966, %v970
  %v972 = vadd.f32 %v965, %v971
  %v973 = vld [vmem:[#allocation2 + $0x5] sm:$0xff]
  %v974 = vlaneseq
  %v975 = vshrl.u32 %v974, 7
  %v976 = vsub.s32 5, %v975
  %v977 = vrot.slane %v81, %v976
  %v978 = vmul.f32 %v973, %v977
  %v979 = vadd.f32 %v972, %v978
  %v980 = vld [vmem:[#allocation2 + $0x6] sm:$0xff]
  %v981 = vlaneseq
  %v982 = vshrl.u32 %v981, 7
  %v983 = vsub.s32 6, %v982
  %v984 = vrot.slane %v81, %v983
  %v985 = vmul.f32 %v980, %v984
  %v986 = vadd.f32 %v979, %v985
  %v988 = vlaneseq
  %v989 = vshrl.u32 %v988, 7
  %v990 = vsub.s32 0, %v989
  %v991 = vrot.slane %v83, %v990
  %v993 = vmul.f32 %v986, %v991
  %v995 = vlaneseq
  %v996 = vshrl.u32 %v995, 7
  %v997 = vsub.s32 0, %v996
  %v998 = vrot.slane %v84, %v997
  %v1000 = vadd.f32 %v993, %v998
  %v1001 = vxor.u32 %v1000, 2147483648
  %v1002 = vmul.f32 %v1001, 1.442695
  %v1003 = vpow.pop %v1002
  %v1004 = vadd.f32 %v1003, 1.0
  %v1005 = vrcp.pop %v1004
  %v1006 = vmul.f32 1.0, %v1005
  %v1007 = vmul.f32 %v1000, %v1006
  %v1008 = vpack.c.bf16 %v1007, %v1007
  %v1010 = vlaneseq
  %v1011 = vshrl.u32 %v1010, 7
  %v1012 = vsub.s32 0, %v1011
  %v1013 = vrot.slane %v89, %v1012
  %v1019 = vunpack.c.l.b16 %v85
  %v1020 = vunpack.c.l.b16 %v86
  %v1021 = vunpack.c.l.b16 %v87
  %v1022 = vunpack.c.l.b16 %v88
  %v1023 = vpack.c.b16 %v1020, %v1019
  %v1024 = vpack.c.b16 %v1022, %v1021
  %v1028 = vsel %vm90, %v1008, 0
  %1030 = vmatprep.subr.bf16.mxu0 0
  %1031 = vmatpush1.bf16.msra.mxu0 %v1023
  %1032 = vmatprep.subr.bf16.mxu0 0
  %1033 = vmatpush1.bf16.msra.mxu0 %v1024
  %1034 = vmatprep.subr.bf16.mxu0 0
  %1035 = vmatpush1.bf16.msra.mxu0 0
  %1036 = vmatprep.subr.bf16.mxu0 0
  %1037 = vmatpush1.bf16.msra.mxu0 0
  %1038 = vmatprep.subr.bf16.mxu0 0
  %1039 = vmatpush1.bf16.msra.mxu0 0
  %1040 = vmatprep.subr.bf16.mxu0 0
  %1041 = vmatpush1.bf16.msra.mxu0 0
  %1042 = vmatprep.subr.bf16.mxu0 0
  %1043 = vmatpush1.bf16.msra.mxu0 0
  %1044 = vmatprep.subr.bf16.mxu0 0
  %1045 = vmatpush1.bf16.msra.mxu0 0
  %1046 = vmatprep.subr.bf16.mxu0 0
  %1047 = vmatpush1.bf16.msra.mxu0 0
  %1048 = vmatprep.subr.bf16.mxu0 0
  %1049 = vmatpush1.bf16.msra.mxu0 0
  %1050 = vmatprep.subr.bf16.mxu0 0
  %1051 = vmatpush1.bf16.msra.mxu0 0
  %1052 = vmatprep.subr.bf16.mxu0 0
  %1053 = vmatpush1.bf16.msra.mxu0 0
  %1054 = vmatprep.subr.bf16.mxu0 0
  %1055 = vmatpush1.bf16.msra.mxu0 0
  %1056 = vmatprep.subr.bf16.mxu0 0
  %1057 = vmatpush1.bf16.msra.mxu0 0
  %1058 = vmatprep.subr.bf16.mxu0 0
  %1059 = vmatpush1.bf16.msra.mxu0 0
  %1060 = vmatprep.subr.bf16.mxu0 0
  %1061 = vmatpush1.bf16.msra.mxu0 0
  %1062 = vmatprep.mubr.bf16.mxu0 0
  %1063 = vmatmul.mubr.bf16.gmra.mrb[0].mxu0 %v1028
  %v1064 = vpop.f32.mrb[0].mxu0
  %v1065 = vadd.f32 %v1013, %v1064
  %v1066 = vpop.f32.mrb[0].mxu0
  %v1067 = vpop.f32.mrb[0].mxu0
  %v1068 = vpop.f32.mrb[0].mxu0
  %1069 = vdwg.mxu0
  %v1070 = vadd.f32 %v830, %v1065
  %1072 = vrot.lane.b32.xlu0 %v60, 96
  %v1073 = vpop.permute.xlu0 %1072
  %v1075 = vsel %vm90, %v1073, 0.0
  %1076 = vadd.xlane.f32.xlu0 %v1075
  %v1077 = vpop.xlane.xlu0 %1076
  %v1078 = vmul.f32 %v1077, %v97
  %v1079 = vsub.f32 %v60, %v1078
  %v1080 = vmul.f32 %v1079, %v1079
  %1082 = vrot.lane.b32.xlu0 %v1080, 96
  %v1083 = vpop.permute.xlu0 %1082
  %v1085 = vsel %vm90, %v1083, 0.0
  %1086 = vadd.xlane.f32.xlu0 %v1085
  %v1087 = vpop.xlane.xlu0 %1086
  %v1088 = vmul.f32 %v1087, %v97
  %v1089 = vadd.f32 %v1088, 1e-05
  %v1090 = vrsqrt.pop %v1089
  %v1091 = vmul.f32 %v1079, %v1090
  %1092 = vrot.lane.b32.xlu0 %v112, 32
  %v1093 = vpop.permute.xlu0 %1092
  %v1095 = vmul.f32 %v1091, %v1093
  %1096 = vrot.lane.b32.xlu0 %v119, 32
  %v1097 = vpop.permute.xlu0 %1096
  %v1099 = vadd.f32 %v1095, %v1097
  %v1100 = vpack.c.bf16 %v1099, %v1099
  %1102 = vrot.lane.b32.xlu0 %v1100, 96
  %v1103 = vpop.permute.xlu0 %1102
  %v1105 = vsel %vm90, %v1103, 0
  %1107 = vmatprep.subr.bf16.mxu0 0
  %1108 = vmatpush1.bf16.msra.mxu0 %v137
  %1109 = vmatprep.subr.bf16.mxu0 0
  %1110 = vmatpush1.bf16.msra.mxu0 %v138
  %1111 = vmatprep.subr.bf16.mxu0 0
  %1112 = vmatpush1.bf16.msra.mxu0 0
  %1113 = vmatprep.subr.bf16.mxu0 0
  %1114 = vmatpush1.bf16.msra.mxu0 0
  %1115 = vmatprep.subr.bf16.mxu0 0
  %1116 = vmatpush1.bf16.msra.mxu0 0
  %1117 = vmatprep.subr.bf16.mxu0 0
  %1118 = vmatpush1.bf16.msra.mxu0 0
  %1119 = vmatprep.subr.bf16.mxu0 0
  %1120 = vmatpush1.bf16.msra.mxu0 0
  %1121 = vmatprep.subr.bf16.mxu0 0
  %1122 = vmatpush1.bf16.msra.mxu0 0
  %1123 = vmatprep.subr.bf16.mxu0 0
  %1124 = vmatpush1.bf16.msra.mxu0 0
  %1125 = vmatprep.subr.bf16.mxu0 0
  %1126 = vmatpush1.bf16.msra.mxu0 0
  %1127 = vmatprep.subr.bf16.mxu0 0
  %1128 = vmatpush1.bf16.msra.mxu0 0
  %1129 = vmatprep.subr.bf16.mxu0 0
  %1130 = vmatpush1.bf16.msra.mxu0 0
  %1131 = vmatprep.subr.bf16.mxu0 0
  %1132 = vmatpush1.bf16.msra.mxu0 0
  %1133 = vmatprep.subr.bf16.mxu0 0
  %1134 = vmatpush1.bf16.msra.mxu0 0
  %1135 = vmatprep.subr.bf16.mxu0 0
  %1136 = vmatpush1.bf16.msra.mxu0 0
  %1137 = vmatprep.subr.bf16.mxu0 0
  %1138 = vmatpush1.bf16.msra.mxu0 0
  %1139 = vmatprep.mubr.bf16.mxu0 0
  %1140 = vmatmul.mubr.bf16.gmra.mrb[0].mxu0 %v1105
  %v1141 = vpop.f32.mrb[0].mxu0
  %v1142 = vadd.f32 %v127, %v1141
  %v1143 = vpop.f32.mrb[0].mxu0
  %v1144 = vpop.f32.mrb[0].mxu0
  %v1145 = vpop.f32.mrb[0].mxu0
  %1146 = vdwg.mxu0
  %v1147 = vmul.f32 %v1142, 0.35355338
  %v1148 = vpack.c.bf16 %v1147, %v1147
  %v1149 = vpack.c.bf16 %v1142, %v1142
  %v1150 = vlaneseq
  %v1151 = vshrl.u32 %v1150, 7
  %v1152 = vsub.s32 1, %v1151
  %v1153 = vrot.slane %v61, %v1152
  %1155 = vrot.lane.b32.xlu0 %v1149, 96
  %v1156 = vpop.permute.xlu0 %1155
  %v1158 = vsel %vm194, %v1148, 0
  %v1161 = vsel %vm194, %v1156, 0
  %1163 = vmatprep.subr.bf16.mxu0 0
  %1164 = vmatpush1.bf16.xpose.msra.mxu0 %v1161
  %1165 = vmatprep.subr.bf16.mxu0 0
  %1166 = vmatpush1.bf16.xpose.msra.mxu0 0
  %1167 = vmatprep.subr.bf16.mxu0 0
  %1168 = vmatpush1.bf16.xpose.msra.mxu0 0
  %1169 = vmatprep.subr.bf16.mxu0 0
  %1170 = vmatpush1.bf16.xpose.msra.mxu0 0
  %1171 = vmatprep.subr.bf16.mxu0 0
  %1172 = vmatpush1.bf16.xpose.msra.mxu0 0
  %1173 = vmatprep.subr.bf16.mxu0 0
  %1174 = vmatpush1.bf16.xpose.msra.mxu0 0
  %1175 = vmatprep.subr.bf16.mxu0 0
  %1176 = vmatpush1.bf16.xpose.msra.mxu0 0
  %1177 = vmatprep.subr.bf16.mxu0 0
  %1178 = vmatpush1.bf16.xpose.msra.mxu0 0
  %1179 = vmatprep.subr.bf16.mxu0 0
  %1180 = vmatpush1.bf16.xpose.msra.mxu0 0
  %1181 = vmatprep.subr.bf16.mxu0 0
  %1182 = vmatpush1.bf16.xpose.msra.mxu0 0
  %1183 = vmatprep.subr.bf16.mxu0 0
  %1184 = vmatpush1.bf16.xpose.msra.mxu0 0
  %1185 = vmatprep.subr.bf16.mxu0 0
  %1186 = vmatpush1.bf16.xpose.msra.mxu0 0
  %1187 = vmatprep.subr.bf16.mxu0 0
  %1188 = vmatpush1.bf16.xpose.msra.mxu0 0
  %1189 = vmatprep.subr.bf16.mxu0 0
  %1190 = vmatpush1.bf16.xpose.msra.mxu0 0
  %1191 = vmatprep.subr.bf16.mxu0 0
  %1192 = vmatpush1.bf16.xpose.msra.mxu0 0
  %1193 = vmatprep.subr.bf16.mxu0 0
  %1194 = vmatpush1.bf16.xpose.msra.mxu0 0
  %1195 = vmatprep.mubr.bf16.mxu0 0
  %1196 = vmatmul.mubr.bf16.gmra.mrb[0].mxu0 %v1158
  %v1197 = vpop.f32.mrb[0].mxu0
  %v1198 = vadd.f32 %v1153, %v1197
  %v1199 = vpop.f32.mrb[0].mxu0
  %v1200 = vpop.f32.mrb[0].mxu0
  %v1201 = vpop.f32.mrb[0].mxu0
  %1202 = vdwg.mxu0
  %v1203 = vsel %vm194, %v1198, -inf
  %1204 = vmax.xlane.f32.xlu0 %v1203
  %v1205 = vpop.xlane.xlu0 %1204
  %v1206 = vsub.f32 %v1198, %v1205
  %v1207 = vmul.f32 %v1206, 1.442695
  %v1208 = vpow.pop %v1207
  %v1209 = vsel %vm194, %v1208, 0.0
  %1210 = vadd.xlane.f32.xlu0 %v1209
  %v1211 = vpop.xlane.xlu0 %1210
  %v1212 = vrcp.pop %v1211
  %v1213 = vmul.f32 %v1208, %v1212
  %v1214 = vpack.c.bf16 %v1213, %v1213
  %1215 = vrot.lane.b32.xlu0 %v1149, 64
  %v1216 = vpop.permute.xlu0 %1215
  %v1218 = vsel %vm194, %v1214, 0
  %v1221 = vsel %vm258, %v1216, 0
  %1223 = vmatprep.subr.bf16.mxu0 0
  %1224 = vmatpush1.bf16.msra.mxu0 %v1221
  %1225 = vmatprep.subr.bf16.mxu0 0
  %1226 = vmatpush1.bf16.msra.mxu0 0
  %1227 = vmatprep.subr.bf16.mxu0 0
  %1228 = vmatpush1.bf16.msra.mxu0 0
  %1229 = vmatprep.subr.bf16.mxu0 0
  %1230 = vmatpush1.bf16.msra.mxu0 0
  %1231 = vmatprep.subr.bf16.mxu0 0
  %1232 = vmatpush1.bf16.msra.mxu0 0
  %1233 = vmatprep.subr.bf16.mxu0 0
  %1234 = vmatpush1.bf16.msra.mxu0 0
  %1235 = vmatprep.subr.bf16.mxu0 0
  %1236 = vmatpush1.bf16.msra.mxu0 0
  %1237 = vmatprep.subr.bf16.mxu0 0
  %1238 = vmatpush1.bf16.msra.mxu0 0
  %1239 = vmatprep.subr.bf16.mxu0 0
  %1240 = vmatpush1.bf16.msra.mxu0 0
  %1241 = vmatprep.subr.bf16.mxu0 0
  %1242 = vmatpush1.bf16.msra.mxu0 0
  %1243 = vmatprep.subr.bf16.mxu0 0
  %1244 = vmatpush1.bf16.msra.mxu0 0
  %1245 = vmatprep.subr.bf16.mxu0 0
  %1246 = vmatpush1.bf16.msra.mxu0 0
  %1247 = vmatprep.subr.bf16.mxu0 0
  %1248 = vmatpush1.bf16.msra.mxu0 0
  %1249 = vmatprep.subr.bf16.mxu0 0
  %1250 = vmatpush1.bf16.msra.mxu0 0
  %1251 = vmatprep.subr.bf16.mxu0 0
  %1252 = vmatpush1.bf16.msra.mxu0 0
  %1253 = vmatprep.subr.bf16.mxu0 0
  %1254 = vmatpush1.bf16.msra.mxu0 0
  %1255 = vmatprep.mubr.bf16.mxu0 0
  %1256 = vmatmul.mubr.bf16.gmra.mrb[0].mxu0 %v1218
  %v1257 = vpop.f32.mrb[0].mxu0
  %v1258 = vadd.f32 0.0, %v1257
  %v1259 = vpop.f32.mrb[0].mxu0
  %v1260 = vpop.f32.mrb[0].mxu0
  %v1261 = vpop.f32.mrb[0].mxu0
  %1262 = vdwg.mxu0
  %v1263 = vpack.c.bf16 %v1258, %v1258
  %1265 = vrot.lane.b32.xlu0 %v1148, 120
  %v1266 = vpop.permute.xlu0 %1265
  %1267 = vrot.lane.b32.xlu0 %v1149, 88
  %v1268 = vpop.permute.xlu0 %1267
  %v1270 = vsel %vm194, %v1266, 0
  %v1273 = vsel %vm194, %v1268, 0
  %1275 = vmatprep.subr.bf16.mxu0 0
  %1276 = vmatpush1.bf16.xpose.msra.mxu0 %v1273
  %1277 = vmatprep.subr.bf16.mxu0 0
  %1278 = vmatpush1.bf16.xpose.msra.mxu0 0
  %1279 = vmatprep.subr.bf16.mxu0 0
  %1280 = vmatpush1.bf16.xpose.msra.mxu0 0
  %1281 = vmatprep.subr.bf16.mxu0 0
  %1282 = vmatpush1.bf16.xpose.msra.mxu0 0
  %1283 = vmatprep.subr.bf16.mxu0 0
  %1284 = vmatpush1.bf16.xpose.msra.mxu0 0
  %1285 = vmatprep.subr.bf16.mxu0 0
  %1286 = vmatpush1.bf16.xpose.msra.mxu0 0
  %1287 = vmatprep.subr.bf16.mxu0 0
  %1288 = vmatpush1.bf16.xpose.msra.mxu0 0
  %1289 = vmatprep.subr.bf16.mxu0 0
  %1290 = vmatpush1.bf16.xpose.msra.mxu0 0
  %1291 = vmatprep.subr.bf16.mxu0 0
  %1292 = vmatpush1.bf16.xpose.msra.mxu0 0
  %1293 = vmatprep.subr.bf16.mxu0 0
  %1294 = vmatpush1.bf16.xpose.msra.mxu0 0
  %1295 = vmatprep.subr.bf16.mxu0 0
  %1296 = vmatpush1.bf16.xpose.msra.mxu0 0
  %1297 = vmatprep.subr.bf16.mxu0 0
  %1298 = vmatpush1.bf16.xpose.msra.mxu0 0
  %1299 = vmatprep.subr.bf16.mxu0 0
  %1300 = vmatpush1.bf16.xpose.msra.mxu0 0
  %1301 = vmatprep.subr.bf16.mxu0 0
  %1302 = vmatpush1.bf16.xpose.msra.mxu0 0
  %1303 = vmatprep.subr.bf16.mxu0 0
  %1304 = vmatpush1.bf16.xpose.msra.mxu0 0
  %1305 = vmatprep.subr.bf16.mxu0 0
  %1306 = vmatpush1.bf16.xpose.msra.mxu0 0
  %1307 = vmatprep.mubr.bf16.mxu0 0
  %1308 = vmatmul.mubr.bf16.gmra.mrb[0].mxu0 %v1270
  %v1309 = vpop.f32.mrb[0].mxu0
  %v1310 = vadd.f32 %v1153, %v1309
  %v1311 = vpop.f32.mrb[0].mxu0
  %v1312 = vpop.f32.mrb[0].mxu0
  %v1313 = vpop.f32.mrb[0].mxu0
  %1314 = vdwg.mxu0
  %v1315 = vsel %vm194, %v1310, -inf
  %1316 = vmax.xlane.f32.xlu0 %v1315
  %v1317 = vpop.xlane.xlu0 %1316
  %v1318 = vsub.f32 %v1310, %v1317
  %v1319 = vmul.f32 %v1318, 1.442695
  %v1320 = vpow.pop %v1319
  %v1321 = vsel %vm194, %v1320, 0.0
  %1322 = vadd.xlane.f32.xlu0 %v1321
  %v1323 = vpop.xlane.xlu0 %1322
  %v1324 = vrcp.pop %v1323
  %v1325 = vmul.f32 %v1320, %v1324
  %v1326 = vpack.c.bf16 %v1325, %v1325
  %1327 = vrot.lane.b32.xlu0 %v1149, 56
  %v1328 = vpop.permute.xlu0 %1327
  %v1330 = vsel %vm194, %v1326, 0
  %v1333 = vsel %vm258, %v1328, 0
  %1335 = vmatprep.subr.bf16.mxu0 0
  %1336 = vmatpush1.bf16.msra.mxu0 %v1333
  %1337 = vmatprep.subr.bf16.mxu0 0
  %1338 = vmatpush1.bf16.msra.mxu0 0
  %1339 = vmatprep.subr.bf16.mxu0 0
  %1340 = vmatpush1.bf16.msra.mxu0 0
  %1341 = vmatprep.subr.bf16.mxu0 0
  %1342 = vmatpush1.bf16.msra.mxu0 0
  %1343 = vmatprep.subr.bf16.mxu0 0
  %1344 = vmatpush1.bf16.msra.mxu0 0
  %1345 = vmatprep.subr.bf16.mxu0 0
  %1346 = vmatpush1.bf16.msra.mxu0 0
  %1347 = vmatprep.subr.bf16.mxu0 0
  %1348 = vmatpush1.bf16.msra.mxu0 0
  %1349 = vmatprep.subr.bf16.mxu0 0
  %1350 = vmatpush1.bf16.msra.mxu0 0
  %1351 = vmatprep.subr.bf16.mxu0 0
  %1352 = vmatpush1.bf16.msra.mxu0 0
  %1353 = vmatprep.subr.bf16.mxu0 0
  %1354 = vmatpush1.bf16.msra.mxu0 0
  %1355 = vmatprep.subr.bf16.mxu0 0
  %1356 = vmatpush1.bf16.msra.mxu0 0
  %1357 = vmatprep.subr.bf16.mxu0 0
  %1358 = vmatpush1.bf16.msra.mxu0 0
  %1359 = vmatprep.subr.bf16.mxu0 0
  %1360 = vmatpush1.bf16.msra.mxu0 0
  %1361 = vmatprep.subr.bf16.mxu0 0
  %1362 = vmatpush1.bf16.msra.mxu0 0
  %1363 = vmatprep.subr.bf16.mxu0 0
  %1364 = vmatpush1.bf16.msra.mxu0 0
  %1365 = vmatprep.subr.bf16.mxu0 0
  %1366 = vmatpush1.bf16.msra.mxu0 0
  %1367 = vmatprep.mubr.bf16.mxu0 0
  %1368 = vmatmul.mubr.bf16.gmra.mrb[0].mxu0 %v1330
  %v1369 = vpop.f32.mrb[0].mxu0
  %v1370 = vadd.f32 0.0, %v1369
  %v1371 = vpop.f32.mrb[0].mxu0
  %v1372 = vpop.f32.mrb[0].mxu0
  %v1373 = vpop.f32.mrb[0].mxu0
  %1374 = vdwg.mxu0
  %v1375 = vpack.c.bf16 %v1370, %v1370
  %v1377 = vsel %vm194, %v1375, 0
  %1379 = vmatprep.subr.bf16.mxu0 0
  %1380 = vmatpush1.bf16.msra.mxu0 %v419
  %1381 = vmatprep.subr.bf16.mxu0 0
  %1382 = vmatpush1.bf16.msra.mxu0 0
  %1383 = vmatprep.subr.bf16.mxu0 0
  %1384 = vmatpush1.bf16.msra.mxu0 0
  %1385 = vmatprep.subr.bf16.mxu0 0
  %1386 = vmatpush1.bf16.msra.mxu0 0
  %1387 = vmatprep.subr.bf16.mxu0 0
  %1388 = vmatpush1.bf16.msra.mxu0 0
  %1389 = vmatprep.subr.bf16.mxu0 0
  %1390 = vmatpush1.bf16.msra.mxu0 0
  %1391 = vmatprep.subr.bf16.mxu0 0
  %1392 = vmatpush1.bf16.msra.mxu0 0
  %1393 = vmatprep.subr.bf16.mxu0 0
  %1394 = vmatpush1.bf16.msra.mxu0 0
  %1395 = vmatprep.subr.bf16.mxu0 0
  %1396 = vmatpush1.bf16.msra.mxu0 0
  %1397 = vmatprep.subr.bf16.mxu0 0
  %1398 = vmatpush1.bf16.msra.mxu0 0
  %1399 = vmatprep.subr.bf16.mxu0 0
  %1400 = vmatpush1.bf16.msra.mxu0 0
  %1401 = vmatprep.subr.bf16.mxu0 0
  %1402 = vmatpush1.bf16.msra.mxu0 0
  %1403 = vmatprep.subr.bf16.mxu0 0
  %1404 = vmatpush1.bf16.msra.mxu0 0
  %1405 = vmatprep.subr.bf16.mxu0 0
  %1406 = vmatpush1.bf16.msra.mxu0 0
  %1407 = vmatprep.subr.bf16.mxu0 0
  %1408 = vmatpush1.bf16.msra.mxu0 0
  %1409 = vmatprep.subr.bf16.mxu0 0
  %1410 = vmatpush1.bf16.msra.mxu0 0
  %1411 = vmatprep.mubr.bf16.mxu0 0
  %1412 = vmatmul.mubr.bf16.gmra.mrb[0].mxu0 %v1377
  %v1413 = vpop.f32.mrb[0].mxu0
  %v1414 = vadd.f32 0.0, %v1413
  %v1415 = vpop.f32.mrb[0].mxu0
  %v1416 = vpop.f32.mrb[0].mxu0
  %v1417 = vpop.f32.mrb[0].mxu0
  %1418 = vdwg.mxu0
  %v1420 = vsel %vm194, %v1263, 0
  %1422 = vmatprep.subr.bf16.mxu0 0
  %1423 = vmatpush1.bf16.msra.mxu0 %v465
  %1424 = vmatprep.subr.bf16.mxu0 0
  %1425 = vmatpush1.bf16.msra.mxu0 0
  %1426 = vmatprep.subr.bf16.mxu0 0
  %1427 = vmatpush1.bf16.msra.mxu0 0
  %1428 = vmatprep.subr.bf16.mxu0 0
  %1429 = vmatpush1.bf16.msra.mxu0 0
  %1430 = vmatprep.subr.bf16.mxu0 0
  %1431 = vmatpush1.bf16.msra.mxu0 0
  %1432 = vmatprep.subr.bf16.mxu0 0
  %1433 = vmatpush1.bf16.msra.mxu0 0
  %1434 = vmatprep.subr.bf16.mxu0 0
  %1435 = vmatpush1.bf16.msra.mxu0 0
  %1436 = vmatprep.subr.bf16.mxu0 0
  %1437 = vmatpush1.bf16.msra.mxu0 0
  %1438 = vmatprep.subr.bf16.mxu0 0
  %1439 = vmatpush1.bf16.msra.mxu0 0
  %1440 = vmatprep.subr.bf16.mxu0 0
  %1441 = vmatpush1.bf16.msra.mxu0 0
  %1442 = vmatprep.subr.bf16.mxu0 0
  %1443 = vmatpush1.bf16.msra.mxu0 0
  %1444 = vmatprep.subr.bf16.mxu0 0
  %1445 = vmatpush1.bf16.msra.mxu0 0
  %1446 = vmatprep.subr.bf16.mxu0 0
  %1447 = vmatpush1.bf16.msra.mxu0 0
  %1448 = vmatprep.subr.bf16.mxu0 0
  %1449 = vmatpush1.bf16.msra.mxu0 0
  %1450 = vmatprep.subr.bf16.mxu0 0
  %1451 = vmatpush1.bf16.msra.mxu0 0
  %1452 = vmatprep.subr.bf16.mxu0 0
  %1453 = vmatpush1.bf16.msra.mxu0 0
  %1454 = vmatprep.mubr.bf16.mxu0 0
  %1455 = vmatmul.mubr.bf16.gmra.mrb[0].mxu0 %v1420
  %v1456 = vpop.f32.mrb[0].mxu0
  %v1457 = vadd.f32 %v1414, %v1456
  %v1458 = vpop.f32.mrb[0].mxu0
  %v1459 = vpop.f32.mrb[0].mxu0
  %v1460 = vpop.f32.mrb[0].mxu0
  %1461 = vdwg.mxu0
  %1462 = vrot.lane.b32.xlu0 %v1148, 112
  %v1463 = vpop.permute.xlu0 %1462
  %1464 = vrot.lane.b32.xlu0 %v1149, 80
  %v1465 = vpop.permute.xlu0 %1464
  %v1467 = vsel %vm194, %v1463, 0
  %v1470 = vsel %vm194, %v1465, 0
  %1472 = vmatprep.subr.bf16.mxu0 0
  %1473 = vmatpush1.bf16.xpose.msra.mxu0 %v1470
  %1474 = vmatprep.subr.bf16.mxu0 0
  %1475 = vmatpush1.bf16.xpose.msra.mxu0 0
  %1476 = vmatprep.subr.bf16.mxu0 0
  %1477 = vmatpush1.bf16.xpose.msra.mxu0 0
  %1478 = vmatprep.subr.bf16.mxu0 0
  %1479 = vmatpush1.bf16.xpose.msra.mxu0 0
  %1480 = vmatprep.subr.bf16.mxu0 0
  %1481 = vmatpush1.bf16.xpose.msra.mxu0 0
  %1482 = vmatprep.subr.bf16.mxu0 0
  %1483 = vmatpush1.bf16.xpose.msra.mxu0 0
  %1484 = vmatprep.subr.bf16.mxu0 0
  %1485 = vmatpush1.bf16.xpose.msra.mxu0 0
  %1486 = vmatprep.subr.bf16.mxu0 0
  %1487 = vmatpush1.bf16.xpose.msra.mxu0 0
  %1488 = vmatprep.subr.bf16.mxu0 0
  %1489 = vmatpush1.bf16.xpose.msra.mxu0 0
  %1490 = vmatprep.subr.bf16.mxu0 0
  %1491 = vmatpush1.bf16.xpose.msra.mxu0 0
  %1492 = vmatprep.subr.bf16.mxu0 0
  %1493 = vmatpush1.bf16.xpose.msra.mxu0 0
  %1494 = vmatprep.subr.bf16.mxu0 0
  %1495 = vmatpush1.bf16.xpose.msra.mxu0 0
  %1496 = vmatprep.subr.bf16.mxu0 0
  %1497 = vmatpush1.bf16.xpose.msra.mxu0 0
  %1498 = vmatprep.subr.bf16.mxu0 0
  %1499 = vmatpush1.bf16.xpose.msra.mxu0 0
  %1500 = vmatprep.subr.bf16.mxu0 0
  %1501 = vmatpush1.bf16.xpose.msra.mxu0 0
  %1502 = vmatprep.subr.bf16.mxu0 0
  %1503 = vmatpush1.bf16.xpose.msra.mxu0 0
  %1504 = vmatprep.mubr.bf16.mxu0 0
  %1505 = vmatmul.mubr.bf16.gmra.mrb[0].mxu0 %v1467
  %v1506 = vpop.f32.mrb[0].mxu0
  %v1507 = vadd.f32 %v1153, %v1506
  %v1508 = vpop.f32.mrb[0].mxu0
  %v1509 = vpop.f32.mrb[0].mxu0
  %v1510 = vpop.f32.mrb[0].mxu0
  %1511 = vdwg.mxu0
  %v1512 = vsel %vm194, %v1507, -inf
  %1513 = vmax.xlane.f32.xlu0 %v1512
  %v1514 = vpop.xlane.xlu0 %1513
  %v1515 = vsub.f32 %v1507, %v1514
  %v1516 = vmul.f32 %v1515, 1.442695
  %v1517 = vpow.pop %v1516
  %v1518 = vsel %vm194, %v1517, 0.0
  %1519 = vadd.xlane.f32.xlu0 %v1518
  %v1520 = vpop.xlane.xlu0 %1519
  %v1521 = vrcp.pop %v1520
  %v1522 = vmul.f32 %v1517, %v1521
  %v1523 = vpack.c.bf16 %v1522, %v1522
  %1524 = vrot.lane.b32.xlu0 %v1149, 48
  %v1525 = vpop.permute.xlu0 %1524
  %v1527 = vsel %vm194, %v1523, 0
  %v1530 = vsel %vm258, %v1525, 0
  %1532 = vmatprep.subr.bf16.mxu0 0
  %1533 = vmatpush1.bf16.msra.mxu0 %v1530
  %1534 = vmatprep.subr.bf16.mxu0 0
  %1535 = vmatpush1.bf16.msra.mxu0 0
  %1536 = vmatprep.subr.bf16.mxu0 0
  %1537 = vmatpush1.bf16.msra.mxu0 0
  %1538 = vmatprep.subr.bf16.mxu0 0
  %1539 = vmatpush1.bf16.msra.mxu0 0
  %1540 = vmatprep.subr.bf16.mxu0 0
  %1541 = vmatpush1.bf16.msra.mxu0 0
  %1542 = vmatprep.subr.bf16.mxu0 0
  %1543 = vmatpush1.bf16.msra.mxu0 0
  %1544 = vmatprep.subr.bf16.mxu0 0
  %1545 = vmatpush1.bf16.msra.mxu0 0
  %1546 = vmatprep.subr.bf16.mxu0 0
  %1547 = vmatpush1.bf16.msra.mxu0 0
  %1548 = vmatprep.subr.bf16.mxu0 0
  %1549 = vmatpush1.bf16.msra.mxu0 0
  %1550 = vmatprep.subr.bf16.mxu0 0
  %1551 = vmatpush1.bf16.msra.mxu0 0
  %1552 = vmatprep.subr.bf16.mxu0 0
  %1553 = vmatpush1.bf16.msra.mxu0 0
  %1554 = vmatprep.subr.bf16.mxu0 0
  %1555 = vmatpush1.bf16.msra.mxu0 0
  %1556 = vmatprep.subr.bf16.mxu0 0
  %1557 = vmatpush1.bf16.msra.mxu0 0
  %1558 = vmatprep.subr.bf16.mxu0 0
  %1559 = vmatpush1.bf16.msra.mxu0 0
  %1560 = vmatprep.subr.bf16.mxu0 0
  %1561 = vmatpush1.bf16.msra.mxu0 0
  %1562 = vmatprep.subr.bf16.mxu0 0
  %1563 = vmatpush1.bf16.msra.mxu0 0
  %1564 = vmatprep.mubr.bf16.mxu0 0
  %1565 = vmatmul.mubr.bf16.gmra.mrb[0].mxu0 %v1527
  %v1566 = vpop.f32.mrb[0].mxu0
  %v1567 = vadd.f32 0.0, %v1566
  %v1568 = vpop.f32.mrb[0].mxu0
  %v1569 = vpop.f32.mrb[0].mxu0
  %v1570 = vpop.f32.mrb[0].mxu0
  %1571 = vdwg.mxu0
  %v1572 = vpack.c.bf16 %v1567, %v1567
  %v1574 = vsel %vm194, %v1572, 0
  %1576 = vmatprep.subr.bf16.mxu0 0
  %1577 = vmatpush1.bf16.msra.mxu0 %v622
  %1578 = vmatprep.subr.bf16.mxu0 0
  %1579 = vmatpush1.bf16.msra.mxu0 0
  %1580 = vmatprep.subr.bf16.mxu0 0
  %1581 = vmatpush1.bf16.msra.mxu0 0
  %1582 = vmatprep.subr.bf16.mxu0 0
  %1583 = vmatpush1.bf16.msra.mxu0 0
  %1584 = vmatprep.subr.bf16.mxu0 0
  %1585 = vmatpush1.bf16.msra.mxu0 0
  %1586 = vmatprep.subr.bf16.mxu0 0
  %1587 = vmatpush1.bf16.msra.mxu0 0
  %1588 = vmatprep.subr.bf16.mxu0 0
  %1589 = vmatpush1.bf16.msra.mxu0 0
  %1590 = vmatprep.subr.bf16.mxu0 0
  %1591 = vmatpush1.bf16.msra.mxu0 0
  %1592 = vmatprep.subr.bf16.mxu0 0
  %1593 = vmatpush1.bf16.msra.mxu0 0
  %1594 = vmatprep.subr.bf16.mxu0 0
  %1595 = vmatpush1.bf16.msra.mxu0 0
  %1596 = vmatprep.subr.bf16.mxu0 0
  %1597 = vmatpush1.bf16.msra.mxu0 0
  %1598 = vmatprep.subr.bf16.mxu0 0
  %1599 = vmatpush1.bf16.msra.mxu0 0
  %1600 = vmatprep.subr.bf16.mxu0 0
  %1601 = vmatpush1.bf16.msra.mxu0 0
  %1602 = vmatprep.subr.bf16.mxu0 0
  %1603 = vmatpush1.bf16.msra.mxu0 0
  %1604 = vmatprep.subr.bf16.mxu0 0
  %1605 = vmatpush1.bf16.msra.mxu0 0
  %1606 = vmatprep.subr.bf16.mxu0 0
  %1607 = vmatpush1.bf16.msra.mxu0 0
  %1608 = vmatprep.mubr.bf16.mxu0 0
  %1609 = vmatmul.mubr.bf16.gmra.mrb[0].mxu0 %v1574
  %v1610 = vpop.f32.mrb[0].mxu0
  %v1611 = vadd.f32 0.0, %v1610
  %v1612 = vpop.f32.mrb[0].mxu0
  %v1613 = vpop.f32.mrb[0].mxu0
  %v1614 = vpop.f32.mrb[0].mxu0
  %1615 = vdwg.mxu0
  %v1616 = vadd.f32 %v1457, %v1611
  %1617 = vrot.lane.b32.xlu0 %v1148, 104
  %v1618 = vpop.permute.xlu0 %1617
  %1619 = vrot.lane.b32.xlu0 %v1149, 72
  %v1620 = vpop.permute.xlu0 %1619
  %v1622 = vsel %vm194, %v1618, 0
  %v1625 = vsel %vm194, %v1620, 0
  %1627 = vmatprep.subr.bf16.mxu0 0
  %1628 = vmatpush1.bf16.xpose.msra.mxu0 %v1625
  %1629 = vmatprep.subr.bf16.mxu0 0
  %1630 = vmatpush1.bf16.xpose.msra.mxu0 0
  %1631 = vmatprep.subr.bf16.mxu0 0
  %1632 = vmatpush1.bf16.xpose.msra.mxu0 0
  %1633 = vmatprep.subr.bf16.mxu0 0
  %1634 = vmatpush1.bf16.xpose.msra.mxu0 0
  %1635 = vmatprep.subr.bf16.mxu0 0
  %1636 = vmatpush1.bf16.xpose.msra.mxu0 0
  %1637 = vmatprep.subr.bf16.mxu0 0
  %1638 = vmatpush1.bf16.xpose.msra.mxu0 0
  %1639 = vmatprep.subr.bf16.mxu0 0
  %1640 = vmatpush1.bf16.xpose.msra.mxu0 0
  %1641 = vmatprep.subr.bf16.mxu0 0
  %1642 = vmatpush1.bf16.xpose.msra.mxu0 0
  %1643 = vmatprep.subr.bf16.mxu0 0
  %1644 = vmatpush1.bf16.xpose.msra.mxu0 0
  %1645 = vmatprep.subr.bf16.mxu0 0
  %1646 = vmatpush1.bf16.xpose.msra.mxu0 0
  %1647 = vmatprep.subr.bf16.mxu0 0
  %1648 = vmatpush1.bf16.xpose.msra.mxu0 0
  %1649 = vmatprep.subr.bf16.mxu0 0
  %1650 = vmatpush1.bf16.xpose.msra.mxu0 0
  %1651 = vmatprep.subr.bf16.mxu0 0
  %1652 = vmatpush1.bf16.xpose.msra.mxu0 0
  %1653 = vmatprep.subr.bf16.mxu0 0
  %1654 = vmatpush1.bf16.xpose.msra.mxu0 0
  %1655 = vmatprep.subr.bf16.mxu0 0
  %1656 = vmatpush1.bf16.xpose.msra.mxu0 0
  %1657 = vmatprep.subr.bf16.mxu0 0
  %1658 = vmatpush1.bf16.xpose.msra.mxu0 0
  %1659 = vmatprep.mubr.bf16.mxu0 0
  %1660 = vmatmul.mubr.bf16.gmra.mrb[0].mxu0 %v1622
  %v1661 = vpop.f32.mrb[0].mxu0
  %v1662 = vadd.f32 %v1153, %v1661
  %v1663 = vpop.f32.mrb[0].mxu0
  %v1664 = vpop.f32.mrb[0].mxu0
  %v1665 = vpop.f32.mrb[0].mxu0
  %1666 = vdwg.mxu0
  %v1667 = vsel %vm194, %v1662, -inf
  %1668 = vmax.xlane.f32.xlu0 %v1667
  %v1669 = vpop.xlane.xlu0 %1668
  %v1670 = vsub.f32 %v1662, %v1669
  %v1671 = vmul.f32 %v1670, 1.442695
  %v1672 = vpow.pop %v1671
  %v1673 = vsel %vm194, %v1672, 0.0
  %1674 = vadd.xlane.f32.xlu0 %v1673
  %v1675 = vpop.xlane.xlu0 %1674
  %v1676 = vrcp.pop %v1675
  %v1677 = vmul.f32 %v1672, %v1676
  %v1678 = vpack.c.bf16 %v1677, %v1677
  %1679 = vrot.lane.b32.xlu0 %v1149, 40
  %v1680 = vpop.permute.xlu0 %1679
  %v1682 = vsel %vm194, %v1678, 0
  %v1685 = vsel %vm258, %v1680, 0
  %1687 = vmatprep.subr.bf16.mxu0 0
  %1688 = vmatpush1.bf16.msra.mxu0 %v1685
  %1689 = vmatprep.subr.bf16.mxu0 0
  %1690 = vmatpush1.bf16.msra.mxu0 0
  %1691 = vmatprep.subr.bf16.mxu0 0
  %1692 = vmatpush1.bf16.msra.mxu0 0
  %1693 = vmatprep.subr.bf16.mxu0 0
  %1694 = vmatpush1.bf16.msra.mxu0 0
  %1695 = vmatprep.subr.bf16.mxu0 0
  %1696 = vmatpush1.bf16.msra.mxu0 0
  %1697 = vmatprep.subr.bf16.mxu0 0
  %1698 = vmatpush1.bf16.msra.mxu0 0
  %1699 = vmatprep.subr.bf16.mxu0 0
  %1700 = vmatpush1.bf16.msra.mxu0 0
  %1701 = vmatprep.subr.bf16.mxu0 0
  %1702 = vmatpush1.bf16.msra.mxu0 0
  %1703 = vmatprep.subr.bf16.mxu0 0
  %1704 = vmatpush1.bf16.msra.mxu0 0
  %1705 = vmatprep.subr.bf16.mxu0 0
  %1706 = vmatpush1.bf16.msra.mxu0 0
  %1707 = vmatprep.subr.bf16.mxu0 0
  %1708 = vmatpush1.bf16.msra.mxu0 0
  %1709 = vmatprep.subr.bf16.mxu0 0
  %1710 = vmatpush1.bf16.msra.mxu0 0
  %1711 = vmatprep.subr.bf16.mxu0 0
  %1712 = vmatpush1.bf16.msra.mxu0 0
  %1713 = vmatprep.subr.bf16.mxu0 0
  %1714 = vmatpush1.bf16.msra.mxu0 0
  %1715 = vmatprep.subr.bf16.mxu0 0
  %1716 = vmatpush1.bf16.msra.mxu0 0
  %1717 = vmatprep.subr.bf16.mxu0 0
  %1718 = vmatpush1.bf16.msra.mxu0 0
  %1719 = vmatprep.mubr.bf16.mxu0 0
  %1720 = vmatmul.mubr.bf16.gmra.mrb[0].mxu0 %v1682
  %v1721 = vpop.f32.mrb[0].mxu0
  %v1722 = vadd.f32 0.0, %v1721
  %v1723 = vpop.f32.mrb[0].mxu0
  %v1724 = vpop.f32.mrb[0].mxu0
  %v1725 = vpop.f32.mrb[0].mxu0
  %1726 = vdwg.mxu0
  %v1727 = vpack.c.bf16 %v1722, %v1722
  %v1729 = vsel %vm194, %v1727, 0
  %1731 = vmatprep.subr.bf16.mxu0 0
  %1732 = vmatpush1.bf16.msra.mxu0 %v780
  %1733 = vmatprep.subr.bf16.mxu0 0
  %1734 = vmatpush1.bf16.msra.mxu0 0
  %1735 = vmatprep.subr.bf16.mxu0 0
  %1736 = vmatpush1.bf16.msra.mxu0 0
  %1737 = vmatprep.subr.bf16.mxu0 0
  %1738 = vmatpush1.bf16.msra.mxu0 0
  %1739 = vmatprep.subr.bf16.mxu0 0
  %1740 = vmatpush1.bf16.msra.mxu0 0
  %1741 = vmatprep.subr.bf16.mxu0 0
  %1742 = vmatpush1.bf16.msra.mxu0 0
  %1743 = vmatprep.subr.bf16.mxu0 0
  %1744 = vmatpush1.bf16.msra.mxu0 0
  %1745 = vmatprep.subr.bf16.mxu0 0
  %1746 = vmatpush1.bf16.msra.mxu0 0
  %1747 = vmatprep.subr.bf16.mxu0 0
  %1748 = vmatpush1.bf16.msra.mxu0 0
  %1749 = vmatprep.subr.bf16.mxu0 0
  %1750 = vmatpush1.bf16.msra.mxu0 0
  %1751 = vmatprep.subr.bf16.mxu0 0
  %1752 = vmatpush1.bf16.msra.mxu0 0
  %1753 = vmatprep.subr.bf16.mxu0 0
  %1754 = vmatpush1.bf16.msra.mxu0 0
  %1755 = vmatprep.subr.bf16.mxu0 0
  %1756 = vmatpush1.bf16.msra.mxu0 0
  %1757 = vmatprep.subr.bf16.mxu0 0
  %1758 = vmatpush1.bf16.msra.mxu0 0
  %1759 = vmatprep.subr.bf16.mxu0 0
  %1760 = vmatpush1.bf16.msra.mxu0 0
  %1761 = vmatprep.subr.bf16.mxu0 0
  %1762 = vmatpush1.bf16.msra.mxu0 0
  %1763 = vmatprep.mubr.bf16.mxu0 0
  %1764 = vmatmul.mubr.bf16.gmra.mrb[0].mxu0 %v1729
  %v1765 = vpop.f32.mrb[0].mxu0
  %v1766 = vadd.f32 0.0, %v1765
  %v1767 = vpop.f32.mrb[0].mxu0
  %v1768 = vpop.f32.mrb[0].mxu0
  %v1769 = vpop.f32.mrb[0].mxu0
  %1770 = vdwg.mxu0
  %v1771 = vadd.f32 %v1616, %v1766
  %1773 = vrot.lane.b32.xlu0 %v1771, 32
  %v1774 = vpop.permute.xlu0 %1773
  %v1776 = vadd.f32 %v60, %v1774
  %1777 = vrot.lane.b32.xlu0 %v828, 32
  %v1778 = vpop.permute.xlu0 %1777
  %v1780 = vadd.f32 %v1776, %v1778
  %1782 = vrot.lane.b32.xlu0 %v1780, 96
  %v1783 = vpop.permute.xlu0 %1782
  %v1785 = vsel %vm90, %v1783, 0.0
  %1786 = vadd.xlane.f32.xlu0 %v1785
  %v1787 = vpop.xlane.xlu0 %1786
  %v1788 = vmul.f32 %v1787, %v97
  %v1789 = vsub.f32 %v1780, %v1788
  %v1790 = vmul.f32 %v1789, %v1789
  %1792 = vrot.lane.b32.xlu0 %v1790, 96
  %v1793 = vpop.permute.xlu0 %1792
  %v1795 = vsel %vm90, %v1793, 0.0
  %1796 = vadd.xlane.f32.xlu0 %v1795
  %v1797 = vpop.xlane.xlu0 %1796
  %v1798 = vmul.f32 %v1797, %v97
  %v1799 = vadd.f32 %v1798, 1e-05
  %v1800 = vrsqrt.pop %v1799
  %v1801 = vmul.f32 %v1789, %v1800
  %1802 = vrot.lane.b32.xlu0 %v848, 32
  %v1803 = vpop.permute.xlu0 %1802
  %v1805 = vmul.f32 %v1801, %v1803
  %1806 = vrot.lane.b32.xlu0 %v855, 32
  %v1807 = vpop.permute.xlu0 %1806
  %v1809 = vadd.f32 %v1805, %v1807
  %v1810 = vpack.c.bf16 %v1809, %v1809
  %1812 = vrot.lane.b32.xlu0 %v1810, 96
  %v1813 = vpop.permute.xlu0 %1812
  %v1815 = vsel %vm90, %v1813, 0
  %1817 = vmatprep.subr.bf16.mxu0 0
  %1818 = vmatpush1.bf16.msra.mxu0 %v873
  %1819 = vmatprep.subr.bf16.mxu0 0
  %1820 = vmatpush1.bf16.msra.mxu0 %v874
  %1821 = vmatprep.subr.bf16.mxu0 0
  %1822 = vmatpush1.bf16.msra.mxu0 0
  %1823 = vmatprep.subr.bf16.mxu0 0
  %1824 = vmatpush1.bf16.msra.mxu0 0
  %1825 = vmatprep.subr.bf16.mxu0 0
  %1826 = vmatpush1.bf16.msra.mxu0 0
  %1827 = vmatprep.subr.bf16.mxu0 0
  %1828 = vmatpush1.bf16.msra.mxu0 0
  %1829 = vmatprep.subr.bf16.mxu0 0
  %1830 = vmatpush1.bf16.msra.mxu0 0
  %1831 = vmatprep.subr.bf16.mxu0 0
  %1832 = vmatpush1.bf16.msra.mxu0 0
  %1833 = vmatprep.subr.bf16.mxu0 0
  %1834 = vmatpush1.bf16.msra.mxu0 0
  %1835 = vmatprep.subr.bf16.mxu0 0
  %1836 = vmatpush1.bf16.msra.mxu0 0
  %1837 = vmatprep.subr.bf16.mxu0 0
  %1838 = vmatpush1.bf16.msra.mxu0 0
  %1839 = vmatprep.subr.bf16.mxu0 0
  %1840 = vmatpush1.bf16.msra.mxu0 0
  %1841 = vmatprep.subr.bf16.mxu0 0
  %1842 = vmatpush1.bf16.msra.mxu0 0
  %1843 = vmatprep.subr.bf16.mxu0 0
  %1844 = vmatpush1.bf16.msra.mxu0 0
  %1845 = vmatprep.subr.bf16.mxu0 0
  %1846 = vmatpush1.bf16.msra.mxu0 0
  %1847 = vmatprep.subr.bf16.mxu0 0
  %1848 = vmatpush1.bf16.msra.mxu0 0
  %1849 = vmatprep.mubr.bf16.mxu0 0
  %1850 = vmatmul.mubr.bf16.gmra.mrb[0].mxu0 %v1815
  %v1851 = vpop.f32.mrb[0].mxu0
  %v1852 = vadd.f32 %v863, %v1851
  %v1853 = vpop.f32.mrb[0].mxu0
  %v1854 = vpop.f32.mrb[0].mxu0
  %v1855 = vpop.f32.mrb[0].mxu0
  %1856 = vdwg.mxu0
  %v1857 = vxor.u32 %v1852, 2147483648
  %v1858 = vmul.f32 %v1857, 1.442695
  %v1859 = vpow.pop %v1858
  %v1860 = vadd.f32 %v1859, 1.0
  %v1861 = vrcp.pop %v1860
  %v1862 = vmul.f32 1.0, %v1861
  %1864 = vrot.lane.b32.xlu0 %v1862, 96
  %v1865 = vpop.permute.xlu0 %1864
  %v1867 = vmul.f32 %v1852, %v1865
  %1868 = vst.msk [vmem:[#allocation2 + $0x3] sm:$0xff] %vm90, %v1867
  %v1869 = vld [vmem:[#allocation2] sm:$0xff]
  %v1870 = vmul.f32 %v1869, %v942
  %v1871 = vadd.f32 %v936, %v1870
  %v1872 = vld [vmem:[#allocation2 + $0x1] sm:$0xff]
  %v1873 = vmul.f32 %v1872, %v949
  %v1874 = vadd.f32 %v1871, %v1873
  %v1875 = vld [vmem:[#allocation2 + $0x2] sm:$0xff]
  %v1876 = vmul.f32 %v1875, %v956
  %v1877 = vadd.f32 %v1874, %v1876
  %v1878 = vld [vmem:[#allocation2 + $0x3] sm:$0xff]
  %v1879 = vmul.f32 %v1878, %v963
  %v1880 = vadd.f32 %v1877, %v1879
  %v1881 = vld [vmem:[#allocation2 + $0x4] sm:$0xff]
  %v1882 = vmul.f32 %v1881, %v970
  %v1883 = vadd.f32 %v1880, %v1882
  %v1884 = vld [vmem:[#allocation2 + $0x5] sm:$0xff]
  %v1885 = vmul.f32 %v1884, %v977
  %v1886 = vadd.f32 %v1883, %v1885
  %v1887 = vld [vmem:[#allocation2 + $0x6] sm:$0xff]
  %v1888 = vmul.f32 %v1887, %v984
  %v1889 = vadd.f32 %v1886, %v1888
  %v1890 = vmul.f32 %v1889, %v991
  %v1891 = vadd.f32 %v1890, %v998
  %v1892 = vxor.u32 %v1891, 2147483648
  %v1893 = vmul.f32 %v1892, 1.442695
  %v1894 = vpow.pop %v1893
  %v1895 = vadd.f32 %v1894, 1.0
  %v1896 = vrcp.pop %v1895
  %v1897 = vmul.f32 1.0, %v1896
  %v1898 = vmul.f32 %v1891, %v1897
  %v1899 = vpack.c.bf16 %v1898, %v1898
  %v1901 = vsel %vm90, %v1899, 0
  %1903 = vmatprep.subr.bf16.mxu0 0
  %1904 = vmatpush1.bf16.msra.mxu0 %v1023
  %1905 = vmatprep.subr.bf16.mxu0 0
  %1906 = vmatpush1.bf16.msra.mxu0 %v1024
  %1907 = vmatprep.subr.bf16.mxu0 0
  %1908 = vmatpush1.bf16.msra.mxu0 0
  %1909 = vmatprep.subr.bf16.mxu0 0
  %1910 = vmatpush1.bf16.msra.mxu0 0
  %1911 = vmatprep.subr.bf16.mxu0 0
  %1912 = vmatpush1.bf16.msra.mxu0 0
  %1913 = vmatprep.subr.bf16.mxu0 0
  %1914 = vmatpush1.bf16.msra.mxu0 0
  %1915 = vmatprep.subr.bf16.mxu0 0
  %1916 = vmatpush1.bf16.msra.mxu0 0
  %1917 = vmatprep.subr.bf16.mxu0 0
  %1918 = vmatpush1.bf16.msra.mxu0 0
  %1919 = vmatprep.subr.bf16.mxu0 0
  %1920 = vmatpush1.bf16.msra.mxu0 0
  %1921 = vmatprep.subr.bf16.mxu0 0
  %1922 = vmatpush1.bf16.msra.mxu0 0
  %1923 = vmatprep.subr.bf16.mxu0 0
  %1924 = vmatpush1.bf16.msra.mxu0 0
  %1925 = vmatprep.subr.bf16.mxu0 0
  %1926 = vmatpush1.bf16.msra.mxu0 0
  %1927 = vmatprep.subr.bf16.mxu0 0
  %1928 = vmatpush1.bf16.msra.mxu0 0
  %1929 = vmatprep.subr.bf16.mxu0 0
  %1930 = vmatpush1.bf16.msra.mxu0 0
  %1931 = vmatprep.subr.bf16.mxu0 0
  %1932 = vmatpush1.bf16.msra.mxu0 0
  %1933 = vmatprep.subr.bf16.mxu0 0
  %1934 = vmatpush1.bf16.msra.mxu0 0
  %1935 = vmatprep.mubr.bf16.mxu0 0
  %1936 = vmatmul.mubr.bf16.gmra.mrb[0].mxu0 %v1901
  %v1937 = vpop.f32.mrb[0].mxu0
  %v1938 = vadd.f32 %v1013, %v1937
  %v1939 = vpop.f32.mrb[0].mxu0
  %v1940 = vpop.f32.mrb[0].mxu0
  %v1941 = vpop.f32.mrb[0].mxu0
  %1942 = vdwg.mxu0
  %1944 = vrot.lane.b32.xlu0 %v1938, 32
  %v1945 = vpop.permute.xlu0 %1944
  %v1947 = vadd.f32 %v1780, %v1945
  %v1948 = vsel %vm90, %v1070, %v1947
  %vm1949 = vcmask 523264
  %1950 = vst.msk [vmem:[%s18] sm:$0xff] %vm1949, %v1948
  // Predicated region
  $region74: #{conformer_layer.4} parent=0 // pred_check
    _
  $region75: #{conformer_layer.4} parent=0 // pred_check_branch
    %1952 = sbr.rel (0) target = $region77
  $region76: #{conformer_layer.4} parent=0 // pred_region
    _
  $region77: #{conformer_layer.4} parent=0 // pred_fallthru
    _
  // Predicated region
  $region78: #{conformer_layer.4} parent=0 // pred_check
    _
  $region79: #{conformer_layer.4} parent=0 // pred_check_branch
    %1954 = sbr.rel (0) target = $region81
  $region80: #{conformer_layer.4} parent=0 // pred_region
    _
  $region81: #{conformer_layer.4} parent=0 // pred_fallthru
    _

</llo_original>
